<compile_context>
chip_gen: v7x
topology: tpu7x:2x2x1
jax: 0.10.0
libtpu: 0.0.40
codegen_flags: <defaults>
</compile_context>

<pallas_src>
import functools

import jax
import jax.numpy as jnp
from jax import lax
from jax.experimental import pallas as pl
from jax.experimental.pallas import tpu as pltpu

HIDDEN = 128


# ----------------------------------------------------------------------------
# Fused kernel factory (fixed layer count / action presence / shapes)
# ----------------------------------------------------------------------------
def make_fused_kernel(layer_num, has_action, T, Bp, H, unroll):
    n_up = layer_num - 1

    def kernel(*refs):
        # ---- parse refs: inputs, output, scratch ---------------------------
        idx = 0
        x_ref = refs[idx]; idx += 1                    # [T*Bp, Dp] bf16 (VMEM)
        a_ref = None
        if has_action:
            a_ref = refs[idx]; idx += 1                # [Bp, A] f32 (VMEM)
        wih0_ref = refs[idx]; idx += 1                 # [Dp, 4H] bf16 (VMEM)
        b0_ref = refs[idx]; idx += 1                   # [1, 4H] f32 (VMEM)
        whh0_ref = refs[idx]; idx += 1                 # [H, 4H] bf16 (VMEM)
        upper_in = []
        for _ in range(n_up):
            # (W_ih HBM ref, W_hh HBM ref, b VMEM ref)
            upper_in.append((refs[idx], refs[idx + 1], refs[idx + 2]))
            idx += 3
        wh_ref = refs[idx]; idx += 1                   # [1, H] f32
        wa_ref = None
        if has_action:
            wa_ref = refs[idx]; idx += 1               # [1, A] f32
        bfc_ref = refs[idx]; idx += 1                  # [1, 1] f32
        out_ref = refs[idx]; idx += 1                  # [Bp, 1] f32
        gates_scr = refs[idx]; idx += 1                # [T*Bp, 4H] f32
        seq_scr = refs[idx]; idx += 1                  # [T*Bp, H]  f32
        upper_scr = []
        for _ in range(n_up):
            upper_scr.append((refs[idx], refs[idx + 1]))   # W_ih, W_hh VMEM bf16
            idx += 2
        dma_sem = refs[idx] if n_up else None          # DMA sems, shape (2*n_up,)

        # ---- kick off upper-layer weight DMAs (hidden under layer-0 work) ---
        dma = []
        for li in range(n_up):
            wih_hbm, whh_hbm, _ = upper_in[li]
            wih_scr, whh_scr = upper_scr[li]
            c1 = pltpu.make_async_copy(wih_hbm, wih_scr, dma_sem.at[2 * li])
            c2 = pltpu.make_async_copy(whh_hbm, whh_scr, dma_sem.at[2 * li + 1])
            c1.start()
            c2.start()
            dma.append((c1, c2))

        # ---- layer-0 input projection (one big aligned matmul, off serial path)
        gates_scr[...] = (
            jnp.dot(x_ref[...], wih0_ref[...],
                    preferred_element_type=jnp.float32,
                    precision=lax.Precision.DEFAULT)
            + b0_ref[...]
        )

        def run_layer(whh_ref, store_seq):
            """One LSTM layer recurrence; input projection already in gates_scr.

            h/c live as loop-carried values (vregs); only h (optionally) goes
            to seq_scr for the next layer's hoisted projection.
            """
            def step(t, carry):
                h, c = carry
                row = pl.multiple_of(t * Bp, Bp)       # sublane-aligned start
                g = gates_scr[pl.ds(row, Bp), :] + jnp.dot(
                    h.astype(jnp.bfloat16), whh_ref[...],
                    preferred_element_type=jnp.float32,
                    precision=lax.Precision.DEFAULT)
                i = jax.nn.sigmoid(g[:, 0 * H:1 * H])
                f = jax.nn.sigmoid(g[:, 1 * H:2 * H])
                gg = jnp.tanh(g[:, 2 * H:3 * H])
                o = jax.nn.sigmoid(g[:, 3 * H:4 * H])
                c_new = f * c + i * gg
                h_new = o * jnp.tanh(c_new)
                if store_seq:
                    seq_scr[pl.ds(row, Bp), :] = h_new
                return (h_new, c_new)

            zero = jnp.zeros((Bp, H), jnp.float32)
            h_fin, _ = lax.fori_loop(0, T, step, (zero, zero), unroll=unroll)
            return h_fin

        # ---- layer 0 ---------------------------------------------------------
        h_last = run_layer(whh0_ref, store_seq=(n_up > 0))

        # ---- layers 1 .. L-1 -------------------------------------------------
        for li in range(n_up):
            wih_scr, whh_scr = upper_scr[li]
            _, _, b_ref = upper_in[li]
            dma[li][0].wait()
            dma[li][1].wait()
            # hoisted input projection: one [T*Bp, H] @ [H, 4H] bf16 matmul
            gates_scr[...] = (
                jnp.dot(seq_scr[...].astype(jnp.bfloat16), wih_scr[...],
                        preferred_element_type=jnp.float32,
                        precision=lax.Precision.DEFAULT)
                + b_ref[...]
            )
            h_last = run_layer(whh_scr, store_seq=(li < n_up - 1))

        # ---- fc head: q = h_last @ W_h + a @ W_a + b  (VPU mul + lane reduce) -
        q = jnp.sum(h_last * wh_ref[...], axis=-1, keepdims=True)   # [Bp, 1]
        if has_action:
            q = q + jnp.sum(a_ref[...] * wa_ref[...], axis=-1, keepdims=True)
        q = q + bfc_ref[...]
        out_ref[...] = q.astype(out_ref.dtype)

    return kernel


# ----------------------------------------------------------------------------
# Parameter init (deterministic, matching torch.nn.LSTM / nn.Linear semantics)
# ----------------------------------------------------------------------------
def init_params(key, layer_num, state_dim, action_dim, hidden=HIDDEN):
    params = {"lstm": []}
    for layer in range(layer_num):
        d_in = state_dim if layer == 0 else hidden
        key, k1, k2, k3, k4 = jax.random.split(key, 5)
        scale = 1.0 / jnp.sqrt(hidden)
        # stored transposed relative to PyTorch: [D_in, 4H], [H, 4H], gates (i,f,g,o)
        w_ih_t = jax.random.uniform(k1, (d_in, 4 * hidden), jnp.float32, -scale, scale)
        w_hh_t = jax.random.uniform(k2, (hidden, 4 * hidden), jnp.float32, -scale, scale)
        b_ih = jax.random.uniform(k3, (4 * hidden,), jnp.float32, -scale, scale)
        b_hh = jax.random.uniform(k4, (4 * hidden,), jnp.float32, -scale, scale)
        params["lstm"].append(
            dict(w_ih_t=w_ih_t, w_hh_t=w_hh_t, b=(b_ih + b_hh).reshape(1, 4 * hidden)))
    key, k1, k2 = jax.random.split(key, 3)
    fan_in = hidden + action_dim
    scale = 1.0 / jnp.sqrt(fan_in)
    w_fc = jax.random.uniform(k1, (fan_in, 1), jnp.float32, -scale, scale)   # [H+A, 1]
    b_fc = jax.random.uniform(k2, (1, 1), jnp.float32, -scale, scale)
    params["fc2"] = dict(
        w_h_row=w_fc[:hidden, :].reshape(1, hidden),                         # [1, H]
        w_a_row=(w_fc[hidden:, :].reshape(1, action_dim)
                 if action_dim > 0 else jnp.zeros((1, 1), jnp.float32)),     # [1, A]
        b=b_fc,                                                              # [1, 1]
    )
    return params


# ----------------------------------------------------------------------------
# Forward pass (mirrors RecurrentCritic.forward)
# ----------------------------------------------------------------------------
@functools.partial(jax.jit, static_argnames=("has_action",))
def recurrent_critic_forward(params, s, a=None, has_action=True):
    # s: [B, T, state_dim] float32 (PyTorch batch_first LSTM convention)
    B, T, D = s.shape
    H = HIDDEN
    layer_num = len(params["lstm"])
    use_a = bool(has_action) and a is not None

    # time-major + pad batch to a sublane multiple (>= 8) so MXU rows are used
    Bp = max(8, ((B + 7) // 8) * 8)
    x = jnp.transpose(s.astype(jnp.float32), (1, 0, 2))            # [T, B, D]
    if Bp != B:
        x = jnp.pad(x, ((0, 0), (0, Bp - B), (0, 0)))              # [T, Bp, D]
    x2 = x.reshape(T * Bp, D)

    # pad the feature dim to a lane multiple so the in-kernel layer-0 dot is aligned
    Dp = max(128, ((D + 127) // 128) * 128)
    if Dp != D:
        x2 = jnp.pad(x2, ((0, 0), (0, Dp - D)))
    x2 = x2.astype(jnp.bfloat16)

    l0 = params["lstm"][0]
    w_ih0 = l0["w_ih_t"]
    if Dp != D:
        w_ih0 = jnp.pad(w_ih0, ((0, Dp - D), (0, 0)))
    w_ih0 = w_ih0.astype(jnp.bfloat16)

    vmem_spec = pl.BlockSpec(memory_space=pltpu.MemorySpace.VMEM)
    any_spec = pl.BlockSpec(memory_space=pl.ANY)

    args, in_specs = [], []

    def add(val, spec):
        args.append(val)
        in_specs.append(spec)

    add(x2, vmem_spec)
    if use_a:
        a_p = a.astype(jnp.float32)
        if Bp != B:
            a_p = jnp.pad(a_p, ((0, Bp - B), (0, 0)))
        add(a_p, vmem_spec)
    add(w_ih0, vmem_spec)
    add(l0["b"], vmem_spec)
    add(l0["w_hh_t"].astype(jnp.bfloat16), vmem_spec)
    for lp in params["lstm"][1:]:
        add(lp["w_ih_t"].astype(jnp.bfloat16), any_spec)   # stays in HBM; manual DMA
        add(lp["w_hh_t"].astype(jnp.bfloat16), any_spec)   # stays in HBM; manual DMA
        add(lp["b"], vmem_spec)
    fc = params["fc2"]
    add(fc["w_h_row"], vmem_spec)
    if use_a:
        add(fc["w_a_row"], vmem_spec)
    add(fc["b"], vmem_spec)

    n_up = layer_num - 1
    scratch_shapes = [
        pltpu.VMEM((T * Bp, 4 * H), jnp.float32),    # hoisted gate projections
        pltpu.VMEM((T * Bp, H), jnp.float32),        # inter-layer hidden sequence
    ]
    for _ in range(n_up):
        scratch_shapes.append(pltpu.VMEM((H, 4 * H), jnp.bfloat16))   # W_ih landing
        scratch_shapes.append(pltpu.VMEM((H, 4 * H), jnp.bfloat16))   # W_hh landing
    if n_up:
        scratch_shapes.append(pltpu.SemaphoreType.DMA((2 * n_up,)))

    # bound the unroll so long sequences don't blow up code size / vreg pressure
    unroll = True if T <= 16 else 8

    kernel = make_fused_kernel(layer_num, use_a, T, Bp, H, unroll)
    q = pl.pallas_call(
        kernel,
        out_shape=jax.ShapeDtypeStruct((Bp, 1), jnp.float32),
        in_specs=in_specs,
        scratch_shapes=scratch_shapes,
        compiler_params=pltpu.CompilerParams(
            vmem_limit_bytes=32 * 1024 * 1024),          # fits v5e/v6e/v7x
    )(*args)
    return q[:B]                                         # drop batch padding


if __name__ == "__main__":
    layer_num = 2
    state_dim = 16      # prod(state_shape)
    action_dim = 4      # prod(action_shape)
    B, T = 2, 8

    key = jax.random.PRNGKey(0)
    pkey, skey, akey = jax.random.split(key, 3)

    params = init_params(pkey, layer_num, state_dim, action_dim)
    s = jax.random.normal(skey, (B, T, state_dim), jnp.float32)
    a = jax.random.normal(akey, (B, action_dim), jnp.float32)

    q = recurrent_critic_forward(params, s, a, has_action=True)
    q = jax.block_until_ready(q)
    assert q.shape == (B, 1) and q.dtype == jnp.float32

    # also exercise the a=None branch (forward without action)
    q_noa = recurrent_critic_forward(params, s, None, has_action=False)
    q_noa = jax.block_until_ready(q_noa)
    assert q_noa.shape == (B, 1)

    print("KERNEL_OK")
</pallas_src>

<mosaic_0001>
module attributes {stable_mosaic.version = 11 : i64} {
  func.func @kernel(%arg0: memref<64x128xbf16, #tpu.memory_space<vmem>>, %arg1: memref<8x4xf32, #tpu.memory_space<vmem>>, %arg2: memref<128x512xbf16, #tpu.memory_space<vmem>>, %arg3: memref<1x512xf32, #tpu.memory_space<vmem>>, %arg4: memref<128x512xbf16, #tpu.memory_space<vmem>>, %arg5: memref<128x512xbf16, #tpu.memory_space<any>>, %arg6: memref<128x512xbf16, #tpu.memory_space<any>>, %arg7: memref<1x512xf32, #tpu.memory_space<vmem>>, %arg8: memref<1x128xf32, #tpu.memory_space<vmem>>, %arg9: memref<1x4xf32, #tpu.memory_space<vmem>>, %arg10: memref<1x1xf32, #tpu.memory_space<vmem>>, %arg11: memref<8x1xf32, #tpu.memory_space<vmem>>, %arg12: memref<64x512xf32, #tpu.memory_space<vmem>>, %arg13: memref<64x128xf32, #tpu.memory_space<vmem>>, %arg14: memref<128x512xbf16, #tpu.memory_space<vmem>>, %arg15: memref<128x512xbf16, #tpu.memory_space<vmem>>, %arg16: memref<2x!tpu.dma_semaphore, #tpu.memory_space<semaphore_mem>>) attributes {dimension_semantics = [], scalar_prefetch = 0 : i64, scratch_operands = 5 : i64, tpu.core_type = #tpu.core_type<tc>} {
    %c0_i32 = arith.constant 0 : i32
    %0 = tpu.memref_slice %arg16[%c0_i32] : memref<2x!tpu.dma_semaphore, #tpu.memory_space<semaphore_mem>> -> memref<1x!tpu.dma_semaphore, #tpu.memory_space<semaphore_mem>>
    %1 = tpu.memref_squeeze %0 : memref<1x!tpu.dma_semaphore, #tpu.memory_space<semaphore_mem>> -> memref<!tpu.dma_semaphore, #tpu.memory_space<semaphore_mem>>
    tpu.enqueue_dma source(%arg5 : memref<128x512xbf16, #tpu.memory_space<any>>) target(%arg14 : memref<128x512xbf16, #tpu.memory_space<vmem>>) target_semaphore(%1 : memref<!tpu.dma_semaphore, #tpu.memory_space<semaphore_mem>>)
    %c1_i32 = arith.constant 1 : i32
    %2 = tpu.memref_slice %arg16[%c1_i32] : memref<2x!tpu.dma_semaphore, #tpu.memory_space<semaphore_mem>> -> memref<1x!tpu.dma_semaphore, #tpu.memory_space<semaphore_mem>>
    %3 = tpu.memref_squeeze %2 : memref<1x!tpu.dma_semaphore, #tpu.memory_space<semaphore_mem>> -> memref<!tpu.dma_semaphore, #tpu.memory_space<semaphore_mem>>
    tpu.enqueue_dma source(%arg6 : memref<128x512xbf16, #tpu.memory_space<any>>) target(%arg15 : memref<128x512xbf16, #tpu.memory_space<vmem>>) target_semaphore(%3 : memref<!tpu.dma_semaphore, #tpu.memory_space<semaphore_mem>>)
    %c0 = arith.constant 0 : index
    %c0_0 = arith.constant 0 : index
    %4 = vector.load %arg0[%c0, %c0_0] : memref<64x128xbf16, #tpu.memory_space<vmem>>, vector<64x128xbf16>
    %c0_1 = arith.constant 0 : index
    %c0_2 = arith.constant 0 : index
    %5 = vector.load %arg2[%c0_1, %c0_2] : memref<128x512xbf16, #tpu.memory_space<vmem>>, vector<128x512xbf16>
    %cst = arith.constant dense<0.000000e+00> : vector<64x512xf32>
    %6 = tpu.matmul %4, %5, %cst {dimension_numbers = #tpu.dot_dimension_numbers<[1], [0], [0], [1], [0, 0, 1, 1], [], []>} : vector<64x128xbf16>, vector<128x512xbf16>, vector<64x512xf32> -> vector<64x512xf32>
    %c0_3 = arith.constant 0 : index
    %c0_4 = arith.constant 0 : index
    %7 = vector.load %arg3[%c0_3, %c0_4] : memref<1x512xf32, #tpu.memory_space<vmem>>, vector<1x512xf32>
    %8 = vector.broadcast %7 : vector<1x512xf32> to vector<64x512xf32>
    %9 = arith.addf %6, %8 : vector<64x512xf32>
    %c0_5 = arith.constant 0 : index
    %c0_6 = arith.constant 0 : index
    %10 = vector.load %arg12[%c0_5, %c0_6] : memref<64x512xf32, #tpu.memory_space<vmem>>, vector<64x512xf32>
    tpu.vector_store %arg12[%c0_5, %c0_6], %9 {strides = array<i32>} : memref<64x512xf32, #tpu.memory_space<vmem>>, vector<64x512xf32>,
    %cst_7 = arith.constant 0.000000e+00 : f32
    %11 = vector.broadcast %cst_7 : f32 to vector<8x128xf32>
    %c0_i32_8 = arith.constant 0 : i32
    %c8_i32 = arith.constant 8 : i32
    %12 = arith.muli %c0_i32_8, %c8_i32 : i32
    %13 = tpu.assume_multiple %12, 8 : i32
    %14 = arith.index_cast %13 : i32 to index
    %c0_9 = arith.constant 0 : index
    %15 = vector.load %arg12[%14, %c0_9] : memref<64x512xf32, #tpu.memory_space<vmem>>, vector<8x512xf32>
    %16 = arith.truncf %11 : vector<8x128xf32> to vector<8x128xbf16>
    %c0_10 = arith.constant 0 : index
    %c0_11 = arith.constant 0 : index
    %17 = vector.load %arg4[%c0_10, %c0_11] : memref<128x512xbf16, #tpu.memory_space<vmem>>, vector<128x512xbf16>
    %cst_12 = arith.constant dense<0.000000e+00> : vector<8x512xf32>
    %18 = tpu.matmul %16, %17, %cst_12 {dimension_numbers = #tpu.dot_dimension_numbers<[1], [0], [0], [1], [0, 0, 1, 1], [], []>} : vector<8x128xbf16>, vector<128x512xbf16>, vector<8x512xf32> -> vector<8x512xf32>
    %19 = arith.addf %15, %18 : vector<8x512xf32>
    %20 = vector.extract_strided_slice %19 {offsets = [0, 0], sizes = [8, 128], strides = [1, 1]} : vector<8x512xf32> to vector<8x128xf32>
    %21 = arith.negf %20 : vector<8x128xf32>
    %22 = math.exp %21 : vector<8x128xf32>
    %cst_13 = arith.constant 1.000000e+00 : f32
    %23 = vector.broadcast %cst_13 : f32 to vector<8x128xf32>
    %24 = arith.addf %23, %22 : vector<8x128xf32>
    %25 = arith.divf %23, %24 : vector<8x128xf32>
    %26 = vector.extract_strided_slice %19 {offsets = [0, 128], sizes = [8, 128], strides = [1, 1]} : vector<8x512xf32> to vector<8x128xf32>
    %27 = arith.negf %26 : vector<8x128xf32>
    %28 = math.exp %27 : vector<8x128xf32>
    %cst_14 = arith.constant 1.000000e+00 : f32
    %29 = vector.broadcast %cst_14 : f32 to vector<8x128xf32>
    %30 = arith.addf %29, %28 : vector<8x128xf32>
    %31 = arith.divf %29, %30 : vector<8x128xf32>
    %32 = vector.extract_strided_slice %19 {offsets = [0, 256], sizes = [8, 128], strides = [1, 1]} : vector<8x512xf32> to vector<8x128xf32>
    %33 = math.tanh %32 : vector<8x128xf32>
    %34 = vector.extract_strided_slice %19 {offsets = [0, 384], sizes = [8, 128], strides = [1, 1]} : vector<8x512xf32> to vector<8x128xf32>
    %35 = arith.negf %34 : vector<8x128xf32>
    %36 = math.exp %35 : vector<8x128xf32>
    %cst_15 = arith.constant 1.000000e+00 : f32
    %37 = vector.broadcast %cst_15 : f32 to vector<8x128xf32>
    %38 = arith.addf %37, %36 : vector<8x128xf32>
    %39 = arith.divf %37, %38 : vector<8x128xf32>
    %40 = arith.mulf %31, %11 : vector<8x128xf32>
    %41 = arith.mulf %25, %33 : vector<8x128xf32>
    %42 = arith.addf %40, %41 : vector<8x128xf32>
    %43 = math.tanh %42 : vector<8x128xf32>
    %44 = arith.mulf %39, %43 : vector<8x128xf32>
    %45 = arith.index_cast %13 : i32 to index
    %c0_16 = arith.constant 0 : index
    %46 = vector.load %arg13[%45, %c0_16] : memref<64x128xf32, #tpu.memory_space<vmem>>, vector<8x128xf32>
    tpu.vector_store %arg13[%45, %c0_16], %44 {strides = array<i32>} : memref<64x128xf32, #tpu.memory_space<vmem>>, vector<8x128xf32>,
    %c1_i32_17 = arith.constant 1 : i32
    %c8_i32_18 = arith.constant 8 : i32
    %47 = arith.muli %c1_i32_17, %c8_i32_18 : i32
    %48 = tpu.assume_multiple %47, 8 : i32
    %49 = arith.index_cast %48 : i32 to index
    %c0_19 = arith.constant 0 : index
    %50 = vector.load %arg12[%49, %c0_19] : memref<64x512xf32, #tpu.memory_space<vmem>>, vector<8x512xf32>
    %51 = arith.truncf %44 : vector<8x128xf32> to vector<8x128xbf16>
    %c0_20 = arith.constant 0 : index
    %c0_21 = arith.constant 0 : index
    %52 = vector.load %arg4[%c0_20, %c0_21] : memref<128x512xbf16, #tpu.memory_space<vmem>>, vector<128x512xbf16>
    %cst_22 = arith.constant dense<0.000000e+00> : vector<8x512xf32>
    %53 = tpu.matmul %51, %52, %cst_22 {dimension_numbers = #tpu.dot_dimension_numbers<[1], [0], [0], [1], [0, 0, 1, 1], [], []>} : vector<8x128xbf16>, vector<128x512xbf16>, vector<8x512xf32> -> vector<8x512xf32>
    %54 = arith.addf %50, %53 : vector<8x512xf32>
    %55 = vector.extract_strided_slice %54 {offsets = [0, 0], sizes = [8, 128], strides = [1, 1]} : vector<8x512xf32> to vector<8x128xf32>
    %56 = arith.negf %55 : vector<8x128xf32>
    %57 = math.exp %56 : vector<8x128xf32>
    %cst_23 = arith.constant 1.000000e+00 : f32
    %58 = vector.broadcast %cst_23 : f32 to vector<8x128xf32>
    %59 = arith.addf %58, %57 : vector<8x128xf32>
    %60 = arith.divf %58, %59 : vector<8x128xf32>
    %61 = vector.extract_strided_slice %54 {offsets = [0, 128], sizes = [8, 128], strides = [1, 1]} : vector<8x512xf32> to vector<8x128xf32>
    %62 = arith.negf %61 : vector<8x128xf32>
    %63 = math.exp %62 : vector<8x128xf32>
    %cst_24 = arith.constant 1.000000e+00 : f32
    %64 = vector.broadcast %cst_24 : f32 to vector<8x128xf32>
    %65 = arith.addf %64, %63 : vector<8x128xf32>
    %66 = arith.divf %64, %65 : vector<8x128xf32>
    %67 = vector.extract_strided_slice %54 {offsets = [0, 256], sizes = [8, 128], strides = [1, 1]} : vector<8x512xf32> to vector<8x128xf32>
    %68 = math.tanh %67 : vector<8x128xf32>
    %69 = vector.extract_strided_slice %54 {offsets = [0, 384], sizes = [8, 128], strides = [1, 1]} : vector<8x512xf32> to vector<8x128xf32>
    %70 = arith.negf %69 : vector<8x128xf32>
    %71 = math.exp %70 : vector<8x128xf32>
    %cst_25 = arith.constant 1.000000e+00 : f32
    %72 = vector.broadcast %cst_25 : f32 to vector<8x128xf32>
    %73 = arith.addf %72, %71 : vector<8x128xf32>
    %74 = arith.divf %72, %73 : vector<8x128xf32>
    %75 = arith.mulf %66, %42 : vector<8x128xf32>
    %76 = arith.mulf %60, %68 : vector<8x128xf32>
    %77 = arith.addf %75, %76 : vector<8x128xf32>
    %78 = math.tanh %77 : vector<8x128xf32>
    %79 = arith.mulf %74, %78 : vector<8x128xf32>
    %80 = arith.index_cast %48 : i32 to index
    %c0_26 = arith.constant 0 : index
    %81 = vector.load %arg13[%80, %c0_26] : memref<64x128xf32, #tpu.memory_space<vmem>>, vector<8x128xf32>
    tpu.vector_store %arg13[%80, %c0_26], %79 {strides = array<i32>} : memref<64x128xf32, #tpu.memory_space<vmem>>, vector<8x128xf32>,
    %c2_i32 = arith.constant 2 : i32
    %c8_i32_27 = arith.constant 8 : i32
    %82 = arith.muli %c2_i32, %c8_i32_27 : i32
    %83 = tpu.assume_multiple %82, 8 : i32
    %84 = arith.index_cast %83 : i32 to index
    %c0_28 = arith.constant 0 : index
    %85 = vector.load %arg12[%84, %c0_28] : memref<64x512xf32, #tpu.memory_space<vmem>>, vector<8x512xf32>
    %86 = arith.truncf %79 : vector<8x128xf32> to vector<8x128xbf16>
    %c0_29 = arith.constant 0 : index
    %c0_30 = arith.constant 0 : index
    %87 = vector.load %arg4[%c0_29, %c0_30] : memref<128x512xbf16, #tpu.memory_space<vmem>>, vector<128x512xbf16>
    %cst_31 = arith.constant dense<0.000000e+00> : vector<8x512xf32>
    %88 = tpu.matmul %86, %87, %cst_31 {dimension_numbers = #tpu.dot_dimension_numbers<[1], [0], [0], [1], [0, 0, 1, 1], [], []>} : vector<8x128xbf16>, vector<128x512xbf16>, vector<8x512xf32> -> vector<8x512xf32>
    %89 = arith.addf %85, %88 : vector<8x512xf32>
    %90 = vector.extract_strided_slice %89 {offsets = [0, 0], sizes = [8, 128], strides = [1, 1]} : vector<8x512xf32> to vector<8x128xf32>
    %91 = arith.negf %90 : vector<8x128xf32>
    %92 = math.exp %91 : vector<8x128xf32>
    %cst_32 = arith.constant 1.000000e+00 : f32
    %93 = vector.broadcast %cst_32 : f32 to vector<8x128xf32>
    %94 = arith.addf %93, %92 : vector<8x128xf32>
    %95 = arith.divf %93, %94 : vector<8x128xf32>
    %96 = vector.extract_strided_slice %89 {offsets = [0, 128], sizes = [8, 128], strides = [1, 1]} : vector<8x512xf32> to vector<8x128xf32>
    %97 = arith.negf %96 : vector<8x128xf32>
    %98 = math.exp %97 : vector<8x128xf32>
    %cst_33 = arith.constant 1.000000e+00 : f32
    %99 = vector.broadcast %cst_33 : f32 to vector<8x128xf32>
    %100 = arith.addf %99, %98 : vector<8x128xf32>
    %101 = arith.divf %99, %100 : vector<8x128xf32>
    %102 = vector.extract_strided_slice %89 {offsets = [0, 256], sizes = [8, 128], strides = [1, 1]} : vector<8x512xf32> to vector<8x128xf32>
    %103 = math.tanh %102 : vector<8x128xf32>
    %104 = vector.extract_strided_slice %89 {offsets = [0, 384], sizes = [8, 128], strides = [1, 1]} : vector<8x512xf32> to vector<8x128xf32>
    %105 = arith.negf %104 : vector<8x128xf32>
    %106 = math.exp %105 : vector<8x128xf32>
    %cst_34 = arith.constant 1.000000e+00 : f32
    %107 = vector.broadcast %cst_34 : f32 to vector<8x128xf32>
    %108 = arith.addf %107, %106 : vector<8x128xf32>
    %109 = arith.divf %107, %108 : vector<8x128xf32>
    %110 = arith.mulf %101, %77 : vector<8x128xf32>
    %111 = arith.mulf %95, %103 : vector<8x128xf32>
    %112 = arith.addf %110, %111 : vector<8x128xf32>
    %113 = math.tanh %112 : vector<8x128xf32>
    %114 = arith.mulf %109, %113 : vector<8x128xf32>
    %115 = arith.index_cast %83 : i32 to index
    %c0_35 = arith.constant 0 : index
    %116 = vector.load %arg13[%115, %c0_35] : memref<64x128xf32, #tpu.memory_space<vmem>>, vector<8x128xf32>
    tpu.vector_store %arg13[%115, %c0_35], %114 {strides = array<i32>} : memref<64x128xf32, #tpu.memory_space<vmem>>, vector<8x128xf32>,
    %c3_i32 = arith.constant 3 : i32
    %c8_i32_36 = arith.constant 8 : i32
    %117 = arith.muli %c3_i32, %c8_i32_36 : i32
    %118 = tpu.assume_multiple %117, 8 : i32
    %119 = arith.index_cast %118 : i32 to index
    %c0_37 = arith.constant 0 : index
    %120 = vector.load %arg12[%119, %c0_37] : memref<64x512xf32, #tpu.memory_space<vmem>>, vector<8x512xf32>
    %121 = arith.truncf %114 : vector<8x128xf32> to vector<8x128xbf16>
    %c0_38 = arith.constant 0 : index
    %c0_39 = arith.constant 0 : index
    %122 = vector.load %arg4[%c0_38, %c0_39] : memref<128x512xbf16, #tpu.memory_space<vmem>>, vector<128x512xbf16>
    %cst_40 = arith.constant dense<0.000000e+00> : vector<8x512xf32>
    %123 = tpu.matmul %121, %122, %cst_40 {dimension_numbers = #tpu.dot_dimension_numbers<[1], [0], [0], [1], [0, 0, 1, 1], [], []>} : vector<8x128xbf16>, vector<128x512xbf16>, vector<8x512xf32> -> vector<8x512xf32>
    %124 = arith.addf %120, %123 : vector<8x512xf32>
    %125 = vector.extract_strided_slice %124 {offsets = [0, 0], sizes = [8, 128], strides = [1, 1]} : vector<8x512xf32> to vector<8x128xf32>
    %126 = arith.negf %125 : vector<8x128xf32>
    %127 = math.exp %126 : vector<8x128xf32>
    %cst_41 = arith.constant 1.000000e+00 : f32
    %128 = vector.broadcast %cst_41 : f32 to vector<8x128xf32>
    %129 = arith.addf %128, %127 : vector<8x128xf32>
    %130 = arith.divf %128, %129 : vector<8x128xf32>
    %131 = vector.extract_strided_slice %124 {offsets = [0, 128], sizes = [8, 128], strides = [1, 1]} : vector<8x512xf32> to vector<8x128xf32>
    %132 = arith.negf %131 : vector<8x128xf32>
    %133 = math.exp %132 : vector<8x128xf32>
    %cst_42 = arith.constant 1.000000e+00 : f32
    %134 = vector.broadcast %cst_42 : f32 to vector<8x128xf32>
    %135 = arith.addf %134, %133 : vector<8x128xf32>
    %136 = arith.divf %134, %135 : vector<8x128xf32>
    %137 = vector.extract_strided_slice %124 {offsets = [0, 256], sizes = [8, 128], strides = [1, 1]} : vector<8x512xf32> to vector<8x128xf32>
    %138 = math.tanh %137 : vector<8x128xf32>
    %139 = vector.extract_strided_slice %124 {offsets = [0, 384], sizes = [8, 128], strides = [1, 1]} : vector<8x512xf32> to vector<8x128xf32>
    %140 = arith.negf %139 : vector<8x128xf32>
    %141 = math.exp %140 : vector<8x128xf32>
    %cst_43 = arith.constant 1.000000e+00 : f32
    %142 = vector.broadcast %cst_43 : f32 to vector<8x128xf32>
    %143 = arith.addf %142, %141 : vector<8x128xf32>
    %144 = arith.divf %142, %143 : vector<8x128xf32>
    %145 = arith.mulf %136, %112 : vector<8x128xf32>
    %146 = arith.mulf %130, %138 : vector<8x128xf32>
    %147 = arith.addf %145, %146 : vector<8x128xf32>
    %148 = math.tanh %147 : vector<8x128xf32>
    %149 = arith.mulf %144, %148 : vector<8x128xf32>
    %150 = arith.index_cast %118 : i32 to index
    %c0_44 = arith.constant 0 : index
    %151 = vector.load %arg13[%150, %c0_44] : memref<64x128xf32, #tpu.memory_space<vmem>>, vector<8x128xf32>
    tpu.vector_store %arg13[%150, %c0_44], %149 {strides = array<i32>} : memref<64x128xf32, #tpu.memory_space<vmem>>, vector<8x128xf32>,
    %c4_i32 = arith.constant 4 : i32
    %c8_i32_45 = arith.constant 8 : i32
    %152 = arith.muli %c4_i32, %c8_i32_45 : i32
    %153 = tpu.assume_multiple %152, 8 : i32
    %154 = arith.index_cast %153 : i32 to index
    %c0_46 = arith.constant 0 : index
    %155 = vector.load %arg12[%154, %c0_46] : memref<64x512xf32, #tpu.memory_space<vmem>>, vector<8x512xf32>
    %156 = arith.truncf %149 : vector<8x128xf32> to vector<8x128xbf16>
    %c0_47 = arith.constant 0 : index
    %c0_48 = arith.constant 0 : index
    %157 = vector.load %arg4[%c0_47, %c0_48] : memref<128x512xbf16, #tpu.memory_space<vmem>>, vector<128x512xbf16>
    %cst_49 = arith.constant dense<0.000000e+00> : vector<8x512xf32>
    %158 = tpu.matmul %156, %157, %cst_49 {dimension_numbers = #tpu.dot_dimension_numbers<[1], [0], [0], [1], [0, 0, 1, 1], [], []>} : vector<8x128xbf16>, vector<128x512xbf16>, vector<8x512xf32> -> vector<8x512xf32>
    %159 = arith.addf %155, %158 : vector<8x512xf32>
    %160 = vector.extract_strided_slice %159 {offsets = [0, 0], sizes = [8, 128], strides = [1, 1]} : vector<8x512xf32> to vector<8x128xf32>
    %161 = arith.negf %160 : vector<8x128xf32>
    %162 = math.exp %161 : vector<8x128xf32>
    %cst_50 = arith.constant 1.000000e+00 : f32
    %163 = vector.broadcast %cst_50 : f32 to vector<8x128xf32>
    %164 = arith.addf %163, %162 : vector<8x128xf32>
    %165 = arith.divf %163, %164 : vector<8x128xf32>
    %166 = vector.extract_strided_slice %159 {offsets = [0, 128], sizes = [8, 128], strides = [1, 1]} : vector<8x512xf32> to vector<8x128xf32>
    %167 = arith.negf %166 : vector<8x128xf32>
    %168 = math.exp %167 : vector<8x128xf32>
    %cst_51 = arith.constant 1.000000e+00 : f32
    %169 = vector.broadcast %cst_51 : f32 to vector<8x128xf32>
    %170 = arith.addf %169, %168 : vector<8x128xf32>
    %171 = arith.divf %169, %170 : vector<8x128xf32>
    %172 = vector.extract_strided_slice %159 {offsets = [0, 256], sizes = [8, 128], strides = [1, 1]} : vector<8x512xf32> to vector<8x128xf32>
    %173 = math.tanh %172 : vector<8x128xf32>
    %174 = vector.extract_strided_slice %159 {offsets = [0, 384], sizes = [8, 128], strides = [1, 1]} : vector<8x512xf32> to vector<8x128xf32>
    %175 = arith.negf %174 : vector<8x128xf32>
    %176 = math.exp %175 : vector<8x128xf32>
    %cst_52 = arith.constant 1.000000e+00 : f32
    %177 = vector.broadcast %cst_52 : f32 to vector<8x128xf32>
    %178 = arith.addf %177, %176 : vector<8x128xf32>
    %179 = arith.divf %177, %178 : vector<8x128xf32>
    %180 = arith.mulf %171, %147 : vector<8x128xf32>
    %181 = arith.mulf %165, %173 : vector<8x128xf32>
    %182 = arith.addf %180, %181 : vector<8x128xf32>
    %183 = math.tanh %182 : vector<8x128xf32>
    %184 = arith.mulf %179, %183 : vector<8x128xf32>
    %185 = arith.index_cast %153 : i32 to index
    %c0_53 = arith.constant 0 : index
    %186 = vector.load %arg13[%185, %c0_53] : memref<64x128xf32, #tpu.memory_space<vmem>>, vector<8x128xf32>
    tpu.vector_store %arg13[%185, %c0_53], %184 {strides = array<i32>} : memref<64x128xf32, #tpu.memory_space<vmem>>, vector<8x128xf32>,
    %c5_i32 = arith.constant 5 : i32
    %c8_i32_54 = arith.constant 8 : i32
    %187 = arith.muli %c5_i32, %c8_i32_54 : i32
    %188 = tpu.assume_multiple %187, 8 : i32
    %189 = arith.index_cast %188 : i32 to index
    %c0_55 = arith.constant 0 : index
    %190 = vector.load %arg12[%189, %c0_55] : memref<64x512xf32, #tpu.memory_space<vmem>>, vector<8x512xf32>
    %191 = arith.truncf %184 : vector<8x128xf32> to vector<8x128xbf16>
    %c0_56 = arith.constant 0 : index
    %c0_57 = arith.constant 0 : index
    %192 = vector.load %arg4[%c0_56, %c0_57] : memref<128x512xbf16, #tpu.memory_space<vmem>>, vector<128x512xbf16>
    %cst_58 = arith.constant dense<0.000000e+00> : vector<8x512xf32>
    %193 = tpu.matmul %191, %192, %cst_58 {dimension_numbers = #tpu.dot_dimension_numbers<[1], [0], [0], [1], [0, 0, 1, 1], [], []>} : vector<8x128xbf16>, vector<128x512xbf16>, vector<8x512xf32> -> vector<8x512xf32>
    %194 = arith.addf %190, %193 : vector<8x512xf32>
    %195 = vector.extract_strided_slice %194 {offsets = [0, 0], sizes = [8, 128], strides = [1, 1]} : vector<8x512xf32> to vector<8x128xf32>
    %196 = arith.negf %195 : vector<8x128xf32>
    %197 = math.exp %196 : vector<8x128xf32>
    %cst_59 = arith.constant 1.000000e+00 : f32
    %198 = vector.broadcast %cst_59 : f32 to vector<8x128xf32>
    %199 = arith.addf %198, %197 : vector<8x128xf32>
    %200 = arith.divf %198, %199 : vector<8x128xf32>
    %201 = vector.extract_strided_slice %194 {offsets = [0, 128], sizes = [8, 128], strides = [1, 1]} : vector<8x512xf32> to vector<8x128xf32>
    %202 = arith.negf %201 : vector<8x128xf32>
    %203 = math.exp %202 : vector<8x128xf32>
    %cst_60 = arith.constant 1.000000e+00 : f32
    %204 = vector.broadcast %cst_60 : f32 to vector<8x128xf32>
    %205 = arith.addf %204, %203 : vector<8x128xf32>
    %206 = arith.divf %204, %205 : vector<8x128xf32>
    %207 = vector.extract_strided_slice %194 {offsets = [0, 256], sizes = [8, 128], strides = [1, 1]} : vector<8x512xf32> to vector<8x128xf32>
    %208 = math.tanh %207 : vector<8x128xf32>
    %209 = vector.extract_strided_slice %194 {offsets = [0, 384], sizes = [8, 128], strides = [1, 1]} : vector<8x512xf32> to vector<8x128xf32>
    %210 = arith.negf %209 : vector<8x128xf32>
    %211 = math.exp %210 : vector<8x128xf32>
    %cst_61 = arith.constant 1.000000e+00 : f32
    %212 = vector.broadcast %cst_61 : f32 to vector<8x128xf32>
    %213 = arith.addf %212, %211 : vector<8x128xf32>
    %214 = arith.divf %212, %213 : vector<8x128xf32>
    %215 = arith.mulf %206, %182 : vector<8x128xf32>
    %216 = arith.mulf %200, %208 : vector<8x128xf32>
    %217 = arith.addf %215, %216 : vector<8x128xf32>
    %218 = math.tanh %217 : vector<8x128xf32>
    %219 = arith.mulf %214, %218 : vector<8x128xf32>
    %220 = arith.index_cast %188 : i32 to index
    %c0_62 = arith.constant 0 : index
    %221 = vector.load %arg13[%220, %c0_62] : memref<64x128xf32, #tpu.memory_space<vmem>>, vector<8x128xf32>
    tpu.vector_store %arg13[%220, %c0_62], %219 {strides = array<i32>} : memref<64x128xf32, #tpu.memory_space<vmem>>, vector<8x128xf32>,
    %c6_i32 = arith.constant 6 : i32
    %c8_i32_63 = arith.constant 8 : i32
    %222 = arith.muli %c6_i32, %c8_i32_63 : i32
    %223 = tpu.assume_multiple %222, 8 : i32
    %224 = arith.index_cast %223 : i32 to index
    %c0_64 = arith.constant 0 : index
    %225 = vector.load %arg12[%224, %c0_64] : memref<64x512xf32, #tpu.memory_space<vmem>>, vector<8x512xf32>
    %226 = arith.truncf %219 : vector<8x128xf32> to vector<8x128xbf16>
    %c0_65 = arith.constant 0 : index
    %c0_66 = arith.constant 0 : index
    %227 = vector.load %arg4[%c0_65, %c0_66] : memref<128x512xbf16, #tpu.memory_space<vmem>>, vector<128x512xbf16>
    %cst_67 = arith.constant dense<0.000000e+00> : vector<8x512xf32>
    %228 = tpu.matmul %226, %227, %cst_67 {dimension_numbers = #tpu.dot_dimension_numbers<[1], [0], [0], [1], [0, 0, 1, 1], [], []>} : vector<8x128xbf16>, vector<128x512xbf16>, vector<8x512xf32> -> vector<8x512xf32>
    %229 = arith.addf %225, %228 : vector<8x512xf32>
    %230 = vector.extract_strided_slice %229 {offsets = [0, 0], sizes = [8, 128], strides = [1, 1]} : vector<8x512xf32> to vector<8x128xf32>
    %231 = arith.negf %230 : vector<8x128xf32>
    %232 = math.exp %231 : vector<8x128xf32>
    %cst_68 = arith.constant 1.000000e+00 : f32
    %233 = vector.broadcast %cst_68 : f32 to vector<8x128xf32>
    %234 = arith.addf %233, %232 : vector<8x128xf32>
    %235 = arith.divf %233, %234 : vector<8x128xf32>
    %236 = vector.extract_strided_slice %229 {offsets = [0, 128], sizes = [8, 128], strides = [1, 1]} : vector<8x512xf32> to vector<8x128xf32>
    %237 = arith.negf %236 : vector<8x128xf32>
    %238 = math.exp %237 : vector<8x128xf32>
    %cst_69 = arith.constant 1.000000e+00 : f32
    %239 = vector.broadcast %cst_69 : f32 to vector<8x128xf32>
    %240 = arith.addf %239, %238 : vector<8x128xf32>
    %241 = arith.divf %239, %240 : vector<8x128xf32>
    %242 = vector.extract_strided_slice %229 {offsets = [0, 256], sizes = [8, 128], strides = [1, 1]} : vector<8x512xf32> to vector<8x128xf32>
    %243 = math.tanh %242 : vector<8x128xf32>
    %244 = vector.extract_strided_slice %229 {offsets = [0, 384], sizes = [8, 128], strides = [1, 1]} : vector<8x512xf32> to vector<8x128xf32>
    %245 = arith.negf %244 : vector<8x128xf32>
    %246 = math.exp %245 : vector<8x128xf32>
    %cst_70 = arith.constant 1.000000e+00 : f32
    %247 = vector.broadcast %cst_70 : f32 to vector<8x128xf32>
    %248 = arith.addf %247, %246 : vector<8x128xf32>
    %249 = arith.divf %247, %248 : vector<8x128xf32>
    %250 = arith.mulf %241, %217 : vector<8x128xf32>
    %251 = arith.mulf %235, %243 : vector<8x128xf32>
    %252 = arith.addf %250, %251 : vector<8x128xf32>
    %253 = math.tanh %252 : vector<8x128xf32>
    %254 = arith.mulf %249, %253 : vector<8x128xf32>
    %255 = arith.index_cast %223 : i32 to index
    %c0_71 = arith.constant 0 : index
    %256 = vector.load %arg13[%255, %c0_71] : memref<64x128xf32, #tpu.memory_space<vmem>>, vector<8x128xf32>
    tpu.vector_store %arg13[%255, %c0_71], %254 {strides = array<i32>} : memref<64x128xf32, #tpu.memory_space<vmem>>, vector<8x128xf32>,
    %c7_i32 = arith.constant 7 : i32
    %c8_i32_72 = arith.constant 8 : i32
    %257 = arith.muli %c7_i32, %c8_i32_72 : i32
    %258 = tpu.assume_multiple %257, 8 : i32
    %259 = arith.index_cast %258 : i32 to index
    %c0_73 = arith.constant 0 : index
    %260 = vector.load %arg12[%259, %c0_73] : memref<64x512xf32, #tpu.memory_space<vmem>>, vector<8x512xf32>
    %261 = arith.truncf %254 : vector<8x128xf32> to vector<8x128xbf16>
    %c0_74 = arith.constant 0 : index
    %c0_75 = arith.constant 0 : index
    %262 = vector.load %arg4[%c0_74, %c0_75] : memref<128x512xbf16, #tpu.memory_space<vmem>>, vector<128x512xbf16>
    %cst_76 = arith.constant dense<0.000000e+00> : vector<8x512xf32>
    %263 = tpu.matmul %261, %262, %cst_76 {dimension_numbers = #tpu.dot_dimension_numbers<[1], [0], [0], [1], [0, 0, 1, 1], [], []>} : vector<8x128xbf16>, vector<128x512xbf16>, vector<8x512xf32> -> vector<8x512xf32>
    %264 = arith.addf %260, %263 : vector<8x512xf32>
    %265 = vector.extract_strided_slice %264 {offsets = [0, 0], sizes = [8, 128], strides = [1, 1]} : vector<8x512xf32> to vector<8x128xf32>
    %266 = arith.negf %265 : vector<8x128xf32>
    %267 = math.exp %266 : vector<8x128xf32>
    %cst_77 = arith.constant 1.000000e+00 : f32
    %268 = vector.broadcast %cst_77 : f32 to vector<8x128xf32>
    %269 = arith.addf %268, %267 : vector<8x128xf32>
    %270 = arith.divf %268, %269 : vector<8x128xf32>
    %271 = vector.extract_strided_slice %264 {offsets = [0, 128], sizes = [8, 128], strides = [1, 1]} : vector<8x512xf32> to vector<8x128xf32>
    %272 = arith.negf %271 : vector<8x128xf32>
    %273 = math.exp %272 : vector<8x128xf32>
    %cst_78 = arith.constant 1.000000e+00 : f32
    %274 = vector.broadcast %cst_78 : f32 to vector<8x128xf32>
    %275 = arith.addf %274, %273 : vector<8x128xf32>
    %276 = arith.divf %274, %275 : vector<8x128xf32>
    %277 = vector.extract_strided_slice %264 {offsets = [0, 256], sizes = [8, 128], strides = [1, 1]} : vector<8x512xf32> to vector<8x128xf32>
    %278 = math.tanh %277 : vector<8x128xf32>
    %279 = vector.extract_strided_slice %264 {offsets = [0, 384], sizes = [8, 128], strides = [1, 1]} : vector<8x512xf32> to vector<8x128xf32>
    %280 = arith.negf %279 : vector<8x128xf32>
    %281 = math.exp %280 : vector<8x128xf32>
    %cst_79 = arith.constant 1.000000e+00 : f32
    %282 = vector.broadcast %cst_79 : f32 to vector<8x128xf32>
    %283 = arith.addf %282, %281 : vector<8x128xf32>
    %284 = arith.divf %282, %283 : vector<8x128xf32>
    %285 = arith.mulf %276, %252 : vector<8x128xf32>
    %286 = arith.mulf %270, %278 : vector<8x128xf32>
    %287 = arith.addf %285, %286 : vector<8x128xf32>
    %288 = math.tanh %287 : vector<8x128xf32>
    %289 = arith.mulf %284, %288 : vector<8x128xf32>
    %290 = arith.index_cast %258 : i32 to index
    %c0_80 = arith.constant 0 : index
    %291 = vector.load %arg13[%290, %c0_80] : memref<64x128xf32, #tpu.memory_space<vmem>>, vector<8x128xf32>
    tpu.vector_store %arg13[%290, %c0_80], %289 {strides = array<i32>} : memref<64x128xf32, #tpu.memory_space<vmem>>, vector<8x128xf32>,
    %c8_i32_81 = arith.constant 8 : i32
    %c0_i32_82 = arith.constant 0 : i32
    %292 = tpu.memref_slice %arg16[%c0_i32_82] : memref<2x!tpu.dma_semaphore, #tpu.memory_space<semaphore_mem>> -> memref<1x!tpu.dma_semaphore, #tpu.memory_space<semaphore_mem>>
    %293 = tpu.memref_squeeze %292 : memref<1x!tpu.dma_semaphore, #tpu.memory_space<semaphore_mem>> -> memref<!tpu.dma_semaphore, #tpu.memory_space<semaphore_mem>>
    tpu.wait_dma2 semaphore(%293 : memref<!tpu.dma_semaphore, #tpu.memory_space<semaphore_mem>>) src(%arg5 : memref<128x512xbf16, #tpu.memory_space<any>>) dst(%arg14 : memref<128x512xbf16, #tpu.memory_space<vmem>>)
    %c1_i32_83 = arith.constant 1 : i32
    %294 = tpu.memref_slice %arg16[%c1_i32_83] : memref<2x!tpu.dma_semaphore, #tpu.memory_space<semaphore_mem>> -> memref<1x!tpu.dma_semaphore, #tpu.memory_space<semaphore_mem>>
    %295 = tpu.memref_squeeze %294 : memref<1x!tpu.dma_semaphore, #tpu.memory_space<semaphore_mem>> -> memref<!tpu.dma_semaphore, #tpu.memory_space<semaphore_mem>>
    tpu.wait_dma2 semaphore(%295 : memref<!tpu.dma_semaphore, #tpu.memory_space<semaphore_mem>>) src(%arg6 : memref<128x512xbf16, #tpu.memory_space<any>>) dst(%arg15 : memref<128x512xbf16, #tpu.memory_space<vmem>>)
    %c0_84 = arith.constant 0 : index
    %c0_85 = arith.constant 0 : index
    %296 = vector.load %arg13[%c0_84, %c0_85] : memref<64x128xf32, #tpu.memory_space<vmem>>, vector<64x128xf32>
    %297 = arith.truncf %296 : vector<64x128xf32> to vector<64x128xbf16>
    %c0_86 = arith.constant 0 : index
    %c0_87 = arith.constant 0 : index
    %298 = vector.load %arg14[%c0_86, %c0_87] : memref<128x512xbf16, #tpu.memory_space<vmem>>, vector<128x512xbf16>
    %cst_88 = arith.constant dense<0.000000e+00> : vector<64x512xf32>
    %299 = tpu.matmul %297, %298, %cst_88 {dimension_numbers = #tpu.dot_dimension_numbers<[1], [0], [0], [1], [0, 0, 1, 1], [], []>} : vector<64x128xbf16>, vector<128x512xbf16>, vector<64x512xf32> -> vector<64x512xf32>
    %c0_89 = arith.constant 0 : index
    %c0_90 = arith.constant 0 : index
    %300 = vector.load %arg7[%c0_89, %c0_90] : memref<1x512xf32, #tpu.memory_space<vmem>>, vector<1x512xf32>
    %301 = vector.broadcast %300 : vector<1x512xf32> to vector<64x512xf32>
    %302 = arith.addf %299, %301 : vector<64x512xf32>
    %c0_91 = arith.constant 0 : index
    %c0_92 = arith.constant 0 : index
    %303 = vector.load %arg12[%c0_91, %c0_92] : memref<64x512xf32, #tpu.memory_space<vmem>>, vector<64x512xf32>
    tpu.vector_store %arg12[%c0_91, %c0_92], %302 {strides = array<i32>} : memref<64x512xf32, #tpu.memory_space<vmem>>, vector<64x512xf32>,
    %cst_93 = arith.constant 0.000000e+00 : f32
    %304 = vector.broadcast %cst_93 : f32 to vector<8x128xf32>
    %c0_i32_94 = arith.constant 0 : i32
    %c8_i32_95 = arith.constant 8 : i32
    %305 = arith.muli %c0_i32_94, %c8_i32_95 : i32
    %306 = tpu.assume_multiple %305, 8 : i32
    %307 = arith.index_cast %306 : i32 to index
    %c0_96 = arith.constant 0 : index
    %308 = vector.load %arg12[%307, %c0_96] : memref<64x512xf32, #tpu.memory_space<vmem>>, vector<8x512xf32>
    %309 = arith.truncf %304 : vector<8x128xf32> to vector<8x128xbf16>
    %c0_97 = arith.constant 0 : index
    %c0_98 = arith.constant 0 : index
    %310 = vector.load %arg15[%c0_97, %c0_98] : memref<128x512xbf16, #tpu.memory_space<vmem>>, vector<128x512xbf16>
    %cst_99 = arith.constant dense<0.000000e+00> : vector<8x512xf32>
    %311 = tpu.matmul %309, %310, %cst_99 {dimension_numbers = #tpu.dot_dimension_numbers<[1], [0], [0], [1], [0, 0, 1, 1], [], []>} : vector<8x128xbf16>, vector<128x512xbf16>, vector<8x512xf32> -> vector<8x512xf32>
    %312 = arith.addf %308, %311 : vector<8x512xf32>
    %313 = vector.extract_strided_slice %312 {offsets = [0, 0], sizes = [8, 128], strides = [1, 1]} : vector<8x512xf32> to vector<8x128xf32>
    %314 = arith.negf %313 : vector<8x128xf32>
    %315 = math.exp %314 : vector<8x128xf32>
    %cst_100 = arith.constant 1.000000e+00 : f32
    %316 = vector.broadcast %cst_100 : f32 to vector<8x128xf32>
    %317 = arith.addf %316, %315 : vector<8x128xf32>
    %318 = arith.divf %316, %317 : vector<8x128xf32>
    %319 = vector.extract_strided_slice %312 {offsets = [0, 128], sizes = [8, 128], strides = [1, 1]} : vector<8x512xf32> to vector<8x128xf32>
    %320 = arith.negf %319 : vector<8x128xf32>
    %321 = math.exp %320 : vector<8x128xf32>
    %cst_101 = arith.constant 1.000000e+00 : f32
    %322 = vector.broadcast %cst_101 : f32 to vector<8x128xf32>
    %323 = arith.addf %322, %321 : vector<8x128xf32>
    %324 = arith.divf %322, %323 : vector<8x128xf32>
    %325 = vector.extract_strided_slice %312 {offsets = [0, 256], sizes = [8, 128], strides = [1, 1]} : vector<8x512xf32> to vector<8x128xf32>
    %326 = math.tanh %325 : vector<8x128xf32>
    %327 = vector.extract_strided_slice %312 {offsets = [0, 384], sizes = [8, 128], strides = [1, 1]} : vector<8x512xf32> to vector<8x128xf32>
    %328 = arith.negf %327 : vector<8x128xf32>
    %329 = math.exp %328 : vector<8x128xf32>
    %cst_102 = arith.constant 1.000000e+00 : f32
    %330 = vector.broadcast %cst_102 : f32 to vector<8x128xf32>
    %331 = arith.addf %330, %329 : vector<8x128xf32>
    %332 = arith.divf %330, %331 : vector<8x128xf32>
    %333 = arith.mulf %324, %304 : vector<8x128xf32>
    %334 = arith.mulf %318, %326 : vector<8x128xf32>
    %335 = arith.addf %333, %334 : vector<8x128xf32>
    %336 = math.tanh %335 : vector<8x128xf32>
    %337 = arith.mulf %332, %336 : vector<8x128xf32>
    %c1_i32_103 = arith.constant 1 : i32
    %c8_i32_104 = arith.constant 8 : i32
    %338 = arith.muli %c1_i32_103, %c8_i32_104 : i32
    %339 = tpu.assume_multiple %338, 8 : i32
    %340 = arith.index_cast %339 : i32 to index
    %c0_105 = arith.constant 0 : index
    %341 = vector.load %arg12[%340, %c0_105] : memref<64x512xf32, #tpu.memory_space<vmem>>, vector<8x512xf32>
    %342 = arith.truncf %337 : vector<8x128xf32> to vector<8x128xbf16>
    %c0_106 = arith.constant 0 : index
    %c0_107 = arith.constant 0 : index
    %343 = vector.load %arg15[%c0_106, %c0_107] : memref<128x512xbf16, #tpu.memory_space<vmem>>, vector<128x512xbf16>
    %cst_108 = arith.constant dense<0.000000e+00> : vector<8x512xf32>
    %344 = tpu.matmul %342, %343, %cst_108 {dimension_numbers = #tpu.dot_dimension_numbers<[1], [0], [0], [1], [0, 0, 1, 1], [], []>} : vector<8x128xbf16>, vector<128x512xbf16>, vector<8x512xf32> -> vector<8x512xf32>
    %345 = arith.addf %341, %344 : vector<8x512xf32>
    %346 = vector.extract_strided_slice %345 {offsets = [0, 0], sizes = [8, 128], strides = [1, 1]} : vector<8x512xf32> to vector<8x128xf32>
    %347 = arith.negf %346 : vector<8x128xf32>
    %348 = math.exp %347 : vector<8x128xf32>
    %cst_109 = arith.constant 1.000000e+00 : f32
    %349 = vector.broadcast %cst_109 : f32 to vector<8x128xf32>
    %350 = arith.addf %349, %348 : vector<8x128xf32>
    %351 = arith.divf %349, %350 : vector<8x128xf32>
    %352 = vector.extract_strided_slice %345 {offsets = [0, 128], sizes = [8, 128], strides = [1, 1]} : vector<8x512xf32> to vector<8x128xf32>
    %353 = arith.negf %352 : vector<8x128xf32>
    %354 = math.exp %353 : vector<8x128xf32>
    %cst_110 = arith.constant 1.000000e+00 : f32
    %355 = vector.broadcast %cst_110 : f32 to vector<8x128xf32>
    %356 = arith.addf %355, %354 : vector<8x128xf32>
    %357 = arith.divf %355, %356 : vector<8x128xf32>
    %358 = vector.extract_strided_slice %345 {offsets = [0, 256], sizes = [8, 128], strides = [1, 1]} : vector<8x512xf32> to vector<8x128xf32>
    %359 = math.tanh %358 : vector<8x128xf32>
    %360 = vector.extract_strided_slice %345 {offsets = [0, 384], sizes = [8, 128], strides = [1, 1]} : vector<8x512xf32> to vector<8x128xf32>
    %361 = arith.negf %360 : vector<8x128xf32>
    %362 = math.exp %361 : vector<8x128xf32>
    %cst_111 = arith.constant 1.000000e+00 : f32
    %363 = vector.broadcast %cst_111 : f32 to vector<8x128xf32>
    %364 = arith.addf %363, %362 : vector<8x128xf32>
    %365 = arith.divf %363, %364 : vector<8x128xf32>
    %366 = arith.mulf %357, %335 : vector<8x128xf32>
    %367 = arith.mulf %351, %359 : vector<8x128xf32>
    %368 = arith.addf %366, %367 : vector<8x128xf32>
    %369 = math.tanh %368 : vector<8x128xf32>
    %370 = arith.mulf %365, %369 : vector<8x128xf32>
    %c2_i32_112 = arith.constant 2 : i32
    %c8_i32_113 = arith.constant 8 : i32
    %371 = arith.muli %c2_i32_112, %c8_i32_113 : i32
    %372 = tpu.assume_multiple %371, 8 : i32
    %373 = arith.index_cast %372 : i32 to index
    %c0_114 = arith.constant 0 : index
    %374 = vector.load %arg12[%373, %c0_114] : memref<64x512xf32, #tpu.memory_space<vmem>>, vector<8x512xf32>
    %375 = arith.truncf %370 : vector<8x128xf32> to vector<8x128xbf16>
    %c0_115 = arith.constant 0 : index
    %c0_116 = arith.constant 0 : index
    %376 = vector.load %arg15[%c0_115, %c0_116] : memref<128x512xbf16, #tpu.memory_space<vmem>>, vector<128x512xbf16>
    %cst_117 = arith.constant dense<0.000000e+00> : vector<8x512xf32>
    %377 = tpu.matmul %375, %376, %cst_117 {dimension_numbers = #tpu.dot_dimension_numbers<[1], [0], [0], [1], [0, 0, 1, 1], [], []>} : vector<8x128xbf16>, vector<128x512xbf16>, vector<8x512xf32> -> vector<8x512xf32>
    %378 = arith.addf %374, %377 : vector<8x512xf32>
    %379 = vector.extract_strided_slice %378 {offsets = [0, 0], sizes = [8, 128], strides = [1, 1]} : vector<8x512xf32> to vector<8x128xf32>
    %380 = arith.negf %379 : vector<8x128xf32>
    %381 = math.exp %380 : vector<8x128xf32>
    %cst_118 = arith.constant 1.000000e+00 : f32
    %382 = vector.broadcast %cst_118 : f32 to vector<8x128xf32>
    %383 = arith.addf %382, %381 : vector<8x128xf32>
    %384 = arith.divf %382, %383 : vector<8x128xf32>
    %385 = vector.extract_strided_slice %378 {offsets = [0, 128], sizes = [8, 128], strides = [1, 1]} : vector<8x512xf32> to vector<8x128xf32>
    %386 = arith.negf %385 : vector<8x128xf32>
    %387 = math.exp %386 : vector<8x128xf32>
    %cst_119 = arith.constant 1.000000e+00 : f32
    %388 = vector.broadcast %cst_119 : f32 to vector<8x128xf32>
    %389 = arith.addf %388, %387 : vector<8x128xf32>
    %390 = arith.divf %388, %389 : vector<8x128xf32>
    %391 = vector.extract_strided_slice %378 {offsets = [0, 256], sizes = [8, 128], strides = [1, 1]} : vector<8x512xf32> to vector<8x128xf32>
    %392 = math.tanh %391 : vector<8x128xf32>
    %393 = vector.extract_strided_slice %378 {offsets = [0, 384], sizes = [8, 128], strides = [1, 1]} : vector<8x512xf32> to vector<8x128xf32>
    %394 = arith.negf %393 : vector<8x128xf32>
    %395 = math.exp %394 : vector<8x128xf32>
    %cst_120 = arith.constant 1.000000e+00 : f32
    %396 = vector.broadcast %cst_120 : f32 to vector<8x128xf32>
    %397 = arith.addf %396, %395 : vector<8x128xf32>
    %398 = arith.divf %396, %397 : vector<8x128xf32>
    %399 = arith.mulf %390, %368 : vector<8x128xf32>
    %400 = arith.mulf %384, %392 : vector<8x128xf32>
    %401 = arith.addf %399, %400 : vector<8x128xf32>
    %402 = math.tanh %401 : vector<8x128xf32>
    %403 = arith.mulf %398, %402 : vector<8x128xf32>
    %c3_i32_121 = arith.constant 3 : i32
    %c8_i32_122 = arith.constant 8 : i32
    %404 = arith.muli %c3_i32_121, %c8_i32_122 : i32
    %405 = tpu.assume_multiple %404, 8 : i32
    %406 = arith.index_cast %405 : i32 to index
    %c0_123 = arith.constant 0 : index
    %407 = vector.load %arg12[%406, %c0_123] : memref<64x512xf32, #tpu.memory_space<vmem>>, vector<8x512xf32>
    %408 = arith.truncf %403 : vector<8x128xf32> to vector<8x128xbf16>
    %c0_124 = arith.constant 0 : index
    %c0_125 = arith.constant 0 : index
    %409 = vector.load %arg15[%c0_124, %c0_125] : memref<128x512xbf16, #tpu.memory_space<vmem>>, vector<128x512xbf16>
    %cst_126 = arith.constant dense<0.000000e+00> : vector<8x512xf32>
    %410 = tpu.matmul %408, %409, %cst_126 {dimension_numbers = #tpu.dot_dimension_numbers<[1], [0], [0], [1], [0, 0, 1, 1], [], []>} : vector<8x128xbf16>, vector<128x512xbf16>, vector<8x512xf32> -> vector<8x512xf32>
    %411 = arith.addf %407, %410 : vector<8x512xf32>
    %412 = vector.extract_strided_slice %411 {offsets = [0, 0], sizes = [8, 128], strides = [1, 1]} : vector<8x512xf32> to vector<8x128xf32>
    %413 = arith.negf %412 : vector<8x128xf32>
    %414 = math.exp %413 : vector<8x128xf32>
    %cst_127 = arith.constant 1.000000e+00 : f32
    %415 = vector.broadcast %cst_127 : f32 to vector<8x128xf32>
    %416 = arith.addf %415, %414 : vector<8x128xf32>
    %417 = arith.divf %415, %416 : vector<8x128xf32>
    %418 = vector.extract_strided_slice %411 {offsets = [0, 128], sizes = [8, 128], strides = [1, 1]} : vector<8x512xf32> to vector<8x128xf32>
    %419 = arith.negf %418 : vector<8x128xf32>
    %420 = math.exp %419 : vector<8x128xf32>
    %cst_128 = arith.constant 1.000000e+00 : f32
    %421 = vector.broadcast %cst_128 : f32 to vector<8x128xf32>
    %422 = arith.addf %421, %420 : vector<8x128xf32>
    %423 = arith.divf %421, %422 : vector<8x128xf32>
    %424 = vector.extract_strided_slice %411 {offsets = [0, 256], sizes = [8, 128], strides = [1, 1]} : vector<8x512xf32> to vector<8x128xf32>
    %425 = math.tanh %424 : vector<8x128xf32>
    %426 = vector.extract_strided_slice %411 {offsets = [0, 384], sizes = [8, 128], strides = [1, 1]} : vector<8x512xf32> to vector<8x128xf32>
    %427 = arith.negf %426 : vector<8x128xf32>
    %428 = math.exp %427 : vector<8x128xf32>
    %cst_129 = arith.constant 1.000000e+00 : f32
    %429 = vector.broadcast %cst_129 : f32 to vector<8x128xf32>
    %430 = arith.addf %429, %428 : vector<8x128xf32>
    %431 = arith.divf %429, %430 : vector<8x128xf32>
    %432 = arith.mulf %423, %401 : vector<8x128xf32>
    %433 = arith.mulf %417, %425 : vector<8x128xf32>
    %434 = arith.addf %432, %433 : vector<8x128xf32>
    %435 = math.tanh %434 : vector<8x128xf32>
    %436 = arith.mulf %431, %435 : vector<8x128xf32>
    %c4_i32_130 = arith.constant 4 : i32
    %c8_i32_131 = arith.constant 8 : i32
    %437 = arith.muli %c4_i32_130, %c8_i32_131 : i32
    %438 = tpu.assume_multiple %437, 8 : i32
    %439 = arith.index_cast %438 : i32 to index
    %c0_132 = arith.constant 0 : index
    %440 = vector.load %arg12[%439, %c0_132] : memref<64x512xf32, #tpu.memory_space<vmem>>, vector<8x512xf32>
    %441 = arith.truncf %436 : vector<8x128xf32> to vector<8x128xbf16>
    %c0_133 = arith.constant 0 : index
    %c0_134 = arith.constant 0 : index
    %442 = vector.load %arg15[%c0_133, %c0_134] : memref<128x512xbf16, #tpu.memory_space<vmem>>, vector<128x512xbf16>
    %cst_135 = arith.constant dense<0.000000e+00> : vector<8x512xf32>
    %443 = tpu.matmul %441, %442, %cst_135 {dimension_numbers = #tpu.dot_dimension_numbers<[1], [0], [0], [1], [0, 0, 1, 1], [], []>} : vector<8x128xbf16>, vector<128x512xbf16>, vector<8x512xf32> -> vector<8x512xf32>
    %444 = arith.addf %440, %443 : vector<8x512xf32>
    %445 = vector.extract_strided_slice %444 {offsets = [0, 0], sizes = [8, 128], strides = [1, 1]} : vector<8x512xf32> to vector<8x128xf32>
    %446 = arith.negf %445 : vector<8x128xf32>
    %447 = math.exp %446 : vector<8x128xf32>
    %cst_136 = arith.constant 1.000000e+00 : f32
    %448 = vector.broadcast %cst_136 : f32 to vector<8x128xf32>
    %449 = arith.addf %448, %447 : vector<8x128xf32>
    %450 = arith.divf %448, %449 : vector<8x128xf32>
    %451 = vector.extract_strided_slice %444 {offsets = [0, 128], sizes = [8, 128], strides = [1, 1]} : vector<8x512xf32> to vector<8x128xf32>
    %452 = arith.negf %451 : vector<8x128xf32>
    %453 = math.exp %452 : vector<8x128xf32>
    %cst_137 = arith.constant 1.000000e+00 : f32
    %454 = vector.broadcast %cst_137 : f32 to vector<8x128xf32>
    %455 = arith.addf %454, %453 : vector<8x128xf32>
    %456 = arith.divf %454, %455 : vector<8x128xf32>
    %457 = vector.extract_strided_slice %444 {offsets = [0, 256], sizes = [8, 128], strides = [1, 1]} : vector<8x512xf32> to vector<8x128xf32>
    %458 = math.tanh %457 : vector<8x128xf32>
    %459 = vector.extract_strided_slice %444 {offsets = [0, 384], sizes = [8, 128], strides = [1, 1]} : vector<8x512xf32> to vector<8x128xf32>
    %460 = arith.negf %459 : vector<8x128xf32>
    %461 = math.exp %460 : vector<8x128xf32>
    %cst_138 = arith.constant 1.000000e+00 : f32
    %462 = vector.broadcast %cst_138 : f32 to vector<8x128xf32>
    %463 = arith.addf %462, %461 : vector<8x128xf32>
    %464 = arith.divf %462, %463 : vector<8x128xf32>
    %465 = arith.mulf %456, %434 : vector<8x128xf32>
    %466 = arith.mulf %450, %458 : vector<8x128xf32>
    %467 = arith.addf %465, %466 : vector<8x128xf32>
    %468 = math.tanh %467 : vector<8x128xf32>
    %469 = arith.mulf %464, %468 : vector<8x128xf32>
    %c5_i32_139 = arith.constant 5 : i32
    %c8_i32_140 = arith.constant 8 : i32
    %470 = arith.muli %c5_i32_139, %c8_i32_140 : i32
    %471 = tpu.assume_multiple %470, 8 : i32
    %472 = arith.index_cast %471 : i32 to index
    %c0_141 = arith.constant 0 : index
    %473 = vector.load %arg12[%472, %c0_141] : memref<64x512xf32, #tpu.memory_space<vmem>>, vector<8x512xf32>
    %474 = arith.truncf %469 : vector<8x128xf32> to vector<8x128xbf16>
    %c0_142 = arith.constant 0 : index
    %c0_143 = arith.constant 0 : index
    %475 = vector.load %arg15[%c0_142, %c0_143] : memref<128x512xbf16, #tpu.memory_space<vmem>>, vector<128x512xbf16>
    %cst_144 = arith.constant dense<0.000000e+00> : vector<8x512xf32>
    %476 = tpu.matmul %474, %475, %cst_144 {dimension_numbers = #tpu.dot_dimension_numbers<[1], [0], [0], [1], [0, 0, 1, 1], [], []>} : vector<8x128xbf16>, vector<128x512xbf16>, vector<8x512xf32> -> vector<8x512xf32>
    %477 = arith.addf %473, %476 : vector<8x512xf32>
    %478 = vector.extract_strided_slice %477 {offsets = [0, 0], sizes = [8, 128], strides = [1, 1]} : vector<8x512xf32> to vector<8x128xf32>
    %479 = arith.negf %478 : vector<8x128xf32>
    %480 = math.exp %479 : vector<8x128xf32>
    %cst_145 = arith.constant 1.000000e+00 : f32
    %481 = vector.broadcast %cst_145 : f32 to vector<8x128xf32>
    %482 = arith.addf %481, %480 : vector<8x128xf32>
    %483 = arith.divf %481, %482 : vector<8x128xf32>
    %484 = vector.extract_strided_slice %477 {offsets = [0, 128], sizes = [8, 128], strides = [1, 1]} : vector<8x512xf32> to vector<8x128xf32>
    %485 = arith.negf %484 : vector<8x128xf32>
    %486 = math.exp %485 : vector<8x128xf32>
    %cst_146 = arith.constant 1.000000e+00 : f32
    %487 = vector.broadcast %cst_146 : f32 to vector<8x128xf32>
    %488 = arith.addf %487, %486 : vector<8x128xf32>
    %489 = arith.divf %487, %488 : vector<8x128xf32>
    %490 = vector.extract_strided_slice %477 {offsets = [0, 256], sizes = [8, 128], strides = [1, 1]} : vector<8x512xf32> to vector<8x128xf32>
    %491 = math.tanh %490 : vector<8x128xf32>
    %492 = vector.extract_strided_slice %477 {offsets = [0, 384], sizes = [8, 128], strides = [1, 1]} : vector<8x512xf32> to vector<8x128xf32>
    %493 = arith.negf %492 : vector<8x128xf32>
    %494 = math.exp %493 : vector<8x128xf32>
    %cst_147 = arith.constant 1.000000e+00 : f32
    %495 = vector.broadcast %cst_147 : f32 to vector<8x128xf32>
    %496 = arith.addf %495, %494 : vector<8x128xf32>
    %497 = arith.divf %495, %496 : vector<8x128xf32>
    %498 = arith.mulf %489, %467 : vector<8x128xf32>
    %499 = arith.mulf %483, %491 : vector<8x128xf32>
    %500 = arith.addf %498, %499 : vector<8x128xf32>
    %501 = math.tanh %500 : vector<8x128xf32>
    %502 = arith.mulf %497, %501 : vector<8x128xf32>
    %c6_i32_148 = arith.constant 6 : i32
    %c8_i32_149 = arith.constant 8 : i32
    %503 = arith.muli %c6_i32_148, %c8_i32_149 : i32
    %504 = tpu.assume_multiple %503, 8 : i32
    %505 = arith.index_cast %504 : i32 to index
    %c0_150 = arith.constant 0 : index
    %506 = vector.load %arg12[%505, %c0_150] : memref<64x512xf32, #tpu.memory_space<vmem>>, vector<8x512xf32>
    %507 = arith.truncf %502 : vector<8x128xf32> to vector<8x128xbf16>
    %c0_151 = arith.constant 0 : index
    %c0_152 = arith.constant 0 : index
    %508 = vector.load %arg15[%c0_151, %c0_152] : memref<128x512xbf16, #tpu.memory_space<vmem>>, vector<128x512xbf16>
    %cst_153 = arith.constant dense<0.000000e+00> : vector<8x512xf32>
    %509 = tpu.matmul %507, %508, %cst_153 {dimension_numbers = #tpu.dot_dimension_numbers<[1], [0], [0], [1], [0, 0, 1, 1], [], []>} : vector<8x128xbf16>, vector<128x512xbf16>, vector<8x512xf32> -> vector<8x512xf32>
    %510 = arith.addf %506, %509 : vector<8x512xf32>
    %511 = vector.extract_strided_slice %510 {offsets = [0, 0], sizes = [8, 128], strides = [1, 1]} : vector<8x512xf32> to vector<8x128xf32>
    %512 = arith.negf %511 : vector<8x128xf32>
    %513 = math.exp %512 : vector<8x128xf32>
    %cst_154 = arith.constant 1.000000e+00 : f32
    %514 = vector.broadcast %cst_154 : f32 to vector<8x128xf32>
    %515 = arith.addf %514, %513 : vector<8x128xf32>
    %516 = arith.divf %514, %515 : vector<8x128xf32>
    %517 = vector.extract_strided_slice %510 {offsets = [0, 128], sizes = [8, 128], strides = [1, 1]} : vector<8x512xf32> to vector<8x128xf32>
    %518 = arith.negf %517 : vector<8x128xf32>
    %519 = math.exp %518 : vector<8x128xf32>
    %cst_155 = arith.constant 1.000000e+00 : f32
    %520 = vector.broadcast %cst_155 : f32 to vector<8x128xf32>
    %521 = arith.addf %520, %519 : vector<8x128xf32>
    %522 = arith.divf %520, %521 : vector<8x128xf32>
    %523 = vector.extract_strided_slice %510 {offsets = [0, 256], sizes = [8, 128], strides = [1, 1]} : vector<8x512xf32> to vector<8x128xf32>
    %524 = math.tanh %523 : vector<8x128xf32>
    %525 = vector.extract_strided_slice %510 {offsets = [0, 384], sizes = [8, 128], strides = [1, 1]} : vector<8x512xf32> to vector<8x128xf32>
    %526 = arith.negf %525 : vector<8x128xf32>
    %527 = math.exp %526 : vector<8x128xf32>
    %cst_156 = arith.constant 1.000000e+00 : f32
    %528 = vector.broadcast %cst_156 : f32 to vector<8x128xf32>
    %529 = arith.addf %528, %527 : vector<8x128xf32>
    %530 = arith.divf %528, %529 : vector<8x128xf32>
    %531 = arith.mulf %522, %500 : vector<8x128xf32>
    %532 = arith.mulf %516, %524 : vector<8x128xf32>
    %533 = arith.addf %531, %532 : vector<8x128xf32>
    %534 = math.tanh %533 : vector<8x128xf32>
    %535 = arith.mulf %530, %534 : vector<8x128xf32>
    %c7_i32_157 = arith.constant 7 : i32
    %c8_i32_158 = arith.constant 8 : i32
    %536 = arith.muli %c7_i32_157, %c8_i32_158 : i32
    %537 = tpu.assume_multiple %536, 8 : i32
    %538 = arith.index_cast %537 : i32 to index
    %c0_159 = arith.constant 0 : index
    %539 = vector.load %arg12[%538, %c0_159] : memref<64x512xf32, #tpu.memory_space<vmem>>, vector<8x512xf32>
    %540 = arith.truncf %535 : vector<8x128xf32> to vector<8x128xbf16>
    %c0_160 = arith.constant 0 : index
    %c0_161 = arith.constant 0 : index
    %541 = vector.load %arg15[%c0_160, %c0_161] : memref<128x512xbf16, #tpu.memory_space<vmem>>, vector<128x512xbf16>
    %cst_162 = arith.constant dense<0.000000e+00> : vector<8x512xf32>
    %542 = tpu.matmul %540, %541, %cst_162 {dimension_numbers = #tpu.dot_dimension_numbers<[1], [0], [0], [1], [0, 0, 1, 1], [], []>} : vector<8x128xbf16>, vector<128x512xbf16>, vector<8x512xf32> -> vector<8x512xf32>
    %543 = arith.addf %539, %542 : vector<8x512xf32>
    %544 = vector.extract_strided_slice %543 {offsets = [0, 0], sizes = [8, 128], strides = [1, 1]} : vector<8x512xf32> to vector<8x128xf32>
    %545 = arith.negf %544 : vector<8x128xf32>
    %546 = math.exp %545 : vector<8x128xf32>
    %cst_163 = arith.constant 1.000000e+00 : f32
    %547 = vector.broadcast %cst_163 : f32 to vector<8x128xf32>
    %548 = arith.addf %547, %546 : vector<8x128xf32>
    %549 = arith.divf %547, %548 : vector<8x128xf32>
    %550 = vector.extract_strided_slice %543 {offsets = [0, 128], sizes = [8, 128], strides = [1, 1]} : vector<8x512xf32> to vector<8x128xf32>
    %551 = arith.negf %550 : vector<8x128xf32>
    %552 = math.exp %551 : vector<8x128xf32>
    %cst_164 = arith.constant 1.000000e+00 : f32
    %553 = vector.broadcast %cst_164 : f32 to vector<8x128xf32>
    %554 = arith.addf %553, %552 : vector<8x128xf32>
    %555 = arith.divf %553, %554 : vector<8x128xf32>
    %556 = vector.extract_strided_slice %543 {offsets = [0, 256], sizes = [8, 128], strides = [1, 1]} : vector<8x512xf32> to vector<8x128xf32>
    %557 = math.tanh %556 : vector<8x128xf32>
    %558 = vector.extract_strided_slice %543 {offsets = [0, 384], sizes = [8, 128], strides = [1, 1]} : vector<8x512xf32> to vector<8x128xf32>
    %559 = arith.negf %558 : vector<8x128xf32>
    %560 = math.exp %559 : vector<8x128xf32>
    %cst_165 = arith.constant 1.000000e+00 : f32
    %561 = vector.broadcast %cst_165 : f32 to vector<8x128xf32>
    %562 = arith.addf %561, %560 : vector<8x128xf32>
    %563 = arith.divf %561, %562 : vector<8x128xf32>
    %564 = arith.mulf %555, %533 : vector<8x128xf32>
    %565 = arith.mulf %549, %557 : vector<8x128xf32>
    %566 = arith.addf %564, %565 : vector<8x128xf32>
    %567 = math.tanh %566 : vector<8x128xf32>
    %568 = arith.mulf %563, %567 : vector<8x128xf32>
    %c8_i32_166 = arith.constant 8 : i32
    %c0_167 = arith.constant 0 : index
    %c0_168 = arith.constant 0 : index
    %569 = vector.load %arg8[%c0_167, %c0_168] : memref<1x128xf32, #tpu.memory_space<vmem>>, vector<1x128xf32>
    %570 = vector.broadcast %569 : vector<1x128xf32> to vector<8x128xf32>
    %571 = arith.mulf %568, %570 : vector<8x128xf32>
    %cst_169 = arith.constant dense<0.000000e+00> : vector<8xf32>
    %572 = vector.multi_reduction <add>, %571, %cst_169 [1] : vector<8x128xf32> to vector<8xf32>
    %573 = vector.shape_cast %572 : vector<8xf32> to vector<8x1xf32>
    %c0_170 = arith.constant 0 : index
    %c0_171 = arith.constant 0 : index
    %574 = vector.load %arg1[%c0_170, %c0_171] : memref<8x4xf32, #tpu.memory_space<vmem>>, vector<8x4xf32>
    %c0_172 = arith.constant 0 : index
    %c0_173 = arith.constant 0 : index
    %575 = vector.load %arg9[%c0_172, %c0_173] : memref<1x4xf32, #tpu.memory_space<vmem>>, vector<1x4xf32>
    %576 = vector.broadcast %575 : vector<1x4xf32> to vector<8x4xf32>
    %577 = arith.mulf %574, %576 : vector<8x4xf32>
    %cst_174 = arith.constant dense<0.000000e+00> : vector<8xf32>
    %578 = vector.multi_reduction <add>, %577, %cst_174 [1] : vector<8x4xf32> to vector<8xf32>
    %579 = vector.shape_cast %578 : vector<8xf32> to vector<8x1xf32>
    %580 = arith.addf %573, %579 : vector<8x1xf32>
    %c0_175 = arith.constant 0 : index
    %c0_176 = arith.constant 0 : index
    %581 = vector.load %arg10[%c0_175, %c0_176] : memref<1x1xf32, #tpu.memory_space<vmem>>, vector<1x1xf32>
    %582 = vector.broadcast %581 : vector<1x1xf32> to vector<8x1xf32>
    %583 = arith.addf %580, %582 : vector<8x1xf32>
    %c0_177 = arith.constant 0 : index
    %c0_178 = arith.constant 0 : index
    %584 = vector.load %arg11[%c0_177, %c0_178] : memref<8x1xf32, #tpu.memory_space<vmem>>, vector<8x1xf32>
    tpu.vector_store %arg11[%c0_177, %c0_178], %583 {strides = array<i32>} : memref<8x1xf32, #tpu.memory_space<vmem>>, vector<8x1xf32>,
    return
  }
}

</mosaic_0001>

<llo_original>
// kernel: recurrent_critic_forward.1
$region0: #{recurrent_critic_forward.1}
  #allocation0 [shape = 'u32[]', space=smem, size = 0x4, offset = 0x4, fixed_abs, tag = 'smem constant byte address 0x4 - core index']
  #allocation1 [shape = 'u32[144,128]{1,0:T(1,128)}', space=vmem, size = 0x12000, scoped, tag = 'internal scratch']
  #allocation2 [shape = 'f32[64,512]{1,0:T(8,128)}', space=vmem, size = 0x20000, scoped, tag = 'scratch operand']
  #allocation3 [shape = 'f32[64,128]{1,0:T(8,128)}', space=vmem, size = 0x8000, scoped, tag = 'scratch operand']
  #allocation4 [shape = 'bf16[128,512]{1,0:T(16,128)(2,1)}', space=vmem, size = 0x20000, scoped, tag = 'scratch operand']
  #allocation5 [shape = 'bf16[128,512]{1,0:T(16,128)(2,1)}', space=vmem, size = 0x20000, scoped, tag = 'scratch operand']
  #allocation6 [shape = 's32[2]{0}', space=sflag, size = 0x8, scoped, tag = 'scratch operand']
  #allocation7 [shape = 'f32[1,1]{1,0:T(1,128)S(1)}', space=vmem, size = 0x200, scoped, tag = 'scoped memory for recurrent_critic_forward.1']
  #allocation8 [shape = 's32[]', space=sflag, size = 0x4, offset = 0, fixed_abs, tag = 'sflag constant byte address 0x0 - dummy sync flag']
  #allocation9 [shape = 's32[]', space=sflag, size = 0x4, offset = 0, fixed_abs, tag = 'sflag constant byte address 0x0 - dummy sync flag']
  %s0 = inlined_call_operand.vmem [shape: bf16[64,128], index: 0, kind: input, shape index: {}]
  %s1 = inlined_call_operand.vmem [shape: f32[8,4], index: 1, kind: input, shape index: {}]
  %s2 = inlined_call_operand.vmem [shape: bf16[128,512], index: 2, kind: input, shape index: {}]
  %s3 = inlined_call_operand.vmem [shape: f32[1,512], index: 3, kind: input, shape index: {}]
  %s4 = inlined_call_operand.vmem [shape: bf16[128,512], index: 4, kind: input, shape index: {}]
  %s5 = inlined_call_operand.vmem [shape: bf16[128,512], index: 5, kind: input, shape index: {}]
  %s6 = inlined_call_operand.vmem [shape: bf16[128,512], index: 6, kind: input, shape index: {}]
  %s7 = inlined_call_operand.vmem [shape: f32[1,512], index: 7, kind: input, shape index: {}]
  %s8 = inlined_call_operand.vmem [shape: f32[1,128], index: 8, kind: input, shape index: {}]
  %s9 = inlined_call_operand.vmem [shape: f32[1,4], index: 9, kind: input, shape index: {}]
  %s10 = inlined_call_operand.<no memory space> [shape: f32[1,1], index: 10, kind: input, shape index: {}]
  %s11 = inlined_call_operand.vmem [shape: f32[8,1], index: 11, kind: output, shape index: {}]
  %s12 = sld [smem:[#allocation0]]
  $region120: #{recurrent_critic_forward.1} parent=0
    _
  %s14 = ssub.s32 1, %s12
  %s15 = scalar_select 0, %s14, %s12
  %v16 = vstv %s10
  %17 = vst [vmem:[#allocation7] sm:$0x1] %v16
  // Predicated region
  $region2: #{recurrent_critic_forward.1} parent=0 // pred_check
    _
  $region3: #{recurrent_critic_forward.1} parent=0 // pred_check_branch
    %19 = sbr.rel (0) target = $region5
  $region4: #{recurrent_critic_forward.1} parent=0 // pred_region
    _
  $region5: #{recurrent_critic_forward.1} parent=0 // pred_fallthru
    _
  // Predicated region
  $region6: #{recurrent_critic_forward.1} parent=0 // pred_check
    _
  $region7: #{recurrent_critic_forward.1} parent=0 // pred_check_branch
    %21 = sbr.rel (0) target = $region9
  $region8: #{recurrent_critic_forward.1} parent=0 // pred_region
    _
  $region9: #{recurrent_critic_forward.1} parent=0 // pred_fallthru
    _
  // Predicated region
  $region10: #{recurrent_critic_forward.1} parent=0 // pred_check
    _
  $region11: #{recurrent_critic_forward.1} parent=0 // pred_check_branch
    %23 = sbr.rel (0) target = $region13
  $region12: #{recurrent_critic_forward.1} parent=0 // pred_region
    _
  $region13: #{recurrent_critic_forward.1} parent=0 // pred_fallthru
    _
  // Predicated region
  $region14: #{recurrent_critic_forward.1} parent=0 // pred_check
    _
  $region15: #{recurrent_critic_forward.1} parent=0 // pred_check_branch
    %25 = sbr.rel (0) target = $region17
  $region16: #{recurrent_critic_forward.1} parent=0 // pred_region
    _
  $region17: #{recurrent_critic_forward.1} parent=0 // pred_fallthru
    _
  // Predicated region
  $region18: #{recurrent_critic_forward.1} parent=0 // pred_check
    _
  $region19: #{recurrent_critic_forward.1} parent=0 // pred_check_branch
    %27 = sbr.rel (0) target = $region21
  $region20: #{recurrent_critic_forward.1} parent=0 // pred_region
    _
  $region21: #{recurrent_critic_forward.1} parent=0 // pred_fallthru
    _
  // Predicated region
  $region22: #{recurrent_critic_forward.1} parent=0 // pred_check
    _
  $region23: #{recurrent_critic_forward.1} parent=0 // pred_check_branch
    %29 = sbr.rel (0) target = $region25
  $region24: #{recurrent_critic_forward.1} parent=0 // pred_region
    _
  $region25: #{recurrent_critic_forward.1} parent=0 // pred_fallthru
    _
  // Predicated region
  $region26: #{recurrent_critic_forward.1} parent=0 // pred_check
    _
  $region27: #{recurrent_critic_forward.1} parent=0 // pred_check_branch
    %31 = sbr.rel (0) target = $region29
  $region28: #{recurrent_critic_forward.1} parent=0 // pred_region
    _
  $region29: #{recurrent_critic_forward.1} parent=0 // pred_fallthru
    _
  // Predicated region
  $region30: #{recurrent_critic_forward.1} parent=0 // pred_check
    _
  $region31: #{recurrent_critic_forward.1} parent=0 // pred_check_branch
    %33 = sbr.rel (0) target = $region33
  $region32: #{recurrent_critic_forward.1} parent=0 // pred_region
    _
  $region33: #{recurrent_critic_forward.1} parent=0 // pred_fallthru
    _
  // Predicated region
  $region34: #{recurrent_critic_forward.1} parent=0 // pred_check
    _
  $region35: #{recurrent_critic_forward.1} parent=0 // pred_check_branch
    %35 = sbr.rel (0) target = $region37
  $region36: #{recurrent_critic_forward.1} parent=0 // pred_region
    _
  $region37: #{recurrent_critic_forward.1} parent=0 // pred_fallthru
    _
  %p38 = scmp.lt.u32.totalorder 4, 8
  %p39 = pneg %p38
  // Predicated region
  $region38: #{recurrent_critic_forward.1} parent=0 // pred_check
    _
  $region39: #{recurrent_critic_forward.1} parent=0 // pred_check_branch
    %41 = sbr.rel (%p38) target = $region41
  $region40: #{recurrent_critic_forward.1} parent=0 // pred_region
    %s182 = sand.u32 4, 7
    %p183 = scmp.eq.s32.totalorder %s182, 0
    %p184 = pneg %p183
    // Predicated region
    $region53: #{recurrent_critic_forward.1} parent=40 // pred_check
      _
    $region54: #{recurrent_critic_forward.1} parent=40 // pred_check_branch
      %186 = sbr.rel (%p183) target = $region56
    $region55: #{recurrent_critic_forward.1} parent=40 // pred_region
      %s187 = sand.u32 4, 7
      %s188 = ssub.s32 4, %s187
      %s189 = scalar_lea.vmem %s5, %s188
      %s190 = ssub.s32 4, %s187
      %s191 = scalar_lea.vmem [#allocation4], %s190
      loop: start=0, step=1, limit=1
      $region57: #{recurrent_critic_forward.1} parent=55 // loop_pre_header
        _
      $region58: #{recurrent_critic_forward.1} parent=55 // loop_header
        %s193 = sphi 0, %s197
        %p194 = scmp.ge.s32.totalorder %s193, 1
        %s198 = sphi %s5, %s5
        %s199 = sphi [#allocation4], [#allocation4]
      $region59: #{recurrent_critic_forward.1} parent=55 // loop_header_branch
        %196 = sbr.rel (%p194) target = $region63
      $region60: #{recurrent_critic_forward.1} parent=55 // loop_body
        _
      $region61: #{recurrent_critic_forward.1} parent=55 // loop_footer
        %s197 = sadd.s32 1, %s193
      $region62: #{recurrent_critic_forward.1} parent=55 // loop_footer_branch
        %192 = sbr.rel target = $region58
      $region63: #{recurrent_critic_forward.1} parent=55 // loop_exit
        _
      %s200 = sshllo.u32 0, %s187
      loop: start=0, step=1, limit=1
      $region64: #{recurrent_critic_forward.1} parent=55 // loop_pre_header
        _
      $region65: #{recurrent_critic_forward.1} parent=55 // loop_header
        %s202 = sphi 0, %s206
        %p203 = scmp.ge.s32.totalorder %s202, 1
        %s207 = sphi %s189, %s189
        %s208 = sphi %s191, %s191
      $region66: #{recurrent_critic_forward.1} parent=55 // loop_header_branch
        %205 = sbr.rel (%p203) target = $region70
      $region67: #{recurrent_critic_forward.1} parent=55 // loop_body
        %v209 = vld [vmem:[%s207] sm:%s200]
        %210 = vst [vmem:[%s208] sm:%s200] %v209
        %v211 = vld [vmem:[%s207 + $0x10] sm:%s200]
        %212 = vst [vmem:[%s208 + $0x4] sm:%s200] %v211
        %v213 = vld [vmem:[%s207 + $0x4] sm:%s200]
        %214 = vst [vmem:[%s208 + $0x8] sm:%s200] %v213
        %v215 = vld [vmem:[%s207 + $0x14] sm:%s200]
        %216 = vst [vmem:[%s208 + $0xc] sm:%s200] %v215
        %v217 = vld [vmem:[%s207 + $0x8] sm:%s200]
        %218 = vst [vmem:[%s208 + $0x10] sm:%s200] %v217
        %v219 = vld [vmem:[%s207 + $0x18] sm:%s200]
        %220 = vst [vmem:[%s208 + $0x14] sm:%s200] %v219
        %v221 = vld [vmem:[%s207 + $0xc] sm:%s200]
        %222 = vst [vmem:[%s208 + $0x18] sm:%s200] %v221
        %v223 = vld [vmem:[%s207 + $0x1c] sm:%s200]
        %224 = vst [vmem:[%s208 + $0x1c] sm:%s200] %v223
        %v225 = vld [vmem:[%s207 + $0x20] sm:%s200]
        %226 = vst [vmem:[%s208 + $0x20] sm:%s200] %v225
        %v227 = vld [vmem:[%s207 + $0x30] sm:%s200]
        %228 = vst [vmem:[%s208 + $0x24] sm:%s200] %v227
        %v229 = vld [vmem:[%s207 + $0x24] sm:%s200]
        %230 = vst [vmem:[%s208 + $0x28] sm:%s200] %v229
        %v231 = vld [vmem:[%s207 + $0x34] sm:%s200]
        %232 = vst [vmem:[%s208 + $0x2c] sm:%s200] %v231
        %v233 = vld [vmem:[%s207 + $0x28] sm:%s200]
        %234 = vst [vmem:[%s208 + $0x30] sm:%s200] %v233
        %v235 = vld [vmem:[%s207 + $0x38] sm:%s200]
        %236 = vst [vmem:[%s208 + $0x34] sm:%s200] %v235
        %v237 = vld [vmem:[%s207 + $0x2c] sm:%s200]
        %238 = vst [vmem:[%s208 + $0x38] sm:%s200] %v237
        %v239 = vld [vmem:[%s207 + $0x3c] sm:%s200]
        %240 = vst [vmem:[%s208 + $0x3c] sm:%s200] %v239
        %v241 = vld [vmem:[%s207 + $0x40] sm:%s200]
        %242 = vst [vmem:[%s208 + $0x40] sm:%s200] %v241
        %v243 = vld [vmem:[%s207 + $0x50] sm:%s200]
        %244 = vst [vmem:[%s208 + $0x44] sm:%s200] %v243
        %v245 = vld [vmem:[%s207 + $0x44] sm:%s200]
        %246 = vst [vmem:[%s208 + $0x48] sm:%s200] %v245
        %v247 = vld [vmem:[%s207 + $0x54] sm:%s200]
        %248 = vst [vmem:[%s208 + $0x4c] sm:%s200] %v247
        %v249 = vld [vmem:[%s207 + $0x48] sm:%s200]
        %250 = vst [vmem:[%s208 + $0x50] sm:%s200] %v249
        %v251 = vld [vmem:[%s207 + $0x58] sm:%s200]
        %252 = vst [vmem:[%s208 + $0x54] sm:%s200] %v251
        %v253 = vld [vmem:[%s207 + $0x4c] sm:%s200]
        %254 = vst [vmem:[%s208 + $0x58] sm:%s200] %v253
        %v255 = vld [vmem:[%s207 + $0x5c] sm:%s200]
        %256 = vst [vmem:[%s208 + $0x5c] sm:%s200] %v255
        %v257 = vld [vmem:[%s207 + $0x60] sm:%s200]
        %258 = vst [vmem:[%s208 + $0x60] sm:%s200] %v257
        %v259 = vld [vmem:[%s207 + $0x70] sm:%s200]
        %260 = vst [vmem:[%s208 + $0x64] sm:%s200] %v259
        %v261 = vld [vmem:[%s207 + $0x64] sm:%s200]
        %262 = vst [vmem:[%s208 + $0x68] sm:%s200] %v261
        %v263 = vld [vmem:[%s207 + $0x74] sm:%s200]
        %264 = vst [vmem:[%s208 + $0x6c] sm:%s200] %v263
        %v265 = vld [vmem:[%s207 + $0x68] sm:%s200]
        %266 = vst [vmem:[%s208 + $0x70] sm:%s200] %v265
        %v267 = vld [vmem:[%s207 + $0x78] sm:%s200]
        %268 = vst [vmem:[%s208 + $0x74] sm:%s200] %v267
        %v269 = vld [vmem:[%s207 + $0x6c] sm:%s200]
        %270 = vst [vmem:[%s208 + $0x78] sm:%s200] %v269
        %v271 = vld [vmem:[%s207 + $0x7c] sm:%s200]
        %272 = vst [vmem:[%s208 + $0x7c] sm:%s200] %v271
        %v273 = vld [vmem:[%s207 + $0x80] sm:%s200]
        %274 = vst [vmem:[%s208 + $0x80] sm:%s200] %v273
        %v275 = vld [vmem:[%s207 + $0x90] sm:%s200]
        %276 = vst [vmem:[%s208 + $0x84] sm:%s200] %v275
        %v277 = vld [vmem:[%s207 + $0x84] sm:%s200]
        %278 = vst [vmem:[%s208 + $0x88] sm:%s200] %v277
        %v279 = vld [vmem:[%s207 + $0x94] sm:%s200]
        %280 = vst [vmem:[%s208 + $0x8c] sm:%s200] %v279
        %v281 = vld [vmem:[%s207 + $0x88] sm:%s200]
        %282 = vst [vmem:[%s208 + $0x90] sm:%s200] %v281
        %v283 = vld [vmem:[%s207 + $0x98] sm:%s200]
        %284 = vst [vmem:[%s208 + $0x94] sm:%s200] %v283
        %v285 = vld [vmem:[%s207 + $0x8c] sm:%s200]
        %286 = vst [vmem:[%s208 + $0x98] sm:%s200] %v285
        %v287 = vld [vmem:[%s207 + $0x9c] sm:%s200]
        %288 = vst [vmem:[%s208 + $0x9c] sm:%s200] %v287
        %v289 = vld [vmem:[%s207 + $0xa0] sm:%s200]
        %290 = vst [vmem:[%s208 + $0xa0] sm:%s200] %v289
        %v291 = vld [vmem:[%s207 + $0xb0] sm:%s200]
        %292 = vst [vmem:[%s208 + $0xa4] sm:%s200] %v291
        %v293 = vld [vmem:[%s207 + $0xa4] sm:%s200]
        %294 = vst [vmem:[%s208 + $0xa8] sm:%s200] %v293
        %v295 = vld [vmem:[%s207 + $0xb4] sm:%s200]
        %296 = vst [vmem:[%s208 + $0xac] sm:%s200] %v295
        %v297 = vld [vmem:[%s207 + $0xa8] sm:%s200]
        %298 = vst [vmem:[%s208 + $0xb0] sm:%s200] %v297
        %v299 = vld [vmem:[%s207 + $0xb8] sm:%s200]
        %300 = vst [vmem:[%s208 + $0xb4] sm:%s200] %v299
        %v301 = vld [vmem:[%s207 + $0xac] sm:%s200]
        %302 = vst [vmem:[%s208 + $0xb8] sm:%s200] %v301
        %v303 = vld [vmem:[%s207 + $0xbc] sm:%s200]
        %304 = vst [vmem:[%s208 + $0xbc] sm:%s200] %v303
        %v305 = vld [vmem:[%s207 + $0xc0] sm:%s200]
        %306 = vst [vmem:[%s208 + $0xc0] sm:%s200] %v305
        %v307 = vld [vmem:[%s207 + $0xd0] sm:%s200]
        %308 = vst [vmem:[%s208 + $0xc4] sm:%s200] %v307
        %v309 = vld [vmem:[%s207 + $0xc4] sm:%s200]
        %310 = vst [vmem:[%s208 + $0xc8] sm:%s200] %v309
        %v311 = vld [vmem:[%s207 + $0xd4] sm:%s200]
        %312 = vst [vmem:[%s208 + $0xcc] sm:%s200] %v311
        %v313 = vld [vmem:[%s207 + $0xc8] sm:%s200]
        %314 = vst [vmem:[%s208 + $0xd0] sm:%s200] %v313
        %v315 = vld [vmem:[%s207 + $0xd8] sm:%s200]
        %316 = vst [vmem:[%s208 + $0xd4] sm:%s200] %v315
        %v317 = vld [vmem:[%s207 + $0xcc] sm:%s200]
        %318 = vst [vmem:[%s208 + $0xd8] sm:%s200] %v317
        %v319 = vld [vmem:[%s207 + $0xdc] sm:%s200]
        %320 = vst [vmem:[%s208 + $0xdc] sm:%s200] %v319
        %v321 = vld [vmem:[%s207 + $0xe0] sm:%s200]
        %322 = vst [vmem:[%s208 + $0xe0] sm:%s200] %v321
        %v323 = vld [vmem:[%s207 + $0xf0] sm:%s200]
        %324 = vst [vmem:[%s208 + $0xe4] sm:%s200] %v323
        %v325 = vld [vmem:[%s207 + $0xe4] sm:%s200]
        %326 = vst [vmem:[%s208 + $0xe8] sm:%s200] %v325
        %v327 = vld [vmem:[%s207 + $0xf4] sm:%s200]
        %328 = vst [vmem:[%s208 + $0xec] sm:%s200] %v327
        %v329 = vld [vmem:[%s207 + $0xe8] sm:%s200]
        %330 = vst [vmem:[%s208 + $0xf0] sm:%s200] %v329
        %v331 = vld [vmem:[%s207 + $0xf8] sm:%s200]
        %332 = vst [vmem:[%s208 + $0xf4] sm:%s200] %v331
        %v333 = vld [vmem:[%s207 + $0xec] sm:%s200]
        %334 = vst [vmem:[%s208 + $0xf8] sm:%s200] %v333
        %v335 = vld [vmem:[%s207 + $0xfc] sm:%s200]
        %336 = vst [vmem:[%s208 + $0xfc] sm:%s200] %v335
      $region68: #{recurrent_critic_forward.1} parent=55 // loop_footer
        %s206 = sadd.s32 1, %s202
      $region69: #{recurrent_critic_forward.1} parent=55 // loop_footer_branch
        %201 = sbr.rel target = $region65
      $region70: #{recurrent_critic_forward.1} parent=55 // loop_exit
        _
    $region56: #{recurrent_critic_forward.1} parent=40 // pred_fallthru
      _
  $region41: #{recurrent_critic_forward.1} parent=0 // pred_fallthru
    _
  // Predicated region
  $region42: #{recurrent_critic_forward.1} parent=0 // pred_check
    %p42 = pneg %p38
  $region43: #{recurrent_critic_forward.1} parent=0 // pred_check_branch
    %44 = sbr.rel (%p42) target = $region45
  $region44: #{recurrent_critic_forward.1} parent=0 // pred_region
    %s45 = sshllo.u32 0, 4
    loop: start=0, step=1, limit=1
    $region46: #{recurrent_critic_forward.1} parent=44 // loop_pre_header
      _
    $region47: #{recurrent_critic_forward.1} parent=44 // loop_header
      %s47 = sphi 0, %s51
      %p48 = scmp.ge.s32.totalorder %s47, 1
      %s52 = sphi %s5, %s5
      %s53 = sphi [#allocation4], [#allocation4]
    $region48: #{recurrent_critic_forward.1} parent=44 // loop_header_branch
      %50 = sbr.rel (%p48) target = $region52
    $region49: #{recurrent_critic_forward.1} parent=44 // loop_body
      %v54 = vld [vmem:[%s52] sm:%s45]
      %55 = vst [vmem:[%s53] sm:%s45] %v54
      %v56 = vld [vmem:[%s52 + $0x10] sm:%s45]
      %57 = vst [vmem:[%s53 + $0x4] sm:%s45] %v56
      %v58 = vld [vmem:[%s52 + $0x4] sm:%s45]
      %59 = vst [vmem:[%s53 + $0x8] sm:%s45] %v58
      %v60 = vld [vmem:[%s52 + $0x14] sm:%s45]
      %61 = vst [vmem:[%s53 + $0xc] sm:%s45] %v60
      %v62 = vld [vmem:[%s52 + $0x8] sm:%s45]
      %63 = vst [vmem:[%s53 + $0x10] sm:%s45] %v62
      %v64 = vld [vmem:[%s52 + $0x18] sm:%s45]
      %65 = vst [vmem:[%s53 + $0x14] sm:%s45] %v64
      %v66 = vld [vmem:[%s52 + $0xc] sm:%s45]
      %67 = vst [vmem:[%s53 + $0x18] sm:%s45] %v66
      %v68 = vld [vmem:[%s52 + $0x1c] sm:%s45]
      %69 = vst [vmem:[%s53 + $0x1c] sm:%s45] %v68
      %v70 = vld [vmem:[%s52 + $0x20] sm:%s45]
      %71 = vst [vmem:[%s53 + $0x20] sm:%s45] %v70
      %v72 = vld [vmem:[%s52 + $0x30] sm:%s45]
      %73 = vst [vmem:[%s53 + $0x24] sm:%s45] %v72
      %v74 = vld [vmem:[%s52 + $0x24] sm:%s45]
      %75 = vst [vmem:[%s53 + $0x28] sm:%s45] %v74
      %v76 = vld [vmem:[%s52 + $0x34] sm:%s45]
      %77 = vst [vmem:[%s53 + $0x2c] sm:%s45] %v76
      %v78 = vld [vmem:[%s52 + $0x28] sm:%s45]
      %79 = vst [vmem:[%s53 + $0x30] sm:%s45] %v78
      %v80 = vld [vmem:[%s52 + $0x38] sm:%s45]
      %81 = vst [vmem:[%s53 + $0x34] sm:%s45] %v80
      %v82 = vld [vmem:[%s52 + $0x2c] sm:%s45]
      %83 = vst [vmem:[%s53 + $0x38] sm:%s45] %v82
      %v84 = vld [vmem:[%s52 + $0x3c] sm:%s45]
      %85 = vst [vmem:[%s53 + $0x3c] sm:%s45] %v84
      %v86 = vld [vmem:[%s52 + $0x40] sm:%s45]
      %87 = vst [vmem:[%s53 + $0x40] sm:%s45] %v86
      %v88 = vld [vmem:[%s52 + $0x50] sm:%s45]
      %89 = vst [vmem:[%s53 + $0x44] sm:%s45] %v88
      %v90 = vld [vmem:[%s52 + $0x44] sm:%s45]
      %91 = vst [vmem:[%s53 + $0x48] sm:%s45] %v90
      %v92 = vld [vmem:[%s52 + $0x54] sm:%s45]
      %93 = vst [vmem:[%s53 + $0x4c] sm:%s45] %v92
      %v94 = vld [vmem:[%s52 + $0x48] sm:%s45]
      %95 = vst [vmem:[%s53 + $0x50] sm:%s45] %v94
      %v96 = vld [vmem:[%s52 + $0x58] sm:%s45]
      %97 = vst [vmem:[%s53 + $0x54] sm:%s45] %v96
      %v98 = vld [vmem:[%s52 + $0x4c] sm:%s45]
      %99 = vst [vmem:[%s53 + $0x58] sm:%s45] %v98
      %v100 = vld [vmem:[%s52 + $0x5c] sm:%s45]
      %101 = vst [vmem:[%s53 + $0x5c] sm:%s45] %v100
      %v102 = vld [vmem:[%s52 + $0x60] sm:%s45]
      %103 = vst [vmem:[%s53 + $0x60] sm:%s45] %v102
      %v104 = vld [vmem:[%s52 + $0x70] sm:%s45]
      %105 = vst [vmem:[%s53 + $0x64] sm:%s45] %v104
      %v106 = vld [vmem:[%s52 + $0x64] sm:%s45]
      %107 = vst [vmem:[%s53 + $0x68] sm:%s45] %v106
      %v108 = vld [vmem:[%s52 + $0x74] sm:%s45]
      %109 = vst [vmem:[%s53 + $0x6c] sm:%s45] %v108
      %v110 = vld [vmem:[%s52 + $0x68] sm:%s45]
      %111 = vst [vmem:[%s53 + $0x70] sm:%s45] %v110
      %v112 = vld [vmem:[%s52 + $0x78] sm:%s45]
      %113 = vst [vmem:[%s53 + $0x74] sm:%s45] %v112
      %v114 = vld [vmem:[%s52 + $0x6c] sm:%s45]
      %115 = vst [vmem:[%s53 + $0x78] sm:%s45] %v114
      %v116 = vld [vmem:[%s52 + $0x7c] sm:%s45]
      %117 = vst [vmem:[%s53 + $0x7c] sm:%s45] %v116
      %v118 = vld [vmem:[%s52 + $0x80] sm:%s45]
      %119 = vst [vmem:[%s53 + $0x80] sm:%s45] %v118
      %v120 = vld [vmem:[%s52 + $0x90] sm:%s45]
      %121 = vst [vmem:[%s53 + $0x84] sm:%s45] %v120
      %v122 = vld [vmem:[%s52 + $0x84] sm:%s45]
      %123 = vst [vmem:[%s53 + $0x88] sm:%s45] %v122
      %v124 = vld [vmem:[%s52 + $0x94] sm:%s45]
      %125 = vst [vmem:[%s53 + $0x8c] sm:%s45] %v124
      %v126 = vld [vmem:[%s52 + $0x88] sm:%s45]
      %127 = vst [vmem:[%s53 + $0x90] sm:%s45] %v126
      %v128 = vld [vmem:[%s52 + $0x98] sm:%s45]
      %129 = vst [vmem:[%s53 + $0x94] sm:%s45] %v128
      %v130 = vld [vmem:[%s52 + $0x8c] sm:%s45]
      %131 = vst [vmem:[%s53 + $0x98] sm:%s45] %v130
      %v132 = vld [vmem:[%s52 + $0x9c] sm:%s45]
      %133 = vst [vmem:[%s53 + $0x9c] sm:%s45] %v132
      %v134 = vld [vmem:[%s52 + $0xa0] sm:%s45]
      %135 = vst [vmem:[%s53 + $0xa0] sm:%s45] %v134
      %v136 = vld [vmem:[%s52 + $0xb0] sm:%s45]
      %137 = vst [vmem:[%s53 + $0xa4] sm:%s45] %v136
      %v138 = vld [vmem:[%s52 + $0xa4] sm:%s45]
      %139 = vst [vmem:[%s53 + $0xa8] sm:%s45] %v138
      %v140 = vld [vmem:[%s52 + $0xb4] sm:%s45]
      %141 = vst [vmem:[%s53 + $0xac] sm:%s45] %v140
      %v142 = vld [vmem:[%s52 + $0xa8] sm:%s45]
      %143 = vst [vmem:[%s53 + $0xb0] sm:%s45] %v142
      %v144 = vld [vmem:[%s52 + $0xb8] sm:%s45]
      %145 = vst [vmem:[%s53 + $0xb4] sm:%s45] %v144
      %v146 = vld [vmem:[%s52 + $0xac] sm:%s45]
      %147 = vst [vmem:[%s53 + $0xb8] sm:%s45] %v146
      %v148 = vld [vmem:[%s52 + $0xbc] sm:%s45]
      %149 = vst [vmem:[%s53 + $0xbc] sm:%s45] %v148
      %v150 = vld [vmem:[%s52 + $0xc0] sm:%s45]
      %151 = vst [vmem:[%s53 + $0xc0] sm:%s45] %v150
      %v152 = vld [vmem:[%s52 + $0xd0] sm:%s45]
      %153 = vst [vmem:[%s53 + $0xc4] sm:%s45] %v152
      %v154 = vld [vmem:[%s52 + $0xc4] sm:%s45]
      %155 = vst [vmem:[%s53 + $0xc8] sm:%s45] %v154
      %v156 = vld [vmem:[%s52 + $0xd4] sm:%s45]
      %157 = vst [vmem:[%s53 + $0xcc] sm:%s45] %v156
      %v158 = vld [vmem:[%s52 + $0xc8] sm:%s45]
      %159 = vst [vmem:[%s53 + $0xd0] sm:%s45] %v158
      %v160 = vld [vmem:[%s52 + $0xd8] sm:%s45]
      %161 = vst [vmem:[%s53 + $0xd4] sm:%s45] %v160
      %v162 = vld [vmem:[%s52 + $0xcc] sm:%s45]
      %163 = vst [vmem:[%s53 + $0xd8] sm:%s45] %v162
      %v164 = vld [vmem:[%s52 + $0xdc] sm:%s45]
      %165 = vst [vmem:[%s53 + $0xdc] sm:%s45] %v164
      %v166 = vld [vmem:[%s52 + $0xe0] sm:%s45]
      %167 = vst [vmem:[%s53 + $0xe0] sm:%s45] %v166
      %v168 = vld [vmem:[%s52 + $0xf0] sm:%s45]
      %169 = vst [vmem:[%s53 + $0xe4] sm:%s45] %v168
      %v170 = vld [vmem:[%s52 + $0xe4] sm:%s45]
      %171 = vst [vmem:[%s53 + $0xe8] sm:%s45] %v170
      %v172 = vld [vmem:[%s52 + $0xf4] sm:%s45]
      %173 = vst [vmem:[%s53 + $0xec] sm:%s45] %v172
      %v174 = vld [vmem:[%s52 + $0xe8] sm:%s45]
      %175 = vst [vmem:[%s53 + $0xf0] sm:%s45] %v174
      %v176 = vld [vmem:[%s52 + $0xf8] sm:%s45]
      %177 = vst [vmem:[%s53 + $0xf4] sm:%s45] %v176
      %v178 = vld [vmem:[%s52 + $0xec] sm:%s45]
      %179 = vst [vmem:[%s53 + $0xf8] sm:%s45] %v178
      %v180 = vld [vmem:[%s52 + $0xfc] sm:%s45]
      %181 = vst [vmem:[%s53 + $0xfc] sm:%s45] %v180
    $region50: #{recurrent_critic_forward.1} parent=44 // loop_footer
      %s51 = sadd.s32 1, %s47
    $region51: #{recurrent_critic_forward.1} parent=44 // loop_footer_branch
      %46 = sbr.rel target = $region47
    $region52: #{recurrent_critic_forward.1} parent=44 // loop_exit
      _
  $region45: #{recurrent_critic_forward.1} parent=0 // pred_fallthru
    _
  // Predicated region
  $region71: #{recurrent_critic_forward.1} parent=0 // pred_check
    _
  $region72: #{recurrent_critic_forward.1} parent=0 // pred_check_branch
    %339 = sbr.rel (0) target = $region74
  $region73: #{recurrent_critic_forward.1} parent=0 // pred_region
    %340 = vsyncadd [#allocation6], 4096
  $region74: #{recurrent_critic_forward.1} parent=0 // pred_fallthru
    _
  %s341 = scalar_lea.sflag [#allocation6], 1
  %p343 = scmp.lt.u32.totalorder 4, 8
  %p344 = pneg %p343
  // Predicated region
  $region75: #{recurrent_critic_forward.1} parent=0 // pred_check
    _
  $region76: #{recurrent_critic_forward.1} parent=0 // pred_check_branch
    %346 = sbr.rel (%p343) target = $region78
  $region77: #{recurrent_critic_forward.1} parent=0 // pred_region
    %s487 = sand.u32 4, 7
    %p488 = scmp.eq.s32.totalorder %s487, 0
    %p489 = pneg %p488
    // Predicated region
    $region90: #{recurrent_critic_forward.1} parent=77 // pred_check
      _
    $region91: #{recurrent_critic_forward.1} parent=77 // pred_check_branch
      %491 = sbr.rel (%p488) target = $region93
    $region92: #{recurrent_critic_forward.1} parent=77 // pred_region
      %s492 = sand.u32 4, 7
      %s493 = ssub.s32 4, %s492
      %s494 = scalar_lea.vmem %s6, %s493
      %s495 = ssub.s32 4, %s492
      %s496 = scalar_lea.vmem [#allocation5], %s495
      loop: start=0, step=1, limit=1
      $region94: #{recurrent_critic_forward.1} parent=92 // loop_pre_header
        _
      $region95: #{recurrent_critic_forward.1} parent=92 // loop_header
        %s498 = sphi 0, %s502
        %p499 = scmp.ge.s32.totalorder %s498, 1
        %s503 = sphi %s6, %s6
        %s504 = sphi [#allocation5], [#allocation5]
      $region96: #{recurrent_critic_forward.1} parent=92 // loop_header_branch
        %501 = sbr.rel (%p499) target = $region100
      $region97: #{recurrent_critic_forward.1} parent=92 // loop_body
        _
      $region98: #{recurrent_critic_forward.1} parent=92 // loop_footer
        %s502 = sadd.s32 1, %s498
      $region99: #{recurrent_critic_forward.1} parent=92 // loop_footer_branch
        %497 = sbr.rel target = $region95
      $region100: #{recurrent_critic_forward.1} parent=92 // loop_exit
        _
      %s505 = sshllo.u32 0, %s492
      loop: start=0, step=1, limit=1
      $region101: #{recurrent_critic_forward.1} parent=92 // loop_pre_header
        _
      $region102: #{recurrent_critic_forward.1} parent=92 // loop_header
        %s507 = sphi 0, %s511
        %p508 = scmp.ge.s32.totalorder %s507, 1
        %s512 = sphi %s494, %s494
        %s513 = sphi %s496, %s496
      $region103: #{recurrent_critic_forward.1} parent=92 // loop_header_branch
        %510 = sbr.rel (%p508) target = $region107
      $region104: #{recurrent_critic_forward.1} parent=92 // loop_body
        %v514 = vld [vmem:[%s512] sm:%s505]
        %515 = vst [vmem:[%s513] sm:%s505] %v514
        %v516 = vld [vmem:[%s512 + $0x10] sm:%s505]
        %517 = vst [vmem:[%s513 + $0x4] sm:%s505] %v516
        %v518 = vld [vmem:[%s512 + $0x4] sm:%s505]
        %519 = vst [vmem:[%s513 + $0x8] sm:%s505] %v518
        %v520 = vld [vmem:[%s512 + $0x14] sm:%s505]
        %521 = vst [vmem:[%s513 + $0xc] sm:%s505] %v520
        %v522 = vld [vmem:[%s512 + $0x8] sm:%s505]
        %523 = vst [vmem:[%s513 + $0x10] sm:%s505] %v522
        %v524 = vld [vmem:[%s512 + $0x18] sm:%s505]
        %525 = vst [vmem:[%s513 + $0x14] sm:%s505] %v524
        %v526 = vld [vmem:[%s512 + $0xc] sm:%s505]
        %527 = vst [vmem:[%s513 + $0x18] sm:%s505] %v526
        %v528 = vld [vmem:[%s512 + $0x1c] sm:%s505]
        %529 = vst [vmem:[%s513 + $0x1c] sm:%s505] %v528
        %v530 = vld [vmem:[%s512 + $0x20] sm:%s505]
        %531 = vst [vmem:[%s513 + $0x20] sm:%s505] %v530
        %v532 = vld [vmem:[%s512 + $0x30] sm:%s505]
        %533 = vst [vmem:[%s513 + $0x24] sm:%s505] %v532
        %v534 = vld [vmem:[%s512 + $0x24] sm:%s505]
        %535 = vst [vmem:[%s513 + $0x28] sm:%s505] %v534
        %v536 = vld [vmem:[%s512 + $0x34] sm:%s505]
        %537 = vst [vmem:[%s513 + $0x2c] sm:%s505] %v536
        %v538 = vld [vmem:[%s512 + $0x28] sm:%s505]
        %539 = vst [vmem:[%s513 + $0x30] sm:%s505] %v538
        %v540 = vld [vmem:[%s512 + $0x38] sm:%s505]
        %541 = vst [vmem:[%s513 + $0x34] sm:%s505] %v540
        %v542 = vld [vmem:[%s512 + $0x2c] sm:%s505]
        %543 = vst [vmem:[%s513 + $0x38] sm:%s505] %v542
        %v544 = vld [vmem:[%s512 + $0x3c] sm:%s505]
        %545 = vst [vmem:[%s513 + $0x3c] sm:%s505] %v544
        %v546 = vld [vmem:[%s512 + $0x40] sm:%s505]
        %547 = vst [vmem:[%s513 + $0x40] sm:%s505] %v546
        %v548 = vld [vmem:[%s512 + $0x50] sm:%s505]
        %549 = vst [vmem:[%s513 + $0x44] sm:%s505] %v548
        %v550 = vld [vmem:[%s512 + $0x44] sm:%s505]
        %551 = vst [vmem:[%s513 + $0x48] sm:%s505] %v550
        %v552 = vld [vmem:[%s512 + $0x54] sm:%s505]
        %553 = vst [vmem:[%s513 + $0x4c] sm:%s505] %v552
        %v554 = vld [vmem:[%s512 + $0x48] sm:%s505]
        %555 = vst [vmem:[%s513 + $0x50] sm:%s505] %v554
        %v556 = vld [vmem:[%s512 + $0x58] sm:%s505]
        %557 = vst [vmem:[%s513 + $0x54] sm:%s505] %v556
        %v558 = vld [vmem:[%s512 + $0x4c] sm:%s505]
        %559 = vst [vmem:[%s513 + $0x58] sm:%s505] %v558
        %v560 = vld [vmem:[%s512 + $0x5c] sm:%s505]
        %561 = vst [vmem:[%s513 + $0x5c] sm:%s505] %v560
        %v562 = vld [vmem:[%s512 + $0x60] sm:%s505]
        %563 = vst [vmem:[%s513 + $0x60] sm:%s505] %v562
        %v564 = vld [vmem:[%s512 + $0x70] sm:%s505]
        %565 = vst [vmem:[%s513 + $0x64] sm:%s505] %v564
        %v566 = vld [vmem:[%s512 + $0x64] sm:%s505]
        %567 = vst [vmem:[%s513 + $0x68] sm:%s505] %v566
        %v568 = vld [vmem:[%s512 + $0x74] sm:%s505]
        %569 = vst [vmem:[%s513 + $0x6c] sm:%s505] %v568
        %v570 = vld [vmem:[%s512 + $0x68] sm:%s505]
        %571 = vst [vmem:[%s513 + $0x70] sm:%s505] %v570
        %v572 = vld [vmem:[%s512 + $0x78] sm:%s505]
        %573 = vst [vmem:[%s513 + $0x74] sm:%s505] %v572
        %v574 = vld [vmem:[%s512 + $0x6c] sm:%s505]
        %575 = vst [vmem:[%s513 + $0x78] sm:%s505] %v574
        %v576 = vld [vmem:[%s512 + $0x7c] sm:%s505]
        %577 = vst [vmem:[%s513 + $0x7c] sm:%s505] %v576
        %v578 = vld [vmem:[%s512 + $0x80] sm:%s505]
        %579 = vst [vmem:[%s513 + $0x80] sm:%s505] %v578
        %v580 = vld [vmem:[%s512 + $0x90] sm:%s505]
        %581 = vst [vmem:[%s513 + $0x84] sm:%s505] %v580
        %v582 = vld [vmem:[%s512 + $0x84] sm:%s505]
        %583 = vst [vmem:[%s513 + $0x88] sm:%s505] %v582
        %v584 = vld [vmem:[%s512 + $0x94] sm:%s505]
        %585 = vst [vmem:[%s513 + $0x8c] sm:%s505] %v584
        %v586 = vld [vmem:[%s512 + $0x88] sm:%s505]
        %587 = vst [vmem:[%s513 + $0x90] sm:%s505] %v586
        %v588 = vld [vmem:[%s512 + $0x98] sm:%s505]
        %589 = vst [vmem:[%s513 + $0x94] sm:%s505] %v588
        %v590 = vld [vmem:[%s512 + $0x8c] sm:%s505]
        %591 = vst [vmem:[%s513 + $0x98] sm:%s505] %v590
        %v592 = vld [vmem:[%s512 + $0x9c] sm:%s505]
        %593 = vst [vmem:[%s513 + $0x9c] sm:%s505] %v592
        %v594 = vld [vmem:[%s512 + $0xa0] sm:%s505]
        %595 = vst [vmem:[%s513 + $0xa0] sm:%s505] %v594
        %v596 = vld [vmem:[%s512 + $0xb0] sm:%s505]
        %597 = vst [vmem:[%s513 + $0xa4] sm:%s505] %v596
        %v598 = vld [vmem:[%s512 + $0xa4] sm:%s505]
        %599 = vst [vmem:[%s513 + $0xa8] sm:%s505] %v598
        %v600 = vld [vmem:[%s512 + $0xb4] sm:%s505]
        %601 = vst [vmem:[%s513 + $0xac] sm:%s505] %v600
        %v602 = vld [vmem:[%s512 + $0xa8] sm:%s505]
        %603 = vst [vmem:[%s513 + $0xb0] sm:%s505] %v602
        %v604 = vld [vmem:[%s512 + $0xb8] sm:%s505]
        %605 = vst [vmem:[%s513 + $0xb4] sm:%s505] %v604
        %v606 = vld [vmem:[%s512 + $0xac] sm:%s505]
        %607 = vst [vmem:[%s513 + $0xb8] sm:%s505] %v606
        %v608 = vld [vmem:[%s512 + $0xbc] sm:%s505]
        %609 = vst [vmem:[%s513 + $0xbc] sm:%s505] %v608
        %v610 = vld [vmem:[%s512 + $0xc0] sm:%s505]
        %611 = vst [vmem:[%s513 + $0xc0] sm:%s505] %v610
        %v612 = vld [vmem:[%s512 + $0xd0] sm:%s505]
        %613 = vst [vmem:[%s513 + $0xc4] sm:%s505] %v612
        %v614 = vld [vmem:[%s512 + $0xc4] sm:%s505]
        %615 = vst [vmem:[%s513 + $0xc8] sm:%s505] %v614
        %v616 = vld [vmem:[%s512 + $0xd4] sm:%s505]
        %617 = vst [vmem:[%s513 + $0xcc] sm:%s505] %v616
        %v618 = vld [vmem:[%s512 + $0xc8] sm:%s505]
        %619 = vst [vmem:[%s513 + $0xd0] sm:%s505] %v618
        %v620 = vld [vmem:[%s512 + $0xd8] sm:%s505]
        %621 = vst [vmem:[%s513 + $0xd4] sm:%s505] %v620
        %v622 = vld [vmem:[%s512 + $0xcc] sm:%s505]
        %623 = vst [vmem:[%s513 + $0xd8] sm:%s505] %v622
        %v624 = vld [vmem:[%s512 + $0xdc] sm:%s505]
        %625 = vst [vmem:[%s513 + $0xdc] sm:%s505] %v624
        %v626 = vld [vmem:[%s512 + $0xe0] sm:%s505]
        %627 = vst [vmem:[%s513 + $0xe0] sm:%s505] %v626
        %v628 = vld [vmem:[%s512 + $0xf0] sm:%s505]
        %629 = vst [vmem:[%s513 + $0xe4] sm:%s505] %v628
        %v630 = vld [vmem:[%s512 + $0xe4] sm:%s505]
        %631 = vst [vmem:[%s513 + $0xe8] sm:%s505] %v630
        %v632 = vld [vmem:[%s512 + $0xf4] sm:%s505]
        %633 = vst [vmem:[%s513 + $0xec] sm:%s505] %v632
        %v634 = vld [vmem:[%s512 + $0xe8] sm:%s505]
        %635 = vst [vmem:[%s513 + $0xf0] sm:%s505] %v634
        %v636 = vld [vmem:[%s512 + $0xf8] sm:%s505]
        %637 = vst [vmem:[%s513 + $0xf4] sm:%s505] %v636
        %v638 = vld [vmem:[%s512 + $0xec] sm:%s505]
        %639 = vst [vmem:[%s513 + $0xf8] sm:%s505] %v638
        %v640 = vld [vmem:[%s512 + $0xfc] sm:%s505]
        %641 = vst [vmem:[%s513 + $0xfc] sm:%s505] %v640
      $region105: #{recurrent_critic_forward.1} parent=92 // loop_footer
        %s511 = sadd.s32 1, %s507
      $region106: #{recurrent_critic_forward.1} parent=92 // loop_footer_branch
        %506 = sbr.rel target = $region102
      $region107: #{recurrent_critic_forward.1} parent=92 // loop_exit
        _
    $region93: #{recurrent_critic_forward.1} parent=77 // pred_fallthru
      _
  $region78: #{recurrent_critic_forward.1} parent=0 // pred_fallthru
    _
  // Predicated region
  $region79: #{recurrent_critic_forward.1} parent=0 // pred_check
    %p347 = pneg %p343
  $region80: #{recurrent_critic_forward.1} parent=0 // pred_check_branch
    %349 = sbr.rel (%p347) target = $region82
  $region81: #{recurrent_critic_forward.1} parent=0 // pred_region
    %s350 = sshllo.u32 0, 4
    loop: start=0, step=1, limit=1
    $region83: #{recurrent_critic_forward.1} parent=81 // loop_pre_header
      _
    $region84: #{recurrent_critic_forward.1} parent=81 // loop_header
      %s352 = sphi 0, %s356
      %p353 = scmp.ge.s32.totalorder %s352, 1
      %s357 = sphi %s6, %s6
      %s358 = sphi [#allocation5], [#allocation5]
    $region85: #{recurrent_critic_forward.1} parent=81 // loop_header_branch
      %355 = sbr.rel (%p353) target = $region89
    $region86: #{recurrent_critic_forward.1} parent=81 // loop_body
      %v359 = vld [vmem:[%s357] sm:%s350]
      %360 = vst [vmem:[%s358] sm:%s350] %v359
      %v361 = vld [vmem:[%s357 + $0x10] sm:%s350]
      %362 = vst [vmem:[%s358 + $0x4] sm:%s350] %v361
      %v363 = vld [vmem:[%s357 + $0x4] sm:%s350]
      %364 = vst [vmem:[%s358 + $0x8] sm:%s350] %v363
      %v365 = vld [vmem:[%s357 + $0x14] sm:%s350]
      %366 = vst [vmem:[%s358 + $0xc] sm:%s350] %v365
      %v367 = vld [vmem:[%s357 + $0x8] sm:%s350]
      %368 = vst [vmem:[%s358 + $0x10] sm:%s350] %v367
      %v369 = vld [vmem:[%s357 + $0x18] sm:%s350]
      %370 = vst [vmem:[%s358 + $0x14] sm:%s350] %v369
      %v371 = vld [vmem:[%s357 + $0xc] sm:%s350]
      %372 = vst [vmem:[%s358 + $0x18] sm:%s350] %v371
      %v373 = vld [vmem:[%s357 + $0x1c] sm:%s350]
      %374 = vst [vmem:[%s358 + $0x1c] sm:%s350] %v373
      %v375 = vld [vmem:[%s357 + $0x20] sm:%s350]
      %376 = vst [vmem:[%s358 + $0x20] sm:%s350] %v375
      %v377 = vld [vmem:[%s357 + $0x30] sm:%s350]
      %378 = vst [vmem:[%s358 + $0x24] sm:%s350] %v377
      %v379 = vld [vmem:[%s357 + $0x24] sm:%s350]
      %380 = vst [vmem:[%s358 + $0x28] sm:%s350] %v379
      %v381 = vld [vmem:[%s357 + $0x34] sm:%s350]
      %382 = vst [vmem:[%s358 + $0x2c] sm:%s350] %v381
      %v383 = vld [vmem:[%s357 + $0x28] sm:%s350]
      %384 = vst [vmem:[%s358 + $0x30] sm:%s350] %v383
      %v385 = vld [vmem:[%s357 + $0x38] sm:%s350]
      %386 = vst [vmem:[%s358 + $0x34] sm:%s350] %v385
      %v387 = vld [vmem:[%s357 + $0x2c] sm:%s350]
      %388 = vst [vmem:[%s358 + $0x38] sm:%s350] %v387
      %v389 = vld [vmem:[%s357 + $0x3c] sm:%s350]
      %390 = vst [vmem:[%s358 + $0x3c] sm:%s350] %v389
      %v391 = vld [vmem:[%s357 + $0x40] sm:%s350]
      %392 = vst [vmem:[%s358 + $0x40] sm:%s350] %v391
      %v393 = vld [vmem:[%s357 + $0x50] sm:%s350]
      %394 = vst [vmem:[%s358 + $0x44] sm:%s350] %v393
      %v395 = vld [vmem:[%s357 + $0x44] sm:%s350]
      %396 = vst [vmem:[%s358 + $0x48] sm:%s350] %v395
      %v397 = vld [vmem:[%s357 + $0x54] sm:%s350]
      %398 = vst [vmem:[%s358 + $0x4c] sm:%s350] %v397
      %v399 = vld [vmem:[%s357 + $0x48] sm:%s350]
      %400 = vst [vmem:[%s358 + $0x50] sm:%s350] %v399
      %v401 = vld [vmem:[%s357 + $0x58] sm:%s350]
      %402 = vst [vmem:[%s358 + $0x54] sm:%s350] %v401
      %v403 = vld [vmem:[%s357 + $0x4c] sm:%s350]
      %404 = vst [vmem:[%s358 + $0x58] sm:%s350] %v403
      %v405 = vld [vmem:[%s357 + $0x5c] sm:%s350]
      %406 = vst [vmem:[%s358 + $0x5c] sm:%s350] %v405
      %v407 = vld [vmem:[%s357 + $0x60] sm:%s350]
      %408 = vst [vmem:[%s358 + $0x60] sm:%s350] %v407
      %v409 = vld [vmem:[%s357 + $0x70] sm:%s350]
      %410 = vst [vmem:[%s358 + $0x64] sm:%s350] %v409
      %v411 = vld [vmem:[%s357 + $0x64] sm:%s350]
      %412 = vst [vmem:[%s358 + $0x68] sm:%s350] %v411
      %v413 = vld [vmem:[%s357 + $0x74] sm:%s350]
      %414 = vst [vmem:[%s358 + $0x6c] sm:%s350] %v413
      %v415 = vld [vmem:[%s357 + $0x68] sm:%s350]
      %416 = vst [vmem:[%s358 + $0x70] sm:%s350] %v415
      %v417 = vld [vmem:[%s357 + $0x78] sm:%s350]
      %418 = vst [vmem:[%s358 + $0x74] sm:%s350] %v417
      %v419 = vld [vmem:[%s357 + $0x6c] sm:%s350]
      %420 = vst [vmem:[%s358 + $0x78] sm:%s350] %v419
      %v421 = vld [vmem:[%s357 + $0x7c] sm:%s350]
      %422 = vst [vmem:[%s358 + $0x7c] sm:%s350] %v421
      %v423 = vld [vmem:[%s357 + $0x80] sm:%s350]
      %424 = vst [vmem:[%s358 + $0x80] sm:%s350] %v423
      %v425 = vld [vmem:[%s357 + $0x90] sm:%s350]
      %426 = vst [vmem:[%s358 + $0x84] sm:%s350] %v425
      %v427 = vld [vmem:[%s357 + $0x84] sm:%s350]
      %428 = vst [vmem:[%s358 + $0x88] sm:%s350] %v427
      %v429 = vld [vmem:[%s357 + $0x94] sm:%s350]
      %430 = vst [vmem:[%s358 + $0x8c] sm:%s350] %v429
      %v431 = vld [vmem:[%s357 + $0x88] sm:%s350]
      %432 = vst [vmem:[%s358 + $0x90] sm:%s350] %v431
      %v433 = vld [vmem:[%s357 + $0x98] sm:%s350]
      %434 = vst [vmem:[%s358 + $0x94] sm:%s350] %v433
      %v435 = vld [vmem:[%s357 + $0x8c] sm:%s350]
      %436 = vst [vmem:[%s358 + $0x98] sm:%s350] %v435
      %v437 = vld [vmem:[%s357 + $0x9c] sm:%s350]
      %438 = vst [vmem:[%s358 + $0x9c] sm:%s350] %v437
      %v439 = vld [vmem:[%s357 + $0xa0] sm:%s350]
      %440 = vst [vmem:[%s358 + $0xa0] sm:%s350] %v439
      %v441 = vld [vmem:[%s357 + $0xb0] sm:%s350]
      %442 = vst [vmem:[%s358 + $0xa4] sm:%s350] %v441
      %v443 = vld [vmem:[%s357 + $0xa4] sm:%s350]
      %444 = vst [vmem:[%s358 + $0xa8] sm:%s350] %v443
      %v445 = vld [vmem:[%s357 + $0xb4] sm:%s350]
      %446 = vst [vmem:[%s358 + $0xac] sm:%s350] %v445
      %v447 = vld [vmem:[%s357 + $0xa8] sm:%s350]
      %448 = vst [vmem:[%s358 + $0xb0] sm:%s350] %v447
      %v449 = vld [vmem:[%s357 + $0xb8] sm:%s350]
      %450 = vst [vmem:[%s358 + $0xb4] sm:%s350] %v449
      %v451 = vld [vmem:[%s357 + $0xac] sm:%s350]
      %452 = vst [vmem:[%s358 + $0xb8] sm:%s350] %v451
      %v453 = vld [vmem:[%s357 + $0xbc] sm:%s350]
      %454 = vst [vmem:[%s358 + $0xbc] sm:%s350] %v453
      %v455 = vld [vmem:[%s357 + $0xc0] sm:%s350]
      %456 = vst [vmem:[%s358 + $0xc0] sm:%s350] %v455
      %v457 = vld [vmem:[%s357 + $0xd0] sm:%s350]
      %458 = vst [vmem:[%s358 + $0xc4] sm:%s350] %v457
      %v459 = vld [vmem:[%s357 + $0xc4] sm:%s350]
      %460 = vst [vmem:[%s358 + $0xc8] sm:%s350] %v459
      %v461 = vld [vmem:[%s357 + $0xd4] sm:%s350]
      %462 = vst [vmem:[%s358 + $0xcc] sm:%s350] %v461
      %v463 = vld [vmem:[%s357 + $0xc8] sm:%s350]
      %464 = vst [vmem:[%s358 + $0xd0] sm:%s350] %v463
      %v465 = vld [vmem:[%s357 + $0xd8] sm:%s350]
      %466 = vst [vmem:[%s358 + $0xd4] sm:%s350] %v465
      %v467 = vld [vmem:[%s357 + $0xcc] sm:%s350]
      %468 = vst [vmem:[%s358 + $0xd8] sm:%s350] %v467
      %v469 = vld [vmem:[%s357 + $0xdc] sm:%s350]
      %470 = vst [vmem:[%s358 + $0xdc] sm:%s350] %v469
      %v471 = vld [vmem:[%s357 + $0xe0] sm:%s350]
      %472 = vst [vmem:[%s358 + $0xe0] sm:%s350] %v471
      %v473 = vld [vmem:[%s357 + $0xf0] sm:%s350]
      %474 = vst [vmem:[%s358 + $0xe4] sm:%s350] %v473
      %v475 = vld [vmem:[%s357 + $0xe4] sm:%s350]
      %476 = vst [vmem:[%s358 + $0xe8] sm:%s350] %v475
      %v477 = vld [vmem:[%s357 + $0xf4] sm:%s350]
      %478 = vst [vmem:[%s358 + $0xec] sm:%s350] %v477
      %v479 = vld [vmem:[%s357 + $0xe8] sm:%s350]
      %480 = vst [vmem:[%s358 + $0xf0] sm:%s350] %v479
      %v481 = vld [vmem:[%s357 + $0xf8] sm:%s350]
      %482 = vst [vmem:[%s358 + $0xf4] sm:%s350] %v481
      %v483 = vld [vmem:[%s357 + $0xec] sm:%s350]
      %484 = vst [vmem:[%s358 + $0xf8] sm:%s350] %v483
      %v485 = vld [vmem:[%s357 + $0xfc] sm:%s350]
      %486 = vst [vmem:[%s358 + $0xfc] sm:%s350] %v485
    $region87: #{recurrent_critic_forward.1} parent=81 // loop_footer
      %s356 = sadd.s32 1, %s352
    $region88: #{recurrent_critic_forward.1} parent=81 // loop_footer_branch
      %351 = sbr.rel target = $region84
    $region89: #{recurrent_critic_forward.1} parent=81 // loop_exit
      _
  $region82: #{recurrent_critic_forward.1} parent=0 // pred_fallthru
    _
  // Predicated region
  $region108: #{recurrent_critic_forward.1} parent=0 // pred_check
    _
  $region109: #{recurrent_critic_forward.1} parent=0 // pred_check_branch
    %644 = sbr.rel (0) target = $region111
  $region110: #{recurrent_critic_forward.1} parent=0 // pred_region
    %645 = vsyncadd %s341, 4096
  $region111: #{recurrent_critic_forward.1} parent=0 // pred_fallthru
    _
  %v646 = vld [vmem:[%s0] sm:$0xf]
  %v647 = vld [vmem:[%s0 + $0x4] sm:$0xf]
  %v648 = vld [vmem:[%s0 + $0x8] sm:$0xf]
  %v649 = vld [vmem:[%s0 + $0xc] sm:$0xf]
  %v650 = vld [vmem:[%s0 + $0x10] sm:$0xf]
  %v651 = vld [vmem:[%s0 + $0x14] sm:$0xf]
  %v652 = vld [vmem:[%s0 + $0x18] sm:$0xf]
  %v653 = vld [vmem:[%s0 + $0x1c] sm:$0xf]
  %v654 = vld [vmem:[%s2] sm:$0xff]
  %v655 = vld [vmem:[%s2 + $0x8] sm:$0xff]
  %v656 = vld [vmem:[%s2 + $0x10] sm:$0xff]
  %v657 = vld [vmem:[%s2 + $0x18] sm:$0xff]
  %v658 = vld [vmem:[%s2 + $0x20] sm:$0xff]
  %v659 = vld [vmem:[%s2 + $0x28] sm:$0xff]
  %v660 = vld [vmem:[%s2 + $0x30] sm:$0xff]
  %v661 = vld [vmem:[%s2 + $0x38] sm:$0xff]
  %v662 = vld [vmem:[%s2 + $0x40] sm:$0xff]
  %v663 = vld [vmem:[%s2 + $0x48] sm:$0xff]
  %v664 = vld [vmem:[%s2 + $0x50] sm:$0xff]
  %v665 = vld [vmem:[%s2 + $0x58] sm:$0xff]
  %v666 = vld [vmem:[%s2 + $0x60] sm:$0xff]
  %v667 = vld [vmem:[%s2 + $0x68] sm:$0xff]
  %v668 = vld [vmem:[%s2 + $0x70] sm:$0xff]
  %v669 = vld [vmem:[%s2 + $0x78] sm:$0xff]
  %v670 = vld [vmem:[%s2 + $0x80] sm:$0xff]
  %v671 = vld [vmem:[%s2 + $0x88] sm:$0xff]
  %v672 = vld [vmem:[%s2 + $0x90] sm:$0xff]
  %v673 = vld [vmem:[%s2 + $0x98] sm:$0xff]
  %v674 = vld [vmem:[%s2 + $0xa0] sm:$0xff]
  %v675 = vld [vmem:[%s2 + $0xa8] sm:$0xff]
  %v676 = vld [vmem:[%s2 + $0xb0] sm:$0xff]
  %v677 = vld [vmem:[%s2 + $0xb8] sm:$0xff]
  %v678 = vld [vmem:[%s2 + $0xc0] sm:$0xff]
  %v679 = vld [vmem:[%s2 + $0xc8] sm:$0xff]
  %v680 = vld [vmem:[%s2 + $0xd0] sm:$0xff]
  %v681 = vld [vmem:[%s2 + $0xd8] sm:$0xff]
  %v682 = vld [vmem:[%s2 + $0xe0] sm:$0xff]
  %v683 = vld [vmem:[%s2 + $0xe8] sm:$0xff]
  %v684 = vld [vmem:[%s2 + $0xf0] sm:$0xff]
  %v685 = vld [vmem:[%s2 + $0xf8] sm:$0xff]
  %v686 = vld [vmem:[%s3] sm:$0xf]
  %v688 = vlaneseq
  %v689 = vshrl.u32 %v688, 7
  %v690 = vsub.s32 0, %v689
  %v691 = vrot.slane %v686, %v690
  %v692 = vlaneseq
  %v693 = vshrl.u32 %v692, 7
  %v694 = vsub.s32 1, %v693
  %v695 = vrot.slane %v686, %v694
  %v696 = vlaneseq
  %v697 = vshrl.u32 %v696, 7
  %v698 = vsub.s32 2, %v697
  %v699 = vrot.slane %v686, %v698
  %v700 = vlaneseq
  %v701 = vshrl.u32 %v700, 7
  %v702 = vsub.s32 3, %v701
  %v703 = vrot.slane %v686, %v702
  %v716 = vunpack.c.l.b16 %v646
  %v717 = vunpack.c.l.b16 %v647
  %v718 = vunpack.c.l.b16 %v648
  %v719 = vunpack.c.l.b16 %v649
  %v720 = vunpack.c.l.b16 %v650
  %v721 = vunpack.c.l.b16 %v651
  %v722 = vunpack.c.l.b16 %v652
  %v723 = vunpack.c.l.b16 %v653
  %v724 = vpack.c.b16 %v717, %v716
  %v725 = vpack.c.b16 %v719, %v718
  %v726 = vpack.c.b16 %v721, %v720
  %v727 = vpack.c.b16 %v723, %v722
  %v764 = vunpack.c.l.b16 %v654
  %v765 = vunpack.c.h.b16 %v654
  %v766 = vunpack.c.l.b16 %v655
  %v767 = vunpack.c.h.b16 %v655
  %v768 = vunpack.c.l.b16 %v656
  %v769 = vunpack.c.h.b16 %v656
  %v770 = vunpack.c.l.b16 %v657
  %v771 = vunpack.c.h.b16 %v657
  %v772 = vunpack.c.l.b16 %v658
  %v773 = vunpack.c.h.b16 %v658
  %v774 = vunpack.c.l.b16 %v659
  %v775 = vunpack.c.h.b16 %v659
  %v776 = vunpack.c.l.b16 %v660
  %v777 = vunpack.c.h.b16 %v660
  %v778 = vunpack.c.l.b16 %v661
  %v779 = vunpack.c.h.b16 %v661
  %v780 = vunpack.c.l.b16 %v662
  %v781 = vunpack.c.h.b16 %v662
  %v782 = vunpack.c.l.b16 %v663
  %v783 = vunpack.c.h.b16 %v663
  %v784 = vunpack.c.l.b16 %v664
  %v785 = vunpack.c.h.b16 %v664
  %v786 = vunpack.c.l.b16 %v665
  %v787 = vunpack.c.h.b16 %v665
  %v788 = vunpack.c.l.b16 %v666
  %v789 = vunpack.c.h.b16 %v666
  %v790 = vunpack.c.l.b16 %v667
  %v791 = vunpack.c.h.b16 %v667
  %v792 = vunpack.c.l.b16 %v668
  %v793 = vunpack.c.h.b16 %v668
  %v794 = vunpack.c.l.b16 %v669
  %v795 = vunpack.c.h.b16 %v669
  %v796 = vunpack.c.l.b16 %v670
  %v797 = vunpack.c.h.b16 %v670
  %v798 = vunpack.c.l.b16 %v671
  %v799 = vunpack.c.h.b16 %v671
  %v800 = vunpack.c.l.b16 %v672
  %v801 = vunpack.c.h.b16 %v672
  %v802 = vunpack.c.l.b16 %v673
  %v803 = vunpack.c.h.b16 %v673
  %v804 = vunpack.c.l.b16 %v674
  %v805 = vunpack.c.h.b16 %v674
  %v806 = vunpack.c.l.b16 %v675
  %v807 = vunpack.c.h.b16 %v675
  %v808 = vunpack.c.l.b16 %v676
  %v809 = vunpack.c.h.b16 %v676
  %v810 = vunpack.c.l.b16 %v677
  %v811 = vunpack.c.h.b16 %v677
  %v812 = vunpack.c.l.b16 %v678
  %v813 = vunpack.c.h.b16 %v678
  %v814 = vunpack.c.l.b16 %v679
  %v815 = vunpack.c.h.b16 %v679
  %v816 = vunpack.c.l.b16 %v680
  %v817 = vunpack.c.h.b16 %v680
  %v818 = vunpack.c.l.b16 %v681
  %v819 = vunpack.c.h.b16 %v681
  %v820 = vunpack.c.l.b16 %v682
  %v821 = vunpack.c.h.b16 %v682
  %v822 = vunpack.c.l.b16 %v683
  %v823 = vunpack.c.h.b16 %v683
  %v824 = vunpack.c.l.b16 %v684
  %v825 = vunpack.c.h.b16 %v684
  %v826 = vunpack.c.l.b16 %v685
  %v827 = vunpack.c.h.b16 %v685
  %v828 = vpack.c.b16 %v768, %v764
  %v829 = vpack.c.b16 %v769, %v765
  %v830 = vpack.c.b16 %v770, %v766
  %v831 = vpack.c.b16 %v771, %v767
  %v832 = vpack.c.b16 %v776, %v772
  %v833 = vpack.c.b16 %v777, %v773
  %v834 = vpack.c.b16 %v778, %v774
  %v835 = vpack.c.b16 %v779, %v775
  %v836 = vpack.c.b16 %v784, %v780
  %v837 = vpack.c.b16 %v785, %v781
  %v838 = vpack.c.b16 %v786, %v782
  %v839 = vpack.c.b16 %v787, %v783
  %v840 = vpack.c.b16 %v792, %v788
  %v841 = vpack.c.b16 %v793, %v789
  %v842 = vpack.c.b16 %v794, %v790
  %v843 = vpack.c.b16 %v795, %v791
  %v844 = vpack.c.b16 %v800, %v796
  %v845 = vpack.c.b16 %v801, %v797
  %v846 = vpack.c.b16 %v802, %v798
  %v847 = vpack.c.b16 %v803, %v799
  %v848 = vpack.c.b16 %v808, %v804
  %v849 = vpack.c.b16 %v809, %v805
  %v850 = vpack.c.b16 %v810, %v806
  %v851 = vpack.c.b16 %v811, %v807
  %v852 = vpack.c.b16 %v816, %v812
  %v853 = vpack.c.b16 %v817, %v813
  %v854 = vpack.c.b16 %v818, %v814
  %v855 = vpack.c.b16 %v819, %v815
  %v856 = vpack.c.b16 %v824, %v820
  %v857 = vpack.c.b16 %v825, %v821
  %v858 = vpack.c.b16 %v826, %v822
  %v859 = vpack.c.b16 %v827, %v823
  %892 = vmatprep.subr.bf16.mxu0 %v829
  %893 = vmatpush1.bf16.msra.mxu0 %v828
  %894 = vmatprep.subr.bf16.mxu0 %v833
  %895 = vmatpush1.bf16.msra.mxu0 %v832
  %896 = vmatprep.subr.bf16.mxu0 %v837
  %897 = vmatpush1.bf16.msra.mxu0 %v836
  %898 = vmatprep.subr.bf16.mxu0 %v841
  %899 = vmatpush1.bf16.msra.mxu0 %v840
  %900 = vmatprep.subr.bf16.mxu0 %v845
  %901 = vmatpush1.bf16.msra.mxu0 %v844
  %902 = vmatprep.subr.bf16.mxu0 %v849
  %903 = vmatpush1.bf16.msra.mxu0 %v848
  %904 = vmatprep.subr.bf16.mxu0 %v853
  %905 = vmatpush1.bf16.msra.mxu0 %v852
  %906 = vmatprep.subr.bf16.mxu0 %v857
  %907 = vmatpush1.bf16.msra.mxu0 %v856
  %908 = vmatprep.subr.bf16.mxu0 0
  %909 = vmatpush1.bf16.msra.mxu0 0
  %910 = vmatprep.subr.bf16.mxu0 0
  %911 = vmatpush1.bf16.msra.mxu0 0
  %912 = vmatprep.subr.bf16.mxu0 0
  %913 = vmatpush1.bf16.msra.mxu0 0
  %914 = vmatprep.subr.bf16.mxu0 0
  %915 = vmatpush1.bf16.msra.mxu0 0
  %916 = vmatprep.subr.bf16.mxu0 0
  %917 = vmatpush1.bf16.msra.mxu0 0
  %918 = vmatprep.subr.bf16.mxu0 0
  %919 = vmatpush1.bf16.msra.mxu0 0
  %920 = vmatprep.subr.bf16.mxu0 0
  %921 = vmatpush1.bf16.msra.mxu0 0
  %922 = vmatprep.subr.bf16.mxu0 0
  %923 = vmatpush1.bf16.msra.mxu0 0
  %924 = vmatprep.mubr.bf16.mxu0 0
  %925 = vmatmul.mubr.bf16.gmra.mrb[0].mxu0 %v724
  %v926 = vpop.f32.mrb[0].mxu0
  %v927 = vadd.f32 %v691, %v926
  %v928 = vpop.f32.mrb[0].mxu0
  %v929 = vadd.f32 %v695, %v928
  %v930 = vpop.f32.mrb[0].mxu0
  %v931 = vadd.f32 %v691, %v930
  %v932 = vpop.f32.mrb[0].mxu0
  %v933 = vadd.f32 %v695, %v932
  %934 = vmatprep.mubr.bf16.mxu0 0
  %935 = vmatmul.mubr.bf16.gmra.mrb[0].mxu0 %v725
  %v936 = vpop.f32.mrb[0].mxu0
  %v937 = vadd.f32 %v691, %v936
  %v938 = vpop.f32.mrb[0].mxu0
  %v939 = vadd.f32 %v695, %v938
  %v940 = vpop.f32.mrb[0].mxu0
  %v941 = vadd.f32 %v691, %v940
  %v942 = vpop.f32.mrb[0].mxu0
  %v943 = vadd.f32 %v695, %v942
  %944 = vmatprep.mubr.bf16.mxu0 0
  %945 = vmatmul.mubr.bf16.gmra.mrb[0].mxu0 %v726
  %v946 = vpop.f32.mrb[0].mxu0
  %v947 = vadd.f32 %v691, %v946
  %v948 = vpop.f32.mrb[0].mxu0
  %v949 = vadd.f32 %v695, %v948
  %v950 = vpop.f32.mrb[0].mxu0
  %v951 = vadd.f32 %v691, %v950
  %v952 = vpop.f32.mrb[0].mxu0
  %v953 = vadd.f32 %v695, %v952
  %954 = vmatprep.mubr.bf16.mxu0 0
  %955 = vmatmul.mubr.bf16.gmra.mrb[0].mxu0 %v727
  %v956 = vpop.f32.mrb[0].mxu0
  %v957 = vadd.f32 %v691, %v956
  %v958 = vpop.f32.mrb[0].mxu0
  %v959 = vadd.f32 %v695, %v958
  %v960 = vpop.f32.mrb[0].mxu0
  %v961 = vadd.f32 %v691, %v960
  %v962 = vpop.f32.mrb[0].mxu0
  %v963 = vadd.f32 %v695, %v962
  %964 = vdwg.mxu0
  %965 = vmatprep.subr.bf16.mxu0 %v831
  %966 = vmatpush1.bf16.msra.mxu0 %v830
  %967 = vmatprep.subr.bf16.mxu0 %v835
  %968 = vmatpush1.bf16.msra.mxu0 %v834
  %969 = vmatprep.subr.bf16.mxu0 %v839
  %970 = vmatpush1.bf16.msra.mxu0 %v838
  %971 = vmatprep.subr.bf16.mxu0 %v843
  %972 = vmatpush1.bf16.msra.mxu0 %v842
  %973 = vmatprep.subr.bf16.mxu0 %v847
  %974 = vmatpush1.bf16.msra.mxu0 %v846
  %975 = vmatprep.subr.bf16.mxu0 %v851
  %976 = vmatpush1.bf16.msra.mxu0 %v850
  %977 = vmatprep.subr.bf16.mxu0 %v855
  %978 = vmatpush1.bf16.msra.mxu0 %v854
  %979 = vmatprep.subr.bf16.mxu0 %v859
  %980 = vmatpush1.bf16.msra.mxu0 %v858
  %981 = vmatprep.subr.bf16.mxu0 0
  %982 = vmatpush1.bf16.msra.mxu0 0
  %983 = vmatprep.subr.bf16.mxu0 0
  %984 = vmatpush1.bf16.msra.mxu0 0
  %985 = vmatprep.subr.bf16.mxu0 0
  %986 = vmatpush1.bf16.msra.mxu0 0
  %987 = vmatprep.subr.bf16.mxu0 0
  %988 = vmatpush1.bf16.msra.mxu0 0
  %989 = vmatprep.subr.bf16.mxu0 0
  %990 = vmatpush1.bf16.msra.mxu0 0
  %991 = vmatprep.subr.bf16.mxu0 0
  %992 = vmatpush1.bf16.msra.mxu0 0
  %993 = vmatprep.subr.bf16.mxu0 0
  %994 = vmatpush1.bf16.msra.mxu0 0
  %995 = vmatprep.subr.bf16.mxu0 0
  %996 = vmatpush1.bf16.msra.mxu0 0
  %997 = vmatprep.mubr.bf16.mxu0 0
  %998 = vmatmul.mubr.bf16.gmra.mrb[0].mxu0 %v724
  %v999 = vpop.f32.mrb[0].mxu0
  %v1000 = vadd.f32 %v699, %v999
  %v1001 = vpop.f32.mrb[0].mxu0
  %v1002 = vadd.f32 %v703, %v1001
  %v1003 = vpop.f32.mrb[0].mxu0
  %v1004 = vadd.f32 %v699, %v1003
  %v1005 = vpop.f32.mrb[0].mxu0
  %v1006 = vadd.f32 %v703, %v1005
  %1007 = vmatprep.mubr.bf16.mxu0 0
  %1008 = vmatmul.mubr.bf16.gmra.mrb[0].mxu0 %v725
  %v1009 = vpop.f32.mrb[0].mxu0
  %v1010 = vadd.f32 %v699, %v1009
  %v1011 = vpop.f32.mrb[0].mxu0
  %v1012 = vadd.f32 %v703, %v1011
  %v1013 = vpop.f32.mrb[0].mxu0
  %v1014 = vadd.f32 %v699, %v1013
  %v1015 = vpop.f32.mrb[0].mxu0
  %v1016 = vadd.f32 %v703, %v1015
  %1017 = vmatprep.mubr.bf16.mxu0 0
  %1018 = vmatmul.mubr.bf16.gmra.mrb[0].mxu0 %v726
  %v1019 = vpop.f32.mrb[0].mxu0
  %v1020 = vadd.f32 %v699, %v1019
  %v1021 = vpop.f32.mrb[0].mxu0
  %v1022 = vadd.f32 %v703, %v1021
  %v1023 = vpop.f32.mrb[0].mxu0
  %v1024 = vadd.f32 %v699, %v1023
  %v1025 = vpop.f32.mrb[0].mxu0
  %v1026 = vadd.f32 %v703, %v1025
  %1027 = vmatprep.mubr.bf16.mxu0 0
  %1028 = vmatmul.mubr.bf16.gmra.mrb[0].mxu0 %v727
  %v1029 = vpop.f32.mrb[0].mxu0
  %v1030 = vadd.f32 %v699, %v1029
  %v1031 = vpop.f32.mrb[0].mxu0
  %v1032 = vadd.f32 %v703, %v1031
  %v1033 = vpop.f32.mrb[0].mxu0
  %v1034 = vadd.f32 %v699, %v1033
  %v1035 = vpop.f32.mrb[0].mxu0
  %v1036 = vadd.f32 %v703, %v1035
  %1037 = vdwg.mxu0
  %1038 = vst [vmem:[#allocation2] sm:$0xff] %v927
  %1039 = vst [vmem:[#allocation2 + $0x8] sm:$0xff] %v929
  %1040 = vst [vmem:[#allocation2 + $0x10] sm:$0xff] %v1000
  %1041 = vst [vmem:[#allocation2 + $0x18] sm:$0xff] %v1002
  %1042 = vst [vmem:[#allocation2 + $0x20] sm:$0xff] %v931
  %1043 = vst [vmem:[#allocation2 + $0x28] sm:$0xff] %v933
  %1044 = vst [vmem:[#allocation2 + $0x30] sm:$0xff] %v1004
  %1045 = vst [vmem:[#allocation2 + $0x38] sm:$0xff] %v1006
  %1046 = vst [vmem:[#allocation2 + $0x40] sm:$0xff] %v937
  %1047 = vst [vmem:[#allocation2 + $0x48] sm:$0xff] %v939
  %1048 = vst [vmem:[#allocation2 + $0x50] sm:$0xff] %v1010
  %1049 = vst [vmem:[#allocation2 + $0x58] sm:$0xff] %v1012
  %1050 = vst [vmem:[#allocation2 + $0x60] sm:$0xff] %v941
  %1051 = vst [vmem:[#allocation2 + $0x68] sm:$0xff] %v943
  %1052 = vst [vmem:[#allocation2 + $0x70] sm:$0xff] %v1014
  %1053 = vst [vmem:[#allocation2 + $0x78] sm:$0xff] %v1016
  %1054 = vst [vmem:[#allocation2 + $0x80] sm:$0xff] %v947
  %1055 = vst [vmem:[#allocation2 + $0x88] sm:$0xff] %v949
  %1056 = vst [vmem:[#allocation2 + $0x90] sm:$0xff] %v1020
  %1057 = vst [vmem:[#allocation2 + $0x98] sm:$0xff] %v1022
  %1058 = vst [vmem:[#allocation2 + $0xa0] sm:$0xff] %v951
  %1059 = vst [vmem:[#allocation2 + $0xa8] sm:$0xff] %v953
  %1060 = vst [vmem:[#allocation2 + $0xb0] sm:$0xff] %v1024
  %1061 = vst [vmem:[#allocation2 + $0xb8] sm:$0xff] %v1026
  %1062 = vst [vmem:[#allocation2 + $0xc0] sm:$0xff] %v957
  %1063 = vst [vmem:[#allocation2 + $0xc8] sm:$0xff] %v959
  %1064 = vst [vmem:[#allocation2 + $0xd0] sm:$0xff] %v1030
  %1065 = vst [vmem:[#allocation2 + $0xd8] sm:$0xff] %v1032
  %1066 = vst [vmem:[#allocation2 + $0xe0] sm:$0xff] %v961
  %1067 = vst [vmem:[#allocation2 + $0xe8] sm:$0xff] %v963
  %1068 = vst [vmem:[#allocation2 + $0xf0] sm:$0xff] %v1034
  %1069 = vst [vmem:[#allocation2 + $0xf8] sm:$0xff] %v1036
  %s1070 = smul.u32 0, 4
  %s1071 = smul.addr %s1070, 8
  %s1072 = scalar_lea.vmem [#allocation2], %s1071
  %v1073 = vld [vmem:[%s1072] sm:$0xff]
  %v1074 = vld [vmem:[%s1072 + $0x8] sm:$0xff]
  %v1075 = vld [vmem:[%s1072 + $0x10] sm:$0xff]
  %v1076 = vld [vmem:[%s1072 + $0x18] sm:$0xff]
  %v1077 = vld [vmem:[%s4] sm:$0xff]
  %v1078 = vld [vmem:[%s4 + $0x8] sm:$0xff]
  %v1079 = vld [vmem:[%s4 + $0x10] sm:$0xff]
  %v1080 = vld [vmem:[%s4 + $0x18] sm:$0xff]
  %v1081 = vld [vmem:[%s4 + $0x20] sm:$0xff]
  %v1082 = vld [vmem:[%s4 + $0x28] sm:$0xff]
  %v1083 = vld [vmem:[%s4 + $0x30] sm:$0xff]
  %v1084 = vld [vmem:[%s4 + $0x38] sm:$0xff]
  %v1085 = vld [vmem:[%s4 + $0x40] sm:$0xff]
  %v1086 = vld [vmem:[%s4 + $0x48] sm:$0xff]
  %v1087 = vld [vmem:[%s4 + $0x50] sm:$0xff]
  %v1088 = vld [vmem:[%s4 + $0x58] sm:$0xff]
  %v1089 = vld [vmem:[%s4 + $0x60] sm:$0xff]
  %v1090 = vld [vmem:[%s4 + $0x68] sm:$0xff]
  %v1091 = vld [vmem:[%s4 + $0x70] sm:$0xff]
  %v1092 = vld [vmem:[%s4 + $0x78] sm:$0xff]
  %v1093 = vld [vmem:[%s4 + $0x80] sm:$0xff]
  %v1094 = vld [vmem:[%s4 + $0x88] sm:$0xff]
  %v1095 = vld [vmem:[%s4 + $0x90] sm:$0xff]
  %v1096 = vld [vmem:[%s4 + $0x98] sm:$0xff]
  %v1097 = vld [vmem:[%s4 + $0xa0] sm:$0xff]
  %v1098 = vld [vmem:[%s4 + $0xa8] sm:$0xff]
  %v1099 = vld [vmem:[%s4 + $0xb0] sm:$0xff]
  %v1100 = vld [vmem:[%s4 + $0xb8] sm:$0xff]
  %v1101 = vld [vmem:[%s4 + $0xc0] sm:$0xff]
  %v1102 = vld [vmem:[%s4 + $0xc8] sm:$0xff]
  %v1103 = vld [vmem:[%s4 + $0xd0] sm:$0xff]
  %v1104 = vld [vmem:[%s4 + $0xd8] sm:$0xff]
  %v1105 = vld [vmem:[%s4 + $0xe0] sm:$0xff]
  %v1106 = vld [vmem:[%s4 + $0xe8] sm:$0xff]
  %v1107 = vld [vmem:[%s4 + $0xf0] sm:$0xff]
  %v1108 = vld [vmem:[%s4 + $0xf8] sm:$0xff]
  %v1141 = vunpack.c.l.b16 %v1077
  %v1142 = vunpack.c.h.b16 %v1077
  %v1143 = vunpack.c.l.b16 %v1078
  %v1144 = vunpack.c.h.b16 %v1078
  %v1145 = vunpack.c.l.b16 %v1079
  %v1146 = vunpack.c.h.b16 %v1079
  %v1147 = vunpack.c.l.b16 %v1080
  %v1148 = vunpack.c.h.b16 %v1080
  %v1149 = vunpack.c.l.b16 %v1081
  %v1150 = vunpack.c.h.b16 %v1081
  %v1151 = vunpack.c.l.b16 %v1082
  %v1152 = vunpack.c.h.b16 %v1082
  %v1153 = vunpack.c.l.b16 %v1083
  %v1154 = vunpack.c.h.b16 %v1083
  %v1155 = vunpack.c.l.b16 %v1084
  %v1156 = vunpack.c.h.b16 %v1084
  %v1157 = vunpack.c.l.b16 %v1085
  %v1158 = vunpack.c.h.b16 %v1085
  %v1159 = vunpack.c.l.b16 %v1086
  %v1160 = vunpack.c.h.b16 %v1086
  %v1161 = vunpack.c.l.b16 %v1087
  %v1162 = vunpack.c.h.b16 %v1087
  %v1163 = vunpack.c.l.b16 %v1088
  %v1164 = vunpack.c.h.b16 %v1088
  %v1165 = vunpack.c.l.b16 %v1089
  %v1166 = vunpack.c.h.b16 %v1089
  %v1167 = vunpack.c.l.b16 %v1090
  %v1168 = vunpack.c.h.b16 %v1090
  %v1169 = vunpack.c.l.b16 %v1091
  %v1170 = vunpack.c.h.b16 %v1091
  %v1171 = vunpack.c.l.b16 %v1092
  %v1172 = vunpack.c.h.b16 %v1092
  %v1173 = vunpack.c.l.b16 %v1093
  %v1174 = vunpack.c.h.b16 %v1093
  %v1175 = vunpack.c.l.b16 %v1094
  %v1176 = vunpack.c.h.b16 %v1094
  %v1177 = vunpack.c.l.b16 %v1095
  %v1178 = vunpack.c.h.b16 %v1095
  %v1179 = vunpack.c.l.b16 %v1096
  %v1180 = vunpack.c.h.b16 %v1096
  %v1181 = vunpack.c.l.b16 %v1097
  %v1182 = vunpack.c.h.b16 %v1097
  %v1183 = vunpack.c.l.b16 %v1098
  %v1184 = vunpack.c.h.b16 %v1098
  %v1185 = vunpack.c.l.b16 %v1099
  %v1186 = vunpack.c.h.b16 %v1099
  %v1187 = vunpack.c.l.b16 %v1100
  %v1188 = vunpack.c.h.b16 %v1100
  %v1189 = vunpack.c.l.b16 %v1101
  %v1190 = vunpack.c.h.b16 %v1101
  %v1191 = vunpack.c.l.b16 %v1102
  %v1192 = vunpack.c.h.b16 %v1102
  %v1193 = vunpack.c.l.b16 %v1103
  %v1194 = vunpack.c.h.b16 %v1103
  %v1195 = vunpack.c.l.b16 %v1104
  %v1196 = vunpack.c.h.b16 %v1104
  %v1197 = vunpack.c.l.b16 %v1105
  %v1198 = vunpack.c.h.b16 %v1105
  %v1199 = vunpack.c.l.b16 %v1106
  %v1200 = vunpack.c.h.b16 %v1106
  %v1201 = vunpack.c.l.b16 %v1107
  %v1202 = vunpack.c.h.b16 %v1107
  %v1203 = vunpack.c.l.b16 %v1108
  %v1204 = vunpack.c.h.b16 %v1108
  %v1205 = vpack.c.b16 %v1145, %v1141
  %v1206 = vpack.c.b16 %v1146, %v1142
  %v1207 = vpack.c.b16 %v1147, %v1143
  %v1208 = vpack.c.b16 %v1148, %v1144
  %v1209 = vpack.c.b16 %v1153, %v1149
  %v1210 = vpack.c.b16 %v1154, %v1150
  %v1211 = vpack.c.b16 %v1155, %v1151
  %v1212 = vpack.c.b16 %v1156, %v1152
  %v1213 = vpack.c.b16 %v1161, %v1157
  %v1214 = vpack.c.b16 %v1162, %v1158
  %v1215 = vpack.c.b16 %v1163, %v1159
  %v1216 = vpack.c.b16 %v1164, %v1160
  %v1217 = vpack.c.b16 %v1169, %v1165
  %v1218 = vpack.c.b16 %v1170, %v1166
  %v1219 = vpack.c.b16 %v1171, %v1167
  %v1220 = vpack.c.b16 %v1172, %v1168
  %v1221 = vpack.c.b16 %v1177, %v1173
  %v1222 = vpack.c.b16 %v1178, %v1174
  %v1223 = vpack.c.b16 %v1179, %v1175
  %v1224 = vpack.c.b16 %v1180, %v1176
  %v1225 = vpack.c.b16 %v1185, %v1181
  %v1226 = vpack.c.b16 %v1186, %v1182
  %v1227 = vpack.c.b16 %v1187, %v1183
  %v1228 = vpack.c.b16 %v1188, %v1184
  %v1229 = vpack.c.b16 %v1193, %v1189
  %v1230 = vpack.c.b16 %v1194, %v1190
  %v1231 = vpack.c.b16 %v1195, %v1191
  %v1232 = vpack.c.b16 %v1196, %v1192
  %v1233 = vpack.c.b16 %v1201, %v1197
  %v1234 = vpack.c.b16 %v1202, %v1198
  %v1235 = vpack.c.b16 %v1203, %v1199
  %v1236 = vpack.c.b16 %v1204, %v1200
  %1269 = vmatprep.subr.bf16.mxu0 %v1206
  %1270 = vmatpush1.bf16.msra.mxu0 %v1205
  %1271 = vmatprep.subr.bf16.mxu0 %v1210
  %1272 = vmatpush1.bf16.msra.mxu0 %v1209
  %1273 = vmatprep.subr.bf16.mxu0 %v1214
  %1274 = vmatpush1.bf16.msra.mxu0 %v1213
  %1275 = vmatprep.subr.bf16.mxu0 %v1218
  %1276 = vmatpush1.bf16.msra.mxu0 %v1217
  %1277 = vmatprep.subr.bf16.mxu0 %v1222
  %1278 = vmatpush1.bf16.msra.mxu0 %v1221
  %1279 = vmatprep.subr.bf16.mxu0 %v1226
  %1280 = vmatpush1.bf16.msra.mxu0 %v1225
  %1281 = vmatprep.subr.bf16.mxu0 %v1230
  %1282 = vmatpush1.bf16.msra.mxu0 %v1229
  %1283 = vmatprep.subr.bf16.mxu0 %v1234
  %1284 = vmatpush1.bf16.msra.mxu0 %v1233
  %1285 = vmatprep.subr.bf16.mxu0 0
  %1286 = vmatpush1.bf16.msra.mxu0 0
  %1287 = vmatprep.subr.bf16.mxu0 0
  %1288 = vmatpush1.bf16.msra.mxu0 0
  %1289 = vmatprep.subr.bf16.mxu0 0
  %1290 = vmatpush1.bf16.msra.mxu0 0
  %1291 = vmatprep.subr.bf16.mxu0 0
  %1292 = vmatpush1.bf16.msra.mxu0 0
  %1293 = vmatprep.subr.bf16.mxu0 0
  %1294 = vmatpush1.bf16.msra.mxu0 0
  %1295 = vmatprep.subr.bf16.mxu0 0
  %1296 = vmatpush1.bf16.msra.mxu0 0
  %1297 = vmatprep.subr.bf16.mxu0 0
  %1298 = vmatpush1.bf16.msra.mxu0 0
  %1299 = vmatprep.subr.bf16.mxu0 0
  %1300 = vmatpush1.bf16.msra.mxu0 0
  %1301 = vmatprep.mubr.bf16.mxu0 0
  %1302 = vmatmul.mubr.bf16.gmra.mrb[0].mxu0 0
  %v1303 = vpop.f32.mrb[0].mxu0
  %v1304 = vadd.f32 0.0, %v1303
  %v1305 = vpop.f32.mrb[0].mxu0
  %v1306 = vadd.f32 0.0, %v1305
  %v1307 = vpop.f32.mrb[0].mxu0
  %v1308 = vpop.f32.mrb[0].mxu0
  %1309 = vdwg.mxu0
  %1310 = vmatprep.subr.bf16.mxu0 %v1208
  %1311 = vmatpush1.bf16.msra.mxu0 %v1207
  %1312 = vmatprep.subr.bf16.mxu0 %v1212
  %1313 = vmatpush1.bf16.msra.mxu0 %v1211
  %1314 = vmatprep.subr.bf16.mxu0 %v1216
  %1315 = vmatpush1.bf16.msra.mxu0 %v1215
  %1316 = vmatprep.subr.bf16.mxu0 %v1220
  %1317 = vmatpush1.bf16.msra.mxu0 %v1219
  %1318 = vmatprep.subr.bf16.mxu0 %v1224
  %1319 = vmatpush1.bf16.msra.mxu0 %v1223
  %1320 = vmatprep.subr.bf16.mxu0 %v1228
  %1321 = vmatpush1.bf16.msra.mxu0 %v1227
  %1322 = vmatprep.subr.bf16.mxu0 %v1232
  %1323 = vmatpush1.bf16.msra.mxu0 %v1231
  %1324 = vmatprep.subr.bf16.mxu0 %v1236
  %1325 = vmatpush1.bf16.msra.mxu0 %v1235
  %1326 = vmatprep.subr.bf16.mxu0 0
  %1327 = vmatpush1.bf16.msra.mxu0 0
  %1328 = vmatprep.subr.bf16.mxu0 0
  %1329 = vmatpush1.bf16.msra.mxu0 0
  %1330 = vmatprep.subr.bf16.mxu0 0
  %1331 = vmatpush1.bf16.msra.mxu0 0
  %1332 = vmatprep.subr.bf16.mxu0 0
  %1333 = vmatpush1.bf16.msra.mxu0 0
  %1334 = vmatprep.subr.bf16.mxu0 0
  %1335 = vmatpush1.bf16.msra.mxu0 0
  %1336 = vmatprep.subr.bf16.mxu0 0
  %1337 = vmatpush1.bf16.msra.mxu0 0
  %1338 = vmatprep.subr.bf16.mxu0 0
  %1339 = vmatpush1.bf16.msra.mxu0 0
  %1340 = vmatprep.subr.bf16.mxu0 0
  %1341 = vmatpush1.bf16.msra.mxu0 0
  %1342 = vmatprep.mubr.bf16.mxu0 0
  %1343 = vmatmul.mubr.bf16.gmra.mrb[0].mxu0 0
  %v1344 = vpop.f32.mrb[0].mxu0
  %v1345 = vadd.f32 0.0, %v1344
  %v1346 = vpop.f32.mrb[0].mxu0
  %v1347 = vadd.f32 0.0, %v1346
  %v1348 = vpop.f32.mrb[0].mxu0
  %v1349 = vpop.f32.mrb[0].mxu0
  %1350 = vdwg.mxu0
  %v1351 = vadd.f32 %v1073, %v1304
  %v1352 = vadd.f32 %v1074, %v1306
  %v1353 = vadd.f32 %v1075, %v1345
  %v1354 = vadd.f32 %v1076, %v1347
  %v1355 = vxor.u32 %v1351, 2147483648
  %v1356 = vmul.f32 %v1355, 1.442695
  %v1357 = vpow.pop %v1356
  %v1358 = vadd.f32 %v1357, 1.0
  %v1359 = vrcp.pop %v1358
  %v1360 = vmul.f32 1.0, %v1359
  %v1361 = vxor.u32 %v1352, 2147483648
  %v1362 = vmul.f32 %v1361, 1.442695
  %v1363 = vpow.pop %v1362
  %v1364 = vadd.f32 %v1363, 1.0
  %v1365 = vrcp.pop %v1364
  %v1366 = vmul.f32 1.0, %v1365
  %v1367 = vtanh.pop %v1353
  %v1368 = vxor.u32 %v1354, 2147483648
  %v1369 = vmul.f32 %v1368, 1.442695
  %v1370 = vpow.pop %v1369
  %v1371 = vadd.f32 %v1370, 1.0
  %v1372 = vrcp.pop %v1371
  %v1373 = vmul.f32 1.0, %v1372
  %v1374 = vmul.f32 %v1366, 0.0
  %v1375 = vmul.f32 %v1360, %v1367
  %v1376 = vadd.f32 %v1374, %v1375
  %v1377 = vtanh.pop %v1376
  %v1378 = vmul.f32 %v1373, %v1377
  %1379 = vst [vmem:[#allocation3] sm:$0xff] %v1378
  %s1380 = smul.u32 1, 4
  %s1381 = smul.addr %s1380, 8
  %s1382 = scalar_lea.vmem [#allocation2], %s1381
  %v1383 = vld [vmem:[%s1382] sm:$0xff]
  %v1384 = vld [vmem:[%s1382 + $0x8] sm:$0xff]
  %v1385 = vld [vmem:[%s1382 + $0x10] sm:$0xff]
  %v1386 = vld [vmem:[%s1382 + $0x18] sm:$0xff]
  %v1387 = vpack.c.bf16 %v1378, %v1378
  %v1388 = vld [vmem:[%s4] sm:$0xff]
  %v1389 = vld [vmem:[%s4 + $0x8] sm:$0xff]
  %v1390 = vld [vmem:[%s4 + $0x10] sm:$0xff]
  %v1391 = vld [vmem:[%s4 + $0x18] sm:$0xff]
  %v1392 = vld [vmem:[%s4 + $0x20] sm:$0xff]
  %v1393 = vld [vmem:[%s4 + $0x28] sm:$0xff]
  %v1394 = vld [vmem:[%s4 + $0x30] sm:$0xff]
  %v1395 = vld [vmem:[%s4 + $0x38] sm:$0xff]
  %v1396 = vld [vmem:[%s4 + $0x40] sm:$0xff]
  %v1397 = vld [vmem:[%s4 + $0x48] sm:$0xff]
  %v1398 = vld [vmem:[%s4 + $0x50] sm:$0xff]
  %v1399 = vld [vmem:[%s4 + $0x58] sm:$0xff]
  %v1400 = vld [vmem:[%s4 + $0x60] sm:$0xff]
  %v1401 = vld [vmem:[%s4 + $0x68] sm:$0xff]
  %v1402 = vld [vmem:[%s4 + $0x70] sm:$0xff]
  %v1403 = vld [vmem:[%s4 + $0x78] sm:$0xff]
  %v1404 = vld [vmem:[%s4 + $0x80] sm:$0xff]
  %v1405 = vld [vmem:[%s4 + $0x88] sm:$0xff]
  %v1406 = vld [vmem:[%s4 + $0x90] sm:$0xff]
  %v1407 = vld [vmem:[%s4 + $0x98] sm:$0xff]
  %v1408 = vld [vmem:[%s4 + $0xa0] sm:$0xff]
  %v1409 = vld [vmem:[%s4 + $0xa8] sm:$0xff]
  %v1410 = vld [vmem:[%s4 + $0xb0] sm:$0xff]
  %v1411 = vld [vmem:[%s4 + $0xb8] sm:$0xff]
  %v1412 = vld [vmem:[%s4 + $0xc0] sm:$0xff]
  %v1413 = vld [vmem:[%s4 + $0xc8] sm:$0xff]
  %v1414 = vld [vmem:[%s4 + $0xd0] sm:$0xff]
  %v1415 = vld [vmem:[%s4 + $0xd8] sm:$0xff]
  %v1416 = vld [vmem:[%s4 + $0xe0] sm:$0xff]
  %v1417 = vld [vmem:[%s4 + $0xe8] sm:$0xff]
  %v1418 = vld [vmem:[%s4 + $0xf0] sm:$0xff]
  %v1419 = vld [vmem:[%s4 + $0xf8] sm:$0xff]
  %v1452 = vunpack.c.l.b16 %v1388
  %v1453 = vunpack.c.h.b16 %v1388
  %v1454 = vunpack.c.l.b16 %v1389
  %v1455 = vunpack.c.h.b16 %v1389
  %v1456 = vunpack.c.l.b16 %v1390
  %v1457 = vunpack.c.h.b16 %v1390
  %v1458 = vunpack.c.l.b16 %v1391
  %v1459 = vunpack.c.h.b16 %v1391
  %v1460 = vunpack.c.l.b16 %v1392
  %v1461 = vunpack.c.h.b16 %v1392
  %v1462 = vunpack.c.l.b16 %v1393
  %v1463 = vunpack.c.h.b16 %v1393
  %v1464 = vunpack.c.l.b16 %v1394
  %v1465 = vunpack.c.h.b16 %v1394
  %v1466 = vunpack.c.l.b16 %v1395
  %v1467 = vunpack.c.h.b16 %v1395
  %v1468 = vunpack.c.l.b16 %v1396
  %v1469 = vunpack.c.h.b16 %v1396
  %v1470 = vunpack.c.l.b16 %v1397
  %v1471 = vunpack.c.h.b16 %v1397
  %v1472 = vunpack.c.l.b16 %v1398
  %v1473 = vunpack.c.h.b16 %v1398
  %v1474 = vunpack.c.l.b16 %v1399
  %v1475 = vunpack.c.h.b16 %v1399
  %v1476 = vunpack.c.l.b16 %v1400
  %v1477 = vunpack.c.h.b16 %v1400
  %v1478 = vunpack.c.l.b16 %v1401
  %v1479 = vunpack.c.h.b16 %v1401
  %v1480 = vunpack.c.l.b16 %v1402
  %v1481 = vunpack.c.h.b16 %v1402
  %v1482 = vunpack.c.l.b16 %v1403
  %v1483 = vunpack.c.h.b16 %v1403
  %v1484 = vunpack.c.l.b16 %v1404
  %v1485 = vunpack.c.h.b16 %v1404
  %v1486 = vunpack.c.l.b16 %v1405
  %v1487 = vunpack.c.h.b16 %v1405
  %v1488 = vunpack.c.l.b16 %v1406
  %v1489 = vunpack.c.h.b16 %v1406
  %v1490 = vunpack.c.l.b16 %v1407
  %v1491 = vunpack.c.h.b16 %v1407
  %v1492 = vunpack.c.l.b16 %v1408
  %v1493 = vunpack.c.h.b16 %v1408
  %v1494 = vunpack.c.l.b16 %v1409
  %v1495 = vunpack.c.h.b16 %v1409
  %v1496 = vunpack.c.l.b16 %v1410
  %v1497 = vunpack.c.h.b16 %v1410
  %v1498 = vunpack.c.l.b16 %v1411
  %v1499 = vunpack.c.h.b16 %v1411
  %v1500 = vunpack.c.l.b16 %v1412
  %v1501 = vunpack.c.h.b16 %v1412
  %v1502 = vunpack.c.l.b16 %v1413
  %v1503 = vunpack.c.h.b16 %v1413
  %v1504 = vunpack.c.l.b16 %v1414
  %v1505 = vunpack.c.h.b16 %v1414
  %v1506 = vunpack.c.l.b16 %v1415
  %v1507 = vunpack.c.h.b16 %v1415
  %v1508 = vunpack.c.l.b16 %v1416
  %v1509 = vunpack.c.h.b16 %v1416
  %v1510 = vunpack.c.l.b16 %v1417
  %v1511 = vunpack.c.h.b16 %v1417
  %v1512 = vunpack.c.l.b16 %v1418
  %v1513 = vunpack.c.h.b16 %v1418
  %v1514 = vunpack.c.l.b16 %v1419
  %v1515 = vunpack.c.h.b16 %v1419
  %v1516 = vpack.c.b16 %v1456, %v1452
  %v1517 = vpack.c.b16 %v1457, %v1453
  %v1518 = vpack.c.b16 %v1458, %v1454
  %v1519 = vpack.c.b16 %v1459, %v1455
  %v1520 = vpack.c.b16 %v1464, %v1460
  %v1521 = vpack.c.b16 %v1465, %v1461
  %v1522 = vpack.c.b16 %v1466, %v1462
  %v1523 = vpack.c.b16 %v1467, %v1463
  %v1524 = vpack.c.b16 %v1472, %v1468
  %v1525 = vpack.c.b16 %v1473, %v1469
  %v1526 = vpack.c.b16 %v1474, %v1470
  %v1527 = vpack.c.b16 %v1475, %v1471
  %v1528 = vpack.c.b16 %v1480, %v1476
  %v1529 = vpack.c.b16 %v1481, %v1477
  %v1530 = vpack.c.b16 %v1482, %v1478
  %v1531 = vpack.c.b16 %v1483, %v1479
  %v1532 = vpack.c.b16 %v1488, %v1484
  %v1533 = vpack.c.b16 %v1489, %v1485
  %v1534 = vpack.c.b16 %v1490, %v1486
  %v1535 = vpack.c.b16 %v1491, %v1487
  %v1536 = vpack.c.b16 %v1496, %v1492
  %v1537 = vpack.c.b16 %v1497, %v1493
  %v1538 = vpack.c.b16 %v1498, %v1494
  %v1539 = vpack.c.b16 %v1499, %v1495
  %v1540 = vpack.c.b16 %v1504, %v1500
  %v1541 = vpack.c.b16 %v1505, %v1501
  %v1542 = vpack.c.b16 %v1506, %v1502
  %v1543 = vpack.c.b16 %v1507, %v1503
  %v1544 = vpack.c.b16 %v1512, %v1508
  %v1545 = vpack.c.b16 %v1513, %v1509
  %v1546 = vpack.c.b16 %v1514, %v1510
  %v1547 = vpack.c.b16 %v1515, %v1511
  %1580 = vmatprep.subr.bf16.mxu0 %v1517
  %1581 = vmatpush1.bf16.msra.mxu0 %v1516
  %1582 = vmatprep.subr.bf16.mxu0 %v1521
  %1583 = vmatpush1.bf16.msra.mxu0 %v1520
  %1584 = vmatprep.subr.bf16.mxu0 %v1525
  %1585 = vmatpush1.bf16.msra.mxu0 %v1524
  %1586 = vmatprep.subr.bf16.mxu0 %v1529
  %1587 = vmatpush1.bf16.msra.mxu0 %v1528
  %1588 = vmatprep.subr.bf16.mxu0 %v1533
  %1589 = vmatpush1.bf16.msra.mxu0 %v1532
  %1590 = vmatprep.subr.bf16.mxu0 %v1537
  %1591 = vmatpush1.bf16.msra.mxu0 %v1536
  %1592 = vmatprep.subr.bf16.mxu0 %v1541
  %1593 = vmatpush1.bf16.msra.mxu0 %v1540
  %1594 = vmatprep.subr.bf16.mxu0 %v1545
  %1595 = vmatpush1.bf16.msra.mxu0 %v1544
  %1596 = vmatprep.subr.bf16.mxu0 0
  %1597 = vmatpush1.bf16.msra.mxu0 0
  %1598 = vmatprep.subr.bf16.mxu0 0
  %1599 = vmatpush1.bf16.msra.mxu0 0
  %1600 = vmatprep.subr.bf16.mxu0 0
  %1601 = vmatpush1.bf16.msra.mxu0 0
  %1602 = vmatprep.subr.bf16.mxu0 0
  %1603 = vmatpush1.bf16.msra.mxu0 0
  %1604 = vmatprep.subr.bf16.mxu0 0
  %1605 = vmatpush1.bf16.msra.mxu0 0
  %1606 = vmatprep.subr.bf16.mxu0 0
  %1607 = vmatpush1.bf16.msra.mxu0 0
  %1608 = vmatprep.subr.bf16.mxu0 0
  %1609 = vmatpush1.bf16.msra.mxu0 0
  %1610 = vmatprep.subr.bf16.mxu0 0
  %1611 = vmatpush1.bf16.msra.mxu0 0
  %1612 = vmatprep.mubr.bf16.mxu0 0
  %1613 = vmatmul.mubr.bf16.gmra.mrb[0].mxu0 %v1387
  %v1614 = vpop.f32.mrb[0].mxu0
  %v1615 = vadd.f32 0.0, %v1614
  %v1616 = vpop.f32.mrb[0].mxu0
  %v1617 = vadd.f32 0.0, %v1616
  %v1618 = vpop.f32.mrb[0].mxu0
  %v1619 = vpop.f32.mrb[0].mxu0
  %1620 = vdwg.mxu0
  %1621 = vmatprep.subr.bf16.mxu0 %v1519
  %1622 = vmatpush1.bf16.msra.mxu0 %v1518
  %1623 = vmatprep.subr.bf16.mxu0 %v1523
  %1624 = vmatpush1.bf16.msra.mxu0 %v1522
  %1625 = vmatprep.subr.bf16.mxu0 %v1527
  %1626 = vmatpush1.bf16.msra.mxu0 %v1526
  %1627 = vmatprep.subr.bf16.mxu0 %v1531
  %1628 = vmatpush1.bf16.msra.mxu0 %v1530
  %1629 = vmatprep.subr.bf16.mxu0 %v1535
  %1630 = vmatpush1.bf16.msra.mxu0 %v1534
  %1631 = vmatprep.subr.bf16.mxu0 %v1539
  %1632 = vmatpush1.bf16.msra.mxu0 %v1538
  %1633 = vmatprep.subr.bf16.mxu0 %v1543
  %1634 = vmatpush1.bf16.msra.mxu0 %v1542
  %1635 = vmatprep.subr.bf16.mxu0 %v1547
  %1636 = vmatpush1.bf16.msra.mxu0 %v1546
  %1637 = vmatprep.subr.bf16.mxu0 0
  %1638 = vmatpush1.bf16.msra.mxu0 0
  %1639 = vmatprep.subr.bf16.mxu0 0
  %1640 = vmatpush1.bf16.msra.mxu0 0
  %1641 = vmatprep.subr.bf16.mxu0 0
  %1642 = vmatpush1.bf16.msra.mxu0 0
  %1643 = vmatprep.subr.bf16.mxu0 0
  %1644 = vmatpush1.bf16.msra.mxu0 0
  %1645 = vmatprep.subr.bf16.mxu0 0
  %1646 = vmatpush1.bf16.msra.mxu0 0
  %1647 = vmatprep.subr.bf16.mxu0 0
  %1648 = vmatpush1.bf16.msra.mxu0 0
  %1649 = vmatprep.subr.bf16.mxu0 0
  %1650 = vmatpush1.bf16.msra.mxu0 0
  %1651 = vmatprep.subr.bf16.mxu0 0
  %1652 = vmatpush1.bf16.msra.mxu0 0
  %1653 = vmatprep.mubr.bf16.mxu0 0
  %1654 = vmatmul.mubr.bf16.gmra.mrb[0].mxu0 %v1387
  %v1655 = vpop.f32.mrb[0].mxu0
  %v1656 = vadd.f32 0.0, %v1655
  %v1657 = vpop.f32.mrb[0].mxu0
  %v1658 = vadd.f32 0.0, %v1657
  %v1659 = vpop.f32.mrb[0].mxu0
  %v1660 = vpop.f32.mrb[0].mxu0
  %1661 = vdwg.mxu0
  %v1662 = vadd.f32 %v1383, %v1615
  %v1663 = vadd.f32 %v1384, %v1617
  %v1664 = vadd.f32 %v1385, %v1656
  %v1665 = vadd.f32 %v1386, %v1658
  %v1666 = vxor.u32 %v1662, 2147483648
  %v1667 = vmul.f32 %v1666, 1.442695
  %v1668 = vpow.pop %v1667
  %v1669 = vadd.f32 %v1668, 1.0
  %v1670 = vrcp.pop %v1669
  %v1671 = vmul.f32 1.0, %v1670
  %v1672 = vxor.u32 %v1663, 2147483648
  %v1673 = vmul.f32 %v1672, 1.442695
  %v1674 = vpow.pop %v1673
  %v1675 = vadd.f32 %v1674, 1.0
  %v1676 = vrcp.pop %v1675
  %v1677 = vmul.f32 1.0, %v1676
  %v1678 = vtanh.pop %v1664
  %v1679 = vxor.u32 %v1665, 2147483648
  %v1680 = vmul.f32 %v1679, 1.442695
  %v1681 = vpow.pop %v1680
  %v1682 = vadd.f32 %v1681, 1.0
  %v1683 = vrcp.pop %v1682
  %v1684 = vmul.f32 1.0, %v1683
  %v1685 = vmul.f32 %v1677, %v1376
  %v1686 = vmul.f32 %v1671, %v1678
  %v1687 = vadd.f32 %v1685, %v1686
  %v1688 = vtanh.pop %v1687
  %v1689 = vmul.f32 %v1684, %v1688
  %s1690 = scalar_lea.vmem [#allocation3], 8
  %1691 = vst [vmem:[%s1690] sm:$0xff] %v1689
  %s1692 = smul.u32 2, 4
  %s1693 = smul.addr %s1692, 8
  %s1694 = scalar_lea.vmem [#allocation2], %s1693
  %v1695 = vld [vmem:[%s1694] sm:$0xff]
  %v1696 = vld [vmem:[%s1694 + $0x8] sm:$0xff]
  %v1697 = vld [vmem:[%s1694 + $0x10] sm:$0xff]
  %v1698 = vld [vmem:[%s1694 + $0x18] sm:$0xff]
  %v1699 = vpack.c.bf16 %v1689, %v1689
  %v1700 = vld [vmem:[%s4] sm:$0xff]
  %v1701 = vld [vmem:[%s4 + $0x8] sm:$0xff]
  %v1702 = vld [vmem:[%s4 + $0x10] sm:$0xff]
  %v1703 = vld [vmem:[%s4 + $0x18] sm:$0xff]
  %v1704 = vld [vmem:[%s4 + $0x20] sm:$0xff]
  %v1705 = vld [vmem:[%s4 + $0x28] sm:$0xff]
  %v1706 = vld [vmem:[%s4 + $0x30] sm:$0xff]
  %v1707 = vld [vmem:[%s4 + $0x38] sm:$0xff]
  %v1708 = vld [vmem:[%s4 + $0x40] sm:$0xff]
  %v1709 = vld [vmem:[%s4 + $0x48] sm:$0xff]
  %v1710 = vld [vmem:[%s4 + $0x50] sm:$0xff]
  %v1711 = vld [vmem:[%s4 + $0x58] sm:$0xff]
  %v1712 = vld [vmem:[%s4 + $0x60] sm:$0xff]
  %v1713 = vld [vmem:[%s4 + $0x68] sm:$0xff]
  %v1714 = vld [vmem:[%s4 + $0x70] sm:$0xff]
  %v1715 = vld [vmem:[%s4 + $0x78] sm:$0xff]
  %v1716 = vld [vmem:[%s4 + $0x80] sm:$0xff]
  %v1717 = vld [vmem:[%s4 + $0x88] sm:$0xff]
  %v1718 = vld [vmem:[%s4 + $0x90] sm:$0xff]
  %v1719 = vld [vmem:[%s4 + $0x98] sm:$0xff]
  %v1720 = vld [vmem:[%s4 + $0xa0] sm:$0xff]
  %v1721 = vld [vmem:[%s4 + $0xa8] sm:$0xff]
  %v1722 = vld [vmem:[%s4 + $0xb0] sm:$0xff]
  %v1723 = vld [vmem:[%s4 + $0xb8] sm:$0xff]
  %v1724 = vld [vmem:[%s4 + $0xc0] sm:$0xff]
  %v1725 = vld [vmem:[%s4 + $0xc8] sm:$0xff]
  %v1726 = vld [vmem:[%s4 + $0xd0] sm:$0xff]
  %v1727 = vld [vmem:[%s4 + $0xd8] sm:$0xff]
  %v1728 = vld [vmem:[%s4 + $0xe0] sm:$0xff]
  %v1729 = vld [vmem:[%s4 + $0xe8] sm:$0xff]
  %v1730 = vld [vmem:[%s4 + $0xf0] sm:$0xff]
  %v1731 = vld [vmem:[%s4 + $0xf8] sm:$0xff]
  %v1764 = vunpack.c.l.b16 %v1700
  %v1765 = vunpack.c.h.b16 %v1700
  %v1766 = vunpack.c.l.b16 %v1701
  %v1767 = vunpack.c.h.b16 %v1701
  %v1768 = vunpack.c.l.b16 %v1702
  %v1769 = vunpack.c.h.b16 %v1702
  %v1770 = vunpack.c.l.b16 %v1703
  %v1771 = vunpack.c.h.b16 %v1703
  %v1772 = vunpack.c.l.b16 %v1704
  %v1773 = vunpack.c.h.b16 %v1704
  %v1774 = vunpack.c.l.b16 %v1705
  %v1775 = vunpack.c.h.b16 %v1705
  %v1776 = vunpack.c.l.b16 %v1706
  %v1777 = vunpack.c.h.b16 %v1706
  %v1778 = vunpack.c.l.b16 %v1707
  %v1779 = vunpack.c.h.b16 %v1707
  %v1780 = vunpack.c.l.b16 %v1708
  %v1781 = vunpack.c.h.b16 %v1708
  %v1782 = vunpack.c.l.b16 %v1709
  %v1783 = vunpack.c.h.b16 %v1709
  %v1784 = vunpack.c.l.b16 %v1710
  %v1785 = vunpack.c.h.b16 %v1710
  %v1786 = vunpack.c.l.b16 %v1711
  %v1787 = vunpack.c.h.b16 %v1711
  %v1788 = vunpack.c.l.b16 %v1712
  %v1789 = vunpack.c.h.b16 %v1712
  %v1790 = vunpack.c.l.b16 %v1713
  %v1791 = vunpack.c.h.b16 %v1713
  %v1792 = vunpack.c.l.b16 %v1714
  %v1793 = vunpack.c.h.b16 %v1714
  %v1794 = vunpack.c.l.b16 %v1715
  %v1795 = vunpack.c.h.b16 %v1715
  %v1796 = vunpack.c.l.b16 %v1716
  %v1797 = vunpack.c.h.b16 %v1716
  %v1798 = vunpack.c.l.b16 %v1717
  %v1799 = vunpack.c.h.b16 %v1717
  %v1800 = vunpack.c.l.b16 %v1718
  %v1801 = vunpack.c.h.b16 %v1718
  %v1802 = vunpack.c.l.b16 %v1719
  %v1803 = vunpack.c.h.b16 %v1719
  %v1804 = vunpack.c.l.b16 %v1720
  %v1805 = vunpack.c.h.b16 %v1720
  %v1806 = vunpack.c.l.b16 %v1721
  %v1807 = vunpack.c.h.b16 %v1721
  %v1808 = vunpack.c.l.b16 %v1722
  %v1809 = vunpack.c.h.b16 %v1722
  %v1810 = vunpack.c.l.b16 %v1723
  %v1811 = vunpack.c.h.b16 %v1723
  %v1812 = vunpack.c.l.b16 %v1724
  %v1813 = vunpack.c.h.b16 %v1724
  %v1814 = vunpack.c.l.b16 %v1725
  %v1815 = vunpack.c.h.b16 %v1725
  %v1816 = vunpack.c.l.b16 %v1726
  %v1817 = vunpack.c.h.b16 %v1726
  %v1818 = vunpack.c.l.b16 %v1727
  %v1819 = vunpack.c.h.b16 %v1727
  %v1820 = vunpack.c.l.b16 %v1728
  %v1821 = vunpack.c.h.b16 %v1728
  %v1822 = vunpack.c.l.b16 %v1729
  %v1823 = vunpack.c.h.b16 %v1729
  %v1824 = vunpack.c.l.b16 %v1730
  %v1825 = vunpack.c.h.b16 %v1730
  %v1826 = vunpack.c.l.b16 %v1731
  %v1827 = vunpack.c.h.b16 %v1731
  %v1828 = vpack.c.b16 %v1768, %v1764
  %v1829 = vpack.c.b16 %v1769, %v1765
  %v1830 = vpack.c.b16 %v1770, %v1766
  %v1831 = vpack.c.b16 %v1771, %v1767
  %v1832 = vpack.c.b16 %v1776, %v1772
  %v1833 = vpack.c.b16 %v1777, %v1773
  %v1834 = vpack.c.b16 %v1778, %v1774
  %v1835 = vpack.c.b16 %v1779, %v1775
  %v1836 = vpack.c.b16 %v1784, %v1780
  %v1837 = vpack.c.b16 %v1785, %v1781
  %v1838 = vpack.c.b16 %v1786, %v1782
  %v1839 = vpack.c.b16 %v1787, %v1783
  %v1840 = vpack.c.b16 %v1792, %v1788
  %v1841 = vpack.c.b16 %v1793, %v1789
  %v1842 = vpack.c.b16 %v1794, %v1790
  %v1843 = vpack.c.b16 %v1795, %v1791
  %v1844 = vpack.c.b16 %v1800, %v1796
  %v1845 = vpack.c.b16 %v1801, %v1797
  %v1846 = vpack.c.b16 %v1802, %v1798
  %v1847 = vpack.c.b16 %v1803, %v1799
  %v1848 = vpack.c.b16 %v1808, %v1804
  %v1849 = vpack.c.b16 %v1809, %v1805
  %v1850 = vpack.c.b16 %v1810, %v1806
  %v1851 = vpack.c.b16 %v1811, %v1807
  %v1852 = vpack.c.b16 %v1816, %v1812
  %v1853 = vpack.c.b16 %v1817, %v1813
  %v1854 = vpack.c.b16 %v1818, %v1814
  %v1855 = vpack.c.b16 %v1819, %v1815
  %v1856 = vpack.c.b16 %v1824, %v1820
  %v1857 = vpack.c.b16 %v1825, %v1821
  %v1858 = vpack.c.b16 %v1826, %v1822
  %v1859 = vpack.c.b16 %v1827, %v1823
  %1892 = vmatprep.subr.bf16.mxu0 %v1829
  %1893 = vmatpush1.bf16.msra.mxu0 %v1828
  %1894 = vmatprep.subr.bf16.mxu0 %v1833
  %1895 = vmatpush1.bf16.msra.mxu0 %v1832
  %1896 = vmatprep.subr.bf16.mxu0 %v1837
  %1897 = vmatpush1.bf16.msra.mxu0 %v1836
  %1898 = vmatprep.subr.bf16.mxu0 %v1841
  %1899 = vmatpush1.bf16.msra.mxu0 %v1840
  %1900 = vmatprep.subr.bf16.mxu0 %v1845
  %1901 = vmatpush1.bf16.msra.mxu0 %v1844
  %1902 = vmatprep.subr.bf16.mxu0 %v1849
  %1903 = vmatpush1.bf16.msra.mxu0 %v1848
  %1904 = vmatprep.subr.bf16.mxu0 %v1853
  %1905 = vmatpush1.bf16.msra.mxu0 %v1852
  %1906 = vmatprep.subr.bf16.mxu0 %v1857
  %1907 = vmatpush1.bf16.msra.mxu0 %v1856
  %1908 = vmatprep.subr.bf16.mxu0 0
  %1909 = vmatpush1.bf16.msra.mxu0 0
  %1910 = vmatprep.subr.bf16.mxu0 0
  %1911 = vmatpush1.bf16.msra.mxu0 0
  %1912 = vmatprep.subr.bf16.mxu0 0
  %1913 = vmatpush1.bf16.msra.mxu0 0
  %1914 = vmatprep.subr.bf16.mxu0 0
  %1915 = vmatpush1.bf16.msra.mxu0 0
  %1916 = vmatprep.subr.bf16.mxu0 0
  %1917 = vmatpush1.bf16.msra.mxu0 0
  %1918 = vmatprep.subr.bf16.mxu0 0
  %1919 = vmatpush1.bf16.msra.mxu0 0
  %1920 = vmatprep.subr.bf16.mxu0 0
  %1921 = vmatpush1.bf16.msra.mxu0 0
  %1922 = vmatprep.subr.bf16.mxu0 0
  %1923 = vmatpush1.bf16.msra.mxu0 0
  %1924 = vmatprep.mubr.bf16.mxu0 0
  %1925 = vmatmul.mubr.bf16.gmra.mrb[0].mxu0 %v1699
  %v1926 = vpop.f32.mrb[0].mxu0
  %v1927 = vadd.f32 0.0, %v1926
  %v1928 = vpop.f32.mrb[0].mxu0
  %v1929 = vadd.f32 0.0, %v1928
  %v1930 = vpop.f32.mrb[0].mxu0
  %v1931 = vpop.f32.mrb[0].mxu0
  %1932 = vdwg.mxu0
  %1933 = vmatprep.subr.bf16.mxu0 %v1831
  %1934 = vmatpush1.bf16.msra.mxu0 %v1830
  %1935 = vmatprep.subr.bf16.mxu0 %v1835
  %1936 = vmatpush1.bf16.msra.mxu0 %v1834
  %1937 = vmatprep.subr.bf16.mxu0 %v1839
  %1938 = vmatpush1.bf16.msra.mxu0 %v1838
  %1939 = vmatprep.subr.bf16.mxu0 %v1843
  %1940 = vmatpush1.bf16.msra.mxu0 %v1842
  %1941 = vmatprep.subr.bf16.mxu0 %v1847
  %1942 = vmatpush1.bf16.msra.mxu0 %v1846
  %1943 = vmatprep.subr.bf16.mxu0 %v1851
  %1944 = vmatpush1.bf16.msra.mxu0 %v1850
  %1945 = vmatprep.subr.bf16.mxu0 %v1855
  %1946 = vmatpush1.bf16.msra.mxu0 %v1854
  %1947 = vmatprep.subr.bf16.mxu0 %v1859
  %1948 = vmatpush1.bf16.msra.mxu0 %v1858
  %1949 = vmatprep.subr.bf16.mxu0 0
  %1950 = vmatpush1.bf16.msra.mxu0 0
  %1951 = vmatprep.subr.bf16.mxu0 0
  %1952 = vmatpush1.bf16.msra.mxu0 0
  %1953 = vmatprep.subr.bf16.mxu0 0
  %1954 = vmatpush1.bf16.msra.mxu0 0
  %1955 = vmatprep.subr.bf16.mxu0 0
  %1956 = vmatpush1.bf16.msra.mxu0 0
  %1957 = vmatprep.subr.bf16.mxu0 0
  %1958 = vmatpush1.bf16.msra.mxu0 0
  %1959 = vmatprep.subr.bf16.mxu0 0
  %1960 = vmatpush1.bf16.msra.mxu0 0
  %1961 = vmatprep.subr.bf16.mxu0 0
  %1962 = vmatpush1.bf16.msra.mxu0 0
  %1963 = vmatprep.subr.bf16.mxu0 0
  %1964 = vmatpush1.bf16.msra.mxu0 0
  %1965 = vmatprep.mubr.bf16.mxu0 0
  %1966 = vmatmul.mubr.bf16.gmra.mrb[0].mxu0 %v1699
  %v1967 = vpop.f32.mrb[0].mxu0
  %v1968 = vadd.f32 0.0, %v1967
  %v1969 = vpop.f32.mrb[0].mxu0
  %v1970 = vadd.f32 0.0, %v1969
  %v1971 = vpop.f32.mrb[0].mxu0
  %v1972 = vpop.f32.mrb[0].mxu0
  %1973 = vdwg.mxu0
  %v1974 = vadd.f32 %v1695, %v1927
  %v1975 = vadd.f32 %v1696, %v1929
  %v1976 = vadd.f32 %v1697, %v1968
  %v1977 = vadd.f32 %v1698, %v1970
  %v1978 = vxor.u32 %v1974, 2147483648
  %v1979 = vmul.f32 %v1978, 1.442695
  %v1980 = vpow.pop %v1979
  %v1981 = vadd.f32 %v1980, 1.0
  %v1982 = vrcp.pop %v1981
  %v1983 = vmul.f32 1.0, %v1982
  %v1984 = vxor.u32 %v1975, 2147483648
  %v1985 = vmul.f32 %v1984, 1.442695
  %v1986 = vpow.pop %v1985
  %v1987 = vadd.f32 %v1986, 1.0
  %v1988 = vrcp.pop %v1987
  %v1989 = vmul.f32 1.0, %v1988
  %v1990 = vtanh.pop %v1976
  %v1991 = vxor.u32 %v1977, 2147483648
  %v1992 = vmul.f32 %v1991, 1.442695
  %v1993 = vpow.pop %v1992
  %v1994 = vadd.f32 %v1993, 1.0
  %v1995 = vrcp.pop %v1994
  %v1996 = vmul.f32 1.0, %v1995
  %v1997 = vmul.f32 %v1989, %v1687
  %v1998 = vmul.f32 %v1983, %v1990
  %v1999 = vadd.f32 %v1997, %v1998
  %v2000 = vtanh.pop %v1999
  %v2001 = vmul.f32 %v1996, %v2000
  %s2002 = scalar_lea.vmem [#allocation3], 16
  %2003 = vst [vmem:[%s2002] sm:$0xff] %v2001
  %s2004 = smul.u32 3, 4
  %s2005 = smul.addr %s2004, 8
  %s2006 = scalar_lea.vmem [#allocation2], %s2005
  %v2007 = vld [vmem:[%s2006] sm:$0xff]
  %v2008 = vld [vmem:[%s2006 + $0x8] sm:$0xff]
  %v2009 = vld [vmem:[%s2006 + $0x10] sm:$0xff]
  %v2010 = vld [vmem:[%s2006 + $0x18] sm:$0xff]
  %v2011 = vpack.c.bf16 %v2001, %v2001
  %v2012 = vld [vmem:[%s4] sm:$0xff]
  %v2013 = vld [vmem:[%s4 + $0x8] sm:$0xff]
  %v2014 = vld [vmem:[%s4 + $0x10] sm:$0xff]
  %v2015 = vld [vmem:[%s4 + $0x18] sm:$0xff]
  %v2016 = vld [vmem:[%s4 + $0x20] sm:$0xff]
  %v2017 = vld [vmem:[%s4 + $0x28] sm:$0xff]
  %v2018 = vld [vmem:[%s4 + $0x30] sm:$0xff]
  %v2019 = vld [vmem:[%s4 + $0x38] sm:$0xff]
  %v2020 = vld [vmem:[%s4 + $0x40] sm:$0xff]
  %v2021 = vld [vmem:[%s4 + $0x48] sm:$0xff]
  %v2022 = vld [vmem:[%s4 + $0x50] sm:$0xff]
  %v2023 = vld [vmem:[%s4 + $0x58] sm:$0xff]
  %v2024 = vld [vmem:[%s4 + $0x60] sm:$0xff]
  %v2025 = vld [vmem:[%s4 + $0x68] sm:$0xff]
  %v2026 = vld [vmem:[%s4 + $0x70] sm:$0xff]
  %v2027 = vld [vmem:[%s4 + $0x78] sm:$0xff]
  %v2028 = vld [vmem:[%s4 + $0x80] sm:$0xff]
  %v2029 = vld [vmem:[%s4 + $0x88] sm:$0xff]
  %v2030 = vld [vmem:[%s4 + $0x90] sm:$0xff]
  %v2031 = vld [vmem:[%s4 + $0x98] sm:$0xff]
  %v2032 = vld [vmem:[%s4 + $0xa0] sm:$0xff]
  %v2033 = vld [vmem:[%s4 + $0xa8] sm:$0xff]
  %v2034 = vld [vmem:[%s4 + $0xb0] sm:$0xff]
  %v2035 = vld [vmem:[%s4 + $0xb8] sm:$0xff]
  %v2036 = vld [vmem:[%s4 + $0xc0] sm:$0xff]
  %v2037 = vld [vmem:[%s4 + $0xc8] sm:$0xff]
  %v2038 = vld [vmem:[%s4 + $0xd0] sm:$0xff]
  %v2039 = vld [vmem:[%s4 + $0xd8] sm:$0xff]
  %v2040 = vld [vmem:[%s4 + $0xe0] sm:$0xff]
  %v2041 = vld [vmem:[%s4 + $0xe8] sm:$0xff]
  %v2042 = vld [vmem:[%s4 + $0xf0] sm:$0xff]
  %v2043 = vld [vmem:[%s4 + $0xf8] sm:$0xff]
  %v2076 = vunpack.c.l.b16 %v2012
  %v2077 = vunpack.c.h.b16 %v2012
  %v2078 = vunpack.c.l.b16 %v2013
  %v2079 = vunpack.c.h.b16 %v2013
  %v2080 = vunpack.c.l.b16 %v2014
  %v2081 = vunpack.c.h.b16 %v2014
  %v2082 = vunpack.c.l.b16 %v2015
  %v2083 = vunpack.c.h.b16 %v2015
  %v2084 = vunpack.c.l.b16 %v2016
  %v2085 = vunpack.c.h.b16 %v2016
  %v2086 = vunpack.c.l.b16 %v2017
  %v2087 = vunpack.c.h.b16 %v2017
  %v2088 = vunpack.c.l.b16 %v2018
  %v2089 = vunpack.c.h.b16 %v2018
  %v2090 = vunpack.c.l.b16 %v2019
  %v2091 = vunpack.c.h.b16 %v2019
  %v2092 = vunpack.c.l.b16 %v2020
  %v2093 = vunpack.c.h.b16 %v2020
  %v2094 = vunpack.c.l.b16 %v2021
  %v2095 = vunpack.c.h.b16 %v2021
  %v2096 = vunpack.c.l.b16 %v2022
  %v2097 = vunpack.c.h.b16 %v2022
  %v2098 = vunpack.c.l.b16 %v2023
  %v2099 = vunpack.c.h.b16 %v2023
  %v2100 = vunpack.c.l.b16 %v2024
  %v2101 = vunpack.c.h.b16 %v2024
  %v2102 = vunpack.c.l.b16 %v2025
  %v2103 = vunpack.c.h.b16 %v2025
  %v2104 = vunpack.c.l.b16 %v2026
  %v2105 = vunpack.c.h.b16 %v2026
  %v2106 = vunpack.c.l.b16 %v2027
  %v2107 = vunpack.c.h.b16 %v2027
  %v2108 = vunpack.c.l.b16 %v2028
  %v2109 = vunpack.c.h.b16 %v2028
  %v2110 = vunpack.c.l.b16 %v2029
  %v2111 = vunpack.c.h.b16 %v2029
  %v2112 = vunpack.c.l.b16 %v2030
  %v2113 = vunpack.c.h.b16 %v2030
  %v2114 = vunpack.c.l.b16 %v2031
  %v2115 = vunpack.c.h.b16 %v2031
  %v2116 = vunpack.c.l.b16 %v2032
  %v2117 = vunpack.c.h.b16 %v2032
  %v2118 = vunpack.c.l.b16 %v2033
  %v2119 = vunpack.c.h.b16 %v2033
  %v2120 = vunpack.c.l.b16 %v2034
  %v2121 = vunpack.c.h.b16 %v2034
  %v2122 = vunpack.c.l.b16 %v2035
  %v2123 = vunpack.c.h.b16 %v2035
  %v2124 = vunpack.c.l.b16 %v2036
  %v2125 = vunpack.c.h.b16 %v2036
  %v2126 = vunpack.c.l.b16 %v2037
  %v2127 = vunpack.c.h.b16 %v2037
  %v2128 = vunpack.c.l.b16 %v2038
  %v2129 = vunpack.c.h.b16 %v2038
  %v2130 = vunpack.c.l.b16 %v2039
  %v2131 = vunpack.c.h.b16 %v2039
  %v2132 = vunpack.c.l.b16 %v2040
  %v2133 = vunpack.c.h.b16 %v2040
  %v2134 = vunpack.c.l.b16 %v2041
  %v2135 = vunpack.c.h.b16 %v2041
  %v2136 = vunpack.c.l.b16 %v2042
  %v2137 = vunpack.c.h.b16 %v2042
  %v2138 = vunpack.c.l.b16 %v2043
  %v2139 = vunpack.c.h.b16 %v2043
  %v2140 = vpack.c.b16 %v2080, %v2076
  %v2141 = vpack.c.b16 %v2081, %v2077
  %v2142 = vpack.c.b16 %v2082, %v2078
  %v2143 = vpack.c.b16 %v2083, %v2079
  %v2144 = vpack.c.b16 %v2088, %v2084
  %v2145 = vpack.c.b16 %v2089, %v2085
  %v2146 = vpack.c.b16 %v2090, %v2086
  %v2147 = vpack.c.b16 %v2091, %v2087
  %v2148 = vpack.c.b16 %v2096, %v2092
  %v2149 = vpack.c.b16 %v2097, %v2093
  %v2150 = vpack.c.b16 %v2098, %v2094
  %v2151 = vpack.c.b16 %v2099, %v2095
  %v2152 = vpack.c.b16 %v2104, %v2100
  %v2153 = vpack.c.b16 %v2105, %v2101
  %v2154 = vpack.c.b16 %v2106, %v2102
  %v2155 = vpack.c.b16 %v2107, %v2103
  %v2156 = vpack.c.b16 %v2112, %v2108
  %v2157 = vpack.c.b16 %v2113, %v2109
  %v2158 = vpack.c.b16 %v2114, %v2110
  %v2159 = vpack.c.b16 %v2115, %v2111
  %v2160 = vpack.c.b16 %v2120, %v2116
  %v2161 = vpack.c.b16 %v2121, %v2117
  %v2162 = vpack.c.b16 %v2122, %v2118
  %v2163 = vpack.c.b16 %v2123, %v2119
  %v2164 = vpack.c.b16 %v2128, %v2124
  %v2165 = vpack.c.b16 %v2129, %v2125
  %v2166 = vpack.c.b16 %v2130, %v2126
  %v2167 = vpack.c.b16 %v2131, %v2127
  %v2168 = vpack.c.b16 %v2136, %v2132
  %v2169 = vpack.c.b16 %v2137, %v2133
  %v2170 = vpack.c.b16 %v2138, %v2134
  %v2171 = vpack.c.b16 %v2139, %v2135
  %2204 = vmatprep.subr.bf16.mxu0 %v2141
  %2205 = vmatpush1.bf16.msra.mxu0 %v2140
  %2206 = vmatprep.subr.bf16.mxu0 %v2145
  %2207 = vmatpush1.bf16.msra.mxu0 %v2144
  %2208 = vmatprep.subr.bf16.mxu0 %v2149
  %2209 = vmatpush1.bf16.msra.mxu0 %v2148
  %2210 = vmatprep.subr.bf16.mxu0 %v2153
  %2211 = vmatpush1.bf16.msra.mxu0 %v2152
  %2212 = vmatprep.subr.bf16.mxu0 %v2157
  %2213 = vmatpush1.bf16.msra.mxu0 %v2156
  %2214 = vmatprep.subr.bf16.mxu0 %v2161
  %2215 = vmatpush1.bf16.msra.mxu0 %v2160
  %2216 = vmatprep.subr.bf16.mxu0 %v2165
  %2217 = vmatpush1.bf16.msra.mxu0 %v2164
  %2218 = vmatprep.subr.bf16.mxu0 %v2169
  %2219 = vmatpush1.bf16.msra.mxu0 %v2168
  %2220 = vmatprep.subr.bf16.mxu0 0
  %2221 = vmatpush1.bf16.msra.mxu0 0
  %2222 = vmatprep.subr.bf16.mxu0 0
  %2223 = vmatpush1.bf16.msra.mxu0 0
  %2224 = vmatprep.subr.bf16.mxu0 0
  %2225 = vmatpush1.bf16.msra.mxu0 0
  %2226 = vmatprep.subr.bf16.mxu0 0
  %2227 = vmatpush1.bf16.msra.mxu0 0
  %2228 = vmatprep.subr.bf16.mxu0 0
  %2229 = vmatpush1.bf16.msra.mxu0 0
  %2230 = vmatprep.subr.bf16.mxu0 0
  %2231 = vmatpush1.bf16.msra.mxu0 0
  %2232 = vmatprep.subr.bf16.mxu0 0
  %2233 = vmatpush1.bf16.msra.mxu0 0
  %2234 = vmatprep.subr.bf16.mxu0 0
  %2235 = vmatpush1.bf16.msra.mxu0 0
  %2236 = vmatprep.mubr.bf16.mxu0 0
  %2237 = vmatmul.mubr.bf16.gmra.mrb[0].mxu0 %v2011
  %v2238 = vpop.f32.mrb[0].mxu0
  %v2239 = vadd.f32 0.0, %v2238
  %v2240 = vpop.f32.mrb[0].mxu0
  %v2241 = vadd.f32 0.0, %v2240
  %v2242 = vpop.f32.mrb[0].mxu0
  %v2243 = vpop.f32.mrb[0].mxu0
  %2244 = vdwg.mxu0
  %2245 = vmatprep.subr.bf16.mxu0 %v2143
  %2246 = vmatpush1.bf16.msra.mxu0 %v2142
  %2247 = vmatprep.subr.bf16.mxu0 %v2147
  %2248 = vmatpush1.bf16.msra.mxu0 %v2146
  %2249 = vmatprep.subr.bf16.mxu0 %v2151
  %2250 = vmatpush1.bf16.msra.mxu0 %v2150
  %2251 = vmatprep.subr.bf16.mxu0 %v2155
  %2252 = vmatpush1.bf16.msra.mxu0 %v2154
  %2253 = vmatprep.subr.bf16.mxu0 %v2159
  %2254 = vmatpush1.bf16.msra.mxu0 %v2158
  %2255 = vmatprep.subr.bf16.mxu0 %v2163
  %2256 = vmatpush1.bf16.msra.mxu0 %v2162
  %2257 = vmatprep.subr.bf16.mxu0 %v2167
  %2258 = vmatpush1.bf16.msra.mxu0 %v2166
  %2259 = vmatprep.subr.bf16.mxu0 %v2171
  %2260 = vmatpush1.bf16.msra.mxu0 %v2170
  %2261 = vmatprep.subr.bf16.mxu0 0
  %2262 = vmatpush1.bf16.msra.mxu0 0
  %2263 = vmatprep.subr.bf16.mxu0 0
  %2264 = vmatpush1.bf16.msra.mxu0 0
  %2265 = vmatprep.subr.bf16.mxu0 0
  %2266 = vmatpush1.bf16.msra.mxu0 0
  %2267 = vmatprep.subr.bf16.mxu0 0
  %2268 = vmatpush1.bf16.msra.mxu0 0
  %2269 = vmatprep.subr.bf16.mxu0 0
  %2270 = vmatpush1.bf16.msra.mxu0 0
  %2271 = vmatprep.subr.bf16.mxu0 0
  %2272 = vmatpush1.bf16.msra.mxu0 0
  %2273 = vmatprep.subr.bf16.mxu0 0
  %2274 = vmatpush1.bf16.msra.mxu0 0
  %2275 = vmatprep.subr.bf16.mxu0 0
  %2276 = vmatpush1.bf16.msra.mxu0 0
  %2277 = vmatprep.mubr.bf16.mxu0 0
  %2278 = vmatmul.mubr.bf16.gmra.mrb[0].mxu0 %v2011
  %v2279 = vpop.f32.mrb[0].mxu0
  %v2280 = vadd.f32 0.0, %v2279
  %v2281 = vpop.f32.mrb[0].mxu0
  %v2282 = vadd.f32 0.0, %v2281
  %v2283 = vpop.f32.mrb[0].mxu0
  %v2284 = vpop.f32.mrb[0].mxu0
  %2285 = vdwg.mxu0
  %v2286 = vadd.f32 %v2007, %v2239
  %v2287 = vadd.f32 %v2008, %v2241
  %v2288 = vadd.f32 %v2009, %v2280
  %v2289 = vadd.f32 %v2010, %v2282
  %v2290 = vxor.u32 %v2286, 2147483648
  %v2291 = vmul.f32 %v2290, 1.442695
  %v2292 = vpow.pop %v2291
  %v2293 = vadd.f32 %v2292, 1.0
  %v2294 = vrcp.pop %v2293
  %v2295 = vmul.f32 1.0, %v2294
  %v2296 = vxor.u32 %v2287, 2147483648
  %v2297 = vmul.f32 %v2296, 1.442695
  %v2298 = vpow.pop %v2297
  %v2299 = vadd.f32 %v2298, 1.0
  %v2300 = vrcp.pop %v2299
  %v2301 = vmul.f32 1.0, %v2300
  %v2302 = vtanh.pop %v2288
  %v2303 = vxor.u32 %v2289, 2147483648
  %v2304 = vmul.f32 %v2303, 1.442695
  %v2305 = vpow.pop %v2304
  %v2306 = vadd.f32 %v2305, 1.0
  %v2307 = vrcp.pop %v2306
  %v2308 = vmul.f32 1.0, %v2307
  %v2309 = vmul.f32 %v2301, %v1999
  %v2310 = vmul.f32 %v2295, %v2302
  %v2311 = vadd.f32 %v2309, %v2310
  %v2312 = vtanh.pop %v2311
  %v2313 = vmul.f32 %v2308, %v2312
  %s2314 = scalar_lea.vmem [#allocation3], 24
  %2315 = vst [vmem:[%s2314] sm:$0xff] %v2313
  %s2316 = smul.u32 4, 4
  %s2317 = smul.addr %s2316, 8
  %s2318 = scalar_lea.vmem [#allocation2], %s2317
  %v2319 = vld [vmem:[%s2318] sm:$0xff]
  %v2320 = vld [vmem:[%s2318 + $0x8] sm:$0xff]
  %v2321 = vld [vmem:[%s2318 + $0x10] sm:$0xff]
  %v2322 = vld [vmem:[%s2318 + $0x18] sm:$0xff]
  %v2323 = vpack.c.bf16 %v2313, %v2313
  %v2324 = vld [vmem:[%s4] sm:$0xff]
  %v2325 = vld [vmem:[%s4 + $0x8] sm:$0xff]
  %v2326 = vld [vmem:[%s4 + $0x10] sm:$0xff]
  %v2327 = vld [vmem:[%s4 + $0x18] sm:$0xff]
  %v2328 = vld [vmem:[%s4 + $0x20] sm:$0xff]
  %v2329 = vld [vmem:[%s4 + $0x28] sm:$0xff]
  %v2330 = vld [vmem:[%s4 + $0x30] sm:$0xff]
  %v2331 = vld [vmem:[%s4 + $0x38] sm:$0xff]
  %v2332 = vld [vmem:[%s4 + $0x40] sm:$0xff]
  %v2333 = vld [vmem:[%s4 + $0x48] sm:$0xff]
  %v2334 = vld [vmem:[%s4 + $0x50] sm:$0xff]
  %v2335 = vld [vmem:[%s4 + $0x58] sm:$0xff]
  %v2336 = vld [vmem:[%s4 + $0x60] sm:$0xff]
  %v2337 = vld [vmem:[%s4 + $0x68] sm:$0xff]
  %v2338 = vld [vmem:[%s4 + $0x70] sm:$0xff]
  %v2339 = vld [vmem:[%s4 + $0x78] sm:$0xff]
  %v2340 = vld [vmem:[%s4 + $0x80] sm:$0xff]
  %v2341 = vld [vmem:[%s4 + $0x88] sm:$0xff]
  %v2342 = vld [vmem:[%s4 + $0x90] sm:$0xff]
  %v2343 = vld [vmem:[%s4 + $0x98] sm:$0xff]
  %v2344 = vld [vmem:[%s4 + $0xa0] sm:$0xff]
  %v2345 = vld [vmem:[%s4 + $0xa8] sm:$0xff]
  %v2346 = vld [vmem:[%s4 + $0xb0] sm:$0xff]
  %v2347 = vld [vmem:[%s4 + $0xb8] sm:$0xff]
  %v2348 = vld [vmem:[%s4 + $0xc0] sm:$0xff]
  %v2349 = vld [vmem:[%s4 + $0xc8] sm:$0xff]
  %v2350 = vld [vmem:[%s4 + $0xd0] sm:$0xff]
  %v2351 = vld [vmem:[%s4 + $0xd8] sm:$0xff]
  %v2352 = vld [vmem:[%s4 + $0xe0] sm:$0xff]
  %v2353 = vld [vmem:[%s4 + $0xe8] sm:$0xff]
  %v2354 = vld [vmem:[%s4 + $0xf0] sm:$0xff]
  %v2355 = vld [vmem:[%s4 + $0xf8] sm:$0xff]
  %v2388 = vunpack.c.l.b16 %v2324
  %v2389 = vunpack.c.h.b16 %v2324
  %v2390 = vunpack.c.l.b16 %v2325
  %v2391 = vunpack.c.h.b16 %v2325
  %v2392 = vunpack.c.l.b16 %v2326
  %v2393 = vunpack.c.h.b16 %v2326
  %v2394 = vunpack.c.l.b16 %v2327
  %v2395 = vunpack.c.h.b16 %v2327
  %v2396 = vunpack.c.l.b16 %v2328
  %v2397 = vunpack.c.h.b16 %v2328
  %v2398 = vunpack.c.l.b16 %v2329
  %v2399 = vunpack.c.h.b16 %v2329
  %v2400 = vunpack.c.l.b16 %v2330
  %v2401 = vunpack.c.h.b16 %v2330
  %v2402 = vunpack.c.l.b16 %v2331
  %v2403 = vunpack.c.h.b16 %v2331
  %v2404 = vunpack.c.l.b16 %v2332
  %v2405 = vunpack.c.h.b16 %v2332
  %v2406 = vunpack.c.l.b16 %v2333
  %v2407 = vunpack.c.h.b16 %v2333
  %v2408 = vunpack.c.l.b16 %v2334
  %v2409 = vunpack.c.h.b16 %v2334
  %v2410 = vunpack.c.l.b16 %v2335
  %v2411 = vunpack.c.h.b16 %v2335
  %v2412 = vunpack.c.l.b16 %v2336
  %v2413 = vunpack.c.h.b16 %v2336
  %v2414 = vunpack.c.l.b16 %v2337
  %v2415 = vunpack.c.h.b16 %v2337
  %v2416 = vunpack.c.l.b16 %v2338
  %v2417 = vunpack.c.h.b16 %v2338
  %v2418 = vunpack.c.l.b16 %v2339
  %v2419 = vunpack.c.h.b16 %v2339
  %v2420 = vunpack.c.l.b16 %v2340
  %v2421 = vunpack.c.h.b16 %v2340
  %v2422 = vunpack.c.l.b16 %v2341
  %v2423 = vunpack.c.h.b16 %v2341
  %v2424 = vunpack.c.l.b16 %v2342
  %v2425 = vunpack.c.h.b16 %v2342
  %v2426 = vunpack.c.l.b16 %v2343
  %v2427 = vunpack.c.h.b16 %v2343
  %v2428 = vunpack.c.l.b16 %v2344
  %v2429 = vunpack.c.h.b16 %v2344
  %v2430 = vunpack.c.l.b16 %v2345
  %v2431 = vunpack.c.h.b16 %v2345
  %v2432 = vunpack.c.l.b16 %v2346
  %v2433 = vunpack.c.h.b16 %v2346
  %v2434 = vunpack.c.l.b16 %v2347
  %v2435 = vunpack.c.h.b16 %v2347
  %v2436 = vunpack.c.l.b16 %v2348
  %v2437 = vunpack.c.h.b16 %v2348
  %v2438 = vunpack.c.l.b16 %v2349
  %v2439 = vunpack.c.h.b16 %v2349
  %v2440 = vunpack.c.l.b16 %v2350
  %v2441 = vunpack.c.h.b16 %v2350
  %v2442 = vunpack.c.l.b16 %v2351
  %v2443 = vunpack.c.h.b16 %v2351
  %v2444 = vunpack.c.l.b16 %v2352
  %v2445 = vunpack.c.h.b16 %v2352
  %v2446 = vunpack.c.l.b16 %v2353
  %v2447 = vunpack.c.h.b16 %v2353
  %v2448 = vunpack.c.l.b16 %v2354
  %v2449 = vunpack.c.h.b16 %v2354
  %v2450 = vunpack.c.l.b16 %v2355
  %v2451 = vunpack.c.h.b16 %v2355
  %v2452 = vpack.c.b16 %v2392, %v2388
  %v2453 = vpack.c.b16 %v2393, %v2389
  %v2454 = vpack.c.b16 %v2394, %v2390
  %v2455 = vpack.c.b16 %v2395, %v2391
  %v2456 = vpack.c.b16 %v2400, %v2396
  %v2457 = vpack.c.b16 %v2401, %v2397
  %v2458 = vpack.c.b16 %v2402, %v2398
  %v2459 = vpack.c.b16 %v2403, %v2399
  %v2460 = vpack.c.b16 %v2408, %v2404
  %v2461 = vpack.c.b16 %v2409, %v2405
  %v2462 = vpack.c.b16 %v2410, %v2406
  %v2463 = vpack.c.b16 %v2411, %v2407
  %v2464 = vpack.c.b16 %v2416, %v2412
  %v2465 = vpack.c.b16 %v2417, %v2413
  %v2466 = vpack.c.b16 %v2418, %v2414
  %v2467 = vpack.c.b16 %v2419, %v2415
  %v2468 = vpack.c.b16 %v2424, %v2420
  %v2469 = vpack.c.b16 %v2425, %v2421
  %v2470 = vpack.c.b16 %v2426, %v2422
  %v2471 = vpack.c.b16 %v2427, %v2423
  %v2472 = vpack.c.b16 %v2432, %v2428
  %v2473 = vpack.c.b16 %v2433, %v2429
  %v2474 = vpack.c.b16 %v2434, %v2430
  %v2475 = vpack.c.b16 %v2435, %v2431
  %v2476 = vpack.c.b16 %v2440, %v2436
  %v2477 = vpack.c.b16 %v2441, %v2437
  %v2478 = vpack.c.b16 %v2442, %v2438
  %v2479 = vpack.c.b16 %v2443, %v2439
  %v2480 = vpack.c.b16 %v2448, %v2444
  %v2481 = vpack.c.b16 %v2449, %v2445
  %v2482 = vpack.c.b16 %v2450, %v2446
  %v2483 = vpack.c.b16 %v2451, %v2447
  %2516 = vmatprep.subr.bf16.mxu0 %v2453
  %2517 = vmatpush1.bf16.msra.mxu0 %v2452
  %2518 = vmatprep.subr.bf16.mxu0 %v2457
  %2519 = vmatpush1.bf16.msra.mxu0 %v2456
  %2520 = vmatprep.subr.bf16.mxu0 %v2461
  %2521 = vmatpush1.bf16.msra.mxu0 %v2460
  %2522 = vmatprep.subr.bf16.mxu0 %v2465
  %2523 = vmatpush1.bf16.msra.mxu0 %v2464
  %2524 = vmatprep.subr.bf16.mxu0 %v2469
  %2525 = vmatpush1.bf16.msra.mxu0 %v2468
  %2526 = vmatprep.subr.bf16.mxu0 %v2473
  %2527 = vmatpush1.bf16.msra.mxu0 %v2472
  %2528 = vmatprep.subr.bf16.mxu0 %v2477
  %2529 = vmatpush1.bf16.msra.mxu0 %v2476
  %2530 = vmatprep.subr.bf16.mxu0 %v2481
  %2531 = vmatpush1.bf16.msra.mxu0 %v2480
  %2532 = vmatprep.subr.bf16.mxu0 0
  %2533 = vmatpush1.bf16.msra.mxu0 0
  %2534 = vmatprep.subr.bf16.mxu0 0
  %2535 = vmatpush1.bf16.msra.mxu0 0
  %2536 = vmatprep.subr.bf16.mxu0 0
  %2537 = vmatpush1.bf16.msra.mxu0 0
  %2538 = vmatprep.subr.bf16.mxu0 0
  %2539 = vmatpush1.bf16.msra.mxu0 0
  %2540 = vmatprep.subr.bf16.mxu0 0
  %2541 = vmatpush1.bf16.msra.mxu0 0
  %2542 = vmatprep.subr.bf16.mxu0 0
  %2543 = vmatpush1.bf16.msra.mxu0 0
  %2544 = vmatprep.subr.bf16.mxu0 0
  %2545 = vmatpush1.bf16.msra.mxu0 0
  %2546 = vmatprep.subr.bf16.mxu0 0
  %2547 = vmatpush1.bf16.msra.mxu0 0
  %2548 = vmatprep.mubr.bf16.mxu0 0
  %2549 = vmatmul.mubr.bf16.gmra.mrb[0].mxu0 %v2323
  %v2550 = vpop.f32.mrb[0].mxu0
  %v2551 = vadd.f32 0.0, %v2550
  %v2552 = vpop.f32.mrb[0].mxu0
  %v2553 = vadd.f32 0.0, %v2552
  %v2554 = vpop.f32.mrb[0].mxu0
  %v2555 = vpop.f32.mrb[0].mxu0
  %2556 = vdwg.mxu0
  %2557 = vmatprep.subr.bf16.mxu0 %v2455
  %2558 = vmatpush1.bf16.msra.mxu0 %v2454
  %2559 = vmatprep.subr.bf16.mxu0 %v2459
  %2560 = vmatpush1.bf16.msra.mxu0 %v2458
  %2561 = vmatprep.subr.bf16.mxu0 %v2463
  %2562 = vmatpush1.bf16.msra.mxu0 %v2462
  %2563 = vmatprep.subr.bf16.mxu0 %v2467
  %2564 = vmatpush1.bf16.msra.mxu0 %v2466
  %2565 = vmatprep.subr.bf16.mxu0 %v2471
  %2566 = vmatpush1.bf16.msra.mxu0 %v2470
  %2567 = vmatprep.subr.bf16.mxu0 %v2475
  %2568 = vmatpush1.bf16.msra.mxu0 %v2474
  %2569 = vmatprep.subr.bf16.mxu0 %v2479
  %2570 = vmatpush1.bf16.msra.mxu0 %v2478
  %2571 = vmatprep.subr.bf16.mxu0 %v2483
  %2572 = vmatpush1.bf16.msra.mxu0 %v2482
  %2573 = vmatprep.subr.bf16.mxu0 0
  %2574 = vmatpush1.bf16.msra.mxu0 0
  %2575 = vmatprep.subr.bf16.mxu0 0
  %2576 = vmatpush1.bf16.msra.mxu0 0
  %2577 = vmatprep.subr.bf16.mxu0 0
  %2578 = vmatpush1.bf16.msra.mxu0 0
  %2579 = vmatprep.subr.bf16.mxu0 0
  %2580 = vmatpush1.bf16.msra.mxu0 0
  %2581 = vmatprep.subr.bf16.mxu0 0
  %2582 = vmatpush1.bf16.msra.mxu0 0
  %2583 = vmatprep.subr.bf16.mxu0 0
  %2584 = vmatpush1.bf16.msra.mxu0 0
  %2585 = vmatprep.subr.bf16.mxu0 0
  %2586 = vmatpush1.bf16.msra.mxu0 0
  %2587 = vmatprep.subr.bf16.mxu0 0
  %2588 = vmatpush1.bf16.msra.mxu0 0
  %2589 = vmatprep.mubr.bf16.mxu0 0
  %2590 = vmatmul.mubr.bf16.gmra.mrb[0].mxu0 %v2323
  %v2591 = vpop.f32.mrb[0].mxu0
  %v2592 = vadd.f32 0.0, %v2591
  %v2593 = vpop.f32.mrb[0].mxu0
  %v2594 = vadd.f32 0.0, %v2593
  %v2595 = vpop.f32.mrb[0].mxu0
  %v2596 = vpop.f32.mrb[0].mxu0
  %2597 = vdwg.mxu0
  %v2598 = vadd.f32 %v2319, %v2551
  %v2599 = vadd.f32 %v2320, %v2553
  %v2600 = vadd.f32 %v2321, %v2592
  %v2601 = vadd.f32 %v2322, %v2594
  %v2602 = vxor.u32 %v2598, 2147483648
  %v2603 = vmul.f32 %v2602, 1.442695
  %v2604 = vpow.pop %v2603
  %v2605 = vadd.f32 %v2604, 1.0
  %v2606 = vrcp.pop %v2605
  %v2607 = vmul.f32 1.0, %v2606
  %v2608 = vxor.u32 %v2599, 2147483648
  %v2609 = vmul.f32 %v2608, 1.442695
  %v2610 = vpow.pop %v2609
  %v2611 = vadd.f32 %v2610, 1.0
  %v2612 = vrcp.pop %v2611
  %v2613 = vmul.f32 1.0, %v2612
  %v2614 = vtanh.pop %v2600
  %v2615 = vxor.u32 %v2601, 2147483648
  %v2616 = vmul.f32 %v2615, 1.442695
  %v2617 = vpow.pop %v2616
  %v2618 = vadd.f32 %v2617, 1.0
  %v2619 = vrcp.pop %v2618
  %v2620 = vmul.f32 1.0, %v2619
  %v2621 = vmul.f32 %v2613, %v2311
  %v2622 = vmul.f32 %v2607, %v2614
  %v2623 = vadd.f32 %v2621, %v2622
  %v2624 = vtanh.pop %v2623
  %v2625 = vmul.f32 %v2620, %v2624
  %s2626 = scalar_lea.vmem [#allocation3], 32
  %2627 = vst [vmem:[%s2626] sm:$0xff] %v2625
  %s2628 = smul.u32 5, 4
  %s2629 = smul.addr %s2628, 8
  %s2630 = scalar_lea.vmem [#allocation2], %s2629
  %v2631 = vld [vmem:[%s2630] sm:$0xff]
  %v2632 = vld [vmem:[%s2630 + $0x8] sm:$0xff]
  %v2633 = vld [vmem:[%s2630 + $0x10] sm:$0xff]
  %v2634 = vld [vmem:[%s2630 + $0x18] sm:$0xff]
  %v2635 = vpack.c.bf16 %v2625, %v2625
  %v2636 = vld [vmem:[%s4] sm:$0xff]
  %v2637 = vld [vmem:[%s4 + $0x8] sm:$0xff]
  %v2638 = vld [vmem:[%s4 + $0x10] sm:$0xff]
  %v2639 = vld [vmem:[%s4 + $0x18] sm:$0xff]
  %v2640 = vld [vmem:[%s4 + $0x20] sm:$0xff]
  %v2641 = vld [vmem:[%s4 + $0x28] sm:$0xff]
  %v2642 = vld [vmem:[%s4 + $0x30] sm:$0xff]
  %v2643 = vld [vmem:[%s4 + $0x38] sm:$0xff]
  %v2644 = vld [vmem:[%s4 + $0x40] sm:$0xff]
  %v2645 = vld [vmem:[%s4 + $0x48] sm:$0xff]
  %v2646 = vld [vmem:[%s4 + $0x50] sm:$0xff]
  %v2647 = vld [vmem:[%s4 + $0x58] sm:$0xff]
  %v2648 = vld [vmem:[%s4 + $0x60] sm:$0xff]
  %v2649 = vld [vmem:[%s4 + $0x68] sm:$0xff]
  %v2650 = vld [vmem:[%s4 + $0x70] sm:$0xff]
  %v2651 = vld [vmem:[%s4 + $0x78] sm:$0xff]
  %v2652 = vld [vmem:[%s4 + $0x80] sm:$0xff]
  %v2653 = vld [vmem:[%s4 + $0x88] sm:$0xff]
  %v2654 = vld [vmem:[%s4 + $0x90] sm:$0xff]
  %v2655 = vld [vmem:[%s4 + $0x98] sm:$0xff]
  %v2656 = vld [vmem:[%s4 + $0xa0] sm:$0xff]
  %v2657 = vld [vmem:[%s4 + $0xa8] sm:$0xff]
  %v2658 = vld [vmem:[%s4 + $0xb0] sm:$0xff]
  %v2659 = vld [vmem:[%s4 + $0xb8] sm:$0xff]
  %v2660 = vld [vmem:[%s4 + $0xc0] sm:$0xff]
  %v2661 = vld [vmem:[%s4 + $0xc8] sm:$0xff]
  %v2662 = vld [vmem:[%s4 + $0xd0] sm:$0xff]
  %v2663 = vld [vmem:[%s4 + $0xd8] sm:$0xff]
  %v2664 = vld [vmem:[%s4 + $0xe0] sm:$0xff]
  %v2665 = vld [vmem:[%s4 + $0xe8] sm:$0xff]
  %v2666 = vld [vmem:[%s4 + $0xf0] sm:$0xff]
  %v2667 = vld [vmem:[%s4 + $0xf8] sm:$0xff]
  %v2700 = vunpack.c.l.b16 %v2636
  %v2701 = vunpack.c.h.b16 %v2636
  %v2702 = vunpack.c.l.b16 %v2637
  %v2703 = vunpack.c.h.b16 %v2637
  %v2704 = vunpack.c.l.b16 %v2638
  %v2705 = vunpack.c.h.b16 %v2638
  %v2706 = vunpack.c.l.b16 %v2639
  %v2707 = vunpack.c.h.b16 %v2639
  %v2708 = vunpack.c.l.b16 %v2640
  %v2709 = vunpack.c.h.b16 %v2640
  %v2710 = vunpack.c.l.b16 %v2641
  %v2711 = vunpack.c.h.b16 %v2641
  %v2712 = vunpack.c.l.b16 %v2642
  %v2713 = vunpack.c.h.b16 %v2642
  %v2714 = vunpack.c.l.b16 %v2643
  %v2715 = vunpack.c.h.b16 %v2643
  %v2716 = vunpack.c.l.b16 %v2644
  %v2717 = vunpack.c.h.b16 %v2644
  %v2718 = vunpack.c.l.b16 %v2645
  %v2719 = vunpack.c.h.b16 %v2645
  %v2720 = vunpack.c.l.b16 %v2646
  %v2721 = vunpack.c.h.b16 %v2646
  %v2722 = vunpack.c.l.b16 %v2647
  %v2723 = vunpack.c.h.b16 %v2647
  %v2724 = vunpack.c.l.b16 %v2648
  %v2725 = vunpack.c.h.b16 %v2648
  %v2726 = vunpack.c.l.b16 %v2649
  %v2727 = vunpack.c.h.b16 %v2649
  %v2728 = vunpack.c.l.b16 %v2650
  %v2729 = vunpack.c.h.b16 %v2650
  %v2730 = vunpack.c.l.b16 %v2651
  %v2731 = vunpack.c.h.b16 %v2651
  %v2732 = vunpack.c.l.b16 %v2652
  %v2733 = vunpack.c.h.b16 %v2652
  %v2734 = vunpack.c.l.b16 %v2653
  %v2735 = vunpack.c.h.b16 %v2653
  %v2736 = vunpack.c.l.b16 %v2654
  %v2737 = vunpack.c.h.b16 %v2654
  %v2738 = vunpack.c.l.b16 %v2655
  %v2739 = vunpack.c.h.b16 %v2655
  %v2740 = vunpack.c.l.b16 %v2656
  %v2741 = vunpack.c.h.b16 %v2656
  %v2742 = vunpack.c.l.b16 %v2657
  %v2743 = vunpack.c.h.b16 %v2657
  %v2744 = vunpack.c.l.b16 %v2658
  %v2745 = vunpack.c.h.b16 %v2658
  %v2746 = vunpack.c.l.b16 %v2659
  %v2747 = vunpack.c.h.b16 %v2659
  %v2748 = vunpack.c.l.b16 %v2660
  %v2749 = vunpack.c.h.b16 %v2660
  %v2750 = vunpack.c.l.b16 %v2661
  %v2751 = vunpack.c.h.b16 %v2661
  %v2752 = vunpack.c.l.b16 %v2662
  %v2753 = vunpack.c.h.b16 %v2662
  %v2754 = vunpack.c.l.b16 %v2663
  %v2755 = vunpack.c.h.b16 %v2663
  %v2756 = vunpack.c.l.b16 %v2664
  %v2757 = vunpack.c.h.b16 %v2664
  %v2758 = vunpack.c.l.b16 %v2665
  %v2759 = vunpack.c.h.b16 %v2665
  %v2760 = vunpack.c.l.b16 %v2666
  %v2761 = vunpack.c.h.b16 %v2666
  %v2762 = vunpack.c.l.b16 %v2667
  %v2763 = vunpack.c.h.b16 %v2667
  %v2764 = vpack.c.b16 %v2704, %v2700
  %v2765 = vpack.c.b16 %v2705, %v2701
  %v2766 = vpack.c.b16 %v2706, %v2702
  %v2767 = vpack.c.b16 %v2707, %v2703
  %v2768 = vpack.c.b16 %v2712, %v2708
  %v2769 = vpack.c.b16 %v2713, %v2709
  %v2770 = vpack.c.b16 %v2714, %v2710
  %v2771 = vpack.c.b16 %v2715, %v2711
  %v2772 = vpack.c.b16 %v2720, %v2716
  %v2773 = vpack.c.b16 %v2721, %v2717
  %v2774 = vpack.c.b16 %v2722, %v2718
  %v2775 = vpack.c.b16 %v2723, %v2719
  %v2776 = vpack.c.b16 %v2728, %v2724
  %v2777 = vpack.c.b16 %v2729, %v2725
  %v2778 = vpack.c.b16 %v2730, %v2726
  %v2779 = vpack.c.b16 %v2731, %v2727
  %v2780 = vpack.c.b16 %v2736, %v2732
  %v2781 = vpack.c.b16 %v2737, %v2733
  %v2782 = vpack.c.b16 %v2738, %v2734
  %v2783 = vpack.c.b16 %v2739, %v2735
  %v2784 = vpack.c.b16 %v2744, %v2740
  %v2785 = vpack.c.b16 %v2745, %v2741
  %v2786 = vpack.c.b16 %v2746, %v2742
  %v2787 = vpack.c.b16 %v2747, %v2743
  %v2788 = vpack.c.b16 %v2752, %v2748
  %v2789 = vpack.c.b16 %v2753, %v2749
  %v2790 = vpack.c.b16 %v2754, %v2750
  %v2791 = vpack.c.b16 %v2755, %v2751
  %v2792 = vpack.c.b16 %v2760, %v2756
  %v2793 = vpack.c.b16 %v2761, %v2757
  %v2794 = vpack.c.b16 %v2762, %v2758
  %v2795 = vpack.c.b16 %v2763, %v2759
  %2828 = vmatprep.subr.bf16.mxu0 %v2765
  %2829 = vmatpush1.bf16.msra.mxu0 %v2764
  %2830 = vmatprep.subr.bf16.mxu0 %v2769
  %2831 = vmatpush1.bf16.msra.mxu0 %v2768
  %2832 = vmatprep.subr.bf16.mxu0 %v2773
  %2833 = vmatpush1.bf16.msra.mxu0 %v2772
  %2834 = vmatprep.subr.bf16.mxu0 %v2777
  %2835 = vmatpush1.bf16.msra.mxu0 %v2776
  %2836 = vmatprep.subr.bf16.mxu0 %v2781
  %2837 = vmatpush1.bf16.msra.mxu0 %v2780
  %2838 = vmatprep.subr.bf16.mxu0 %v2785
  %2839 = vmatpush1.bf16.msra.mxu0 %v2784
  %2840 = vmatprep.subr.bf16.mxu0 %v2789
  %2841 = vmatpush1.bf16.msra.mxu0 %v2788
  %2842 = vmatprep.subr.bf16.mxu0 %v2793
  %2843 = vmatpush1.bf16.msra.mxu0 %v2792
  %2844 = vmatprep.subr.bf16.mxu0 0
  %2845 = vmatpush1.bf16.msra.mxu0 0
  %2846 = vmatprep.subr.bf16.mxu0 0
  %2847 = vmatpush1.bf16.msra.mxu0 0
  %2848 = vmatprep.subr.bf16.mxu0 0
  %2849 = vmatpush1.bf16.msra.mxu0 0
  %2850 = vmatprep.subr.bf16.mxu0 0
  %2851 = vmatpush1.bf16.msra.mxu0 0
  %2852 = vmatprep.subr.bf16.mxu0 0
  %2853 = vmatpush1.bf16.msra.mxu0 0
  %2854 = vmatprep.subr.bf16.mxu0 0
  %2855 = vmatpush1.bf16.msra.mxu0 0
  %2856 = vmatprep.subr.bf16.mxu0 0
  %2857 = vmatpush1.bf16.msra.mxu0 0
  %2858 = vmatprep.subr.bf16.mxu0 0
  %2859 = vmatpush1.bf16.msra.mxu0 0
  %2860 = vmatprep.mubr.bf16.mxu0 0
  %2861 = vmatmul.mubr.bf16.gmra.mrb[0].mxu0 %v2635
  %v2862 = vpop.f32.mrb[0].mxu0
  %v2863 = vadd.f32 0.0, %v2862
  %v2864 = vpop.f32.mrb[0].mxu0
  %v2865 = vadd.f32 0.0, %v2864
  %v2866 = vpop.f32.mrb[0].mxu0
  %v2867 = vpop.f32.mrb[0].mxu0
  %2868 = vdwg.mxu0
  %2869 = vmatprep.subr.bf16.mxu0 %v2767
  %2870 = vmatpush1.bf16.msra.mxu0 %v2766
  %2871 = vmatprep.subr.bf16.mxu0 %v2771
  %2872 = vmatpush1.bf16.msra.mxu0 %v2770
  %2873 = vmatprep.subr.bf16.mxu0 %v2775
  %2874 = vmatpush1.bf16.msra.mxu0 %v2774
  %2875 = vmatprep.subr.bf16.mxu0 %v2779
  %2876 = vmatpush1.bf16.msra.mxu0 %v2778
  %2877 = vmatprep.subr.bf16.mxu0 %v2783
  %2878 = vmatpush1.bf16.msra.mxu0 %v2782
  %2879 = vmatprep.subr.bf16.mxu0 %v2787
  %2880 = vmatpush1.bf16.msra.mxu0 %v2786
  %2881 = vmatprep.subr.bf16.mxu0 %v2791
  %2882 = vmatpush1.bf16.msra.mxu0 %v2790
  %2883 = vmatprep.subr.bf16.mxu0 %v2795
  %2884 = vmatpush1.bf16.msra.mxu0 %v2794
  %2885 = vmatprep.subr.bf16.mxu0 0
  %2886 = vmatpush1.bf16.msra.mxu0 0
  %2887 = vmatprep.subr.bf16.mxu0 0
  %2888 = vmatpush1.bf16.msra.mxu0 0
  %2889 = vmatprep.subr.bf16.mxu0 0
  %2890 = vmatpush1.bf16.msra.mxu0 0
  %2891 = vmatprep.subr.bf16.mxu0 0
  %2892 = vmatpush1.bf16.msra.mxu0 0
  %2893 = vmatprep.subr.bf16.mxu0 0
  %2894 = vmatpush1.bf16.msra.mxu0 0
  %2895 = vmatprep.subr.bf16.mxu0 0
  %2896 = vmatpush1.bf16.msra.mxu0 0
  %2897 = vmatprep.subr.bf16.mxu0 0
  %2898 = vmatpush1.bf16.msra.mxu0 0
  %2899 = vmatprep.subr.bf16.mxu0 0
  %2900 = vmatpush1.bf16.msra.mxu0 0
  %2901 = vmatprep.mubr.bf16.mxu0 0
  %2902 = vmatmul.mubr.bf16.gmra.mrb[0].mxu0 %v2635
  %v2903 = vpop.f32.mrb[0].mxu0
  %v2904 = vadd.f32 0.0, %v2903
  %v2905 = vpop.f32.mrb[0].mxu0
  %v2906 = vadd.f32 0.0, %v2905
  %v2907 = vpop.f32.mrb[0].mxu0
  %v2908 = vpop.f32.mrb[0].mxu0
  %2909 = vdwg.mxu0
  %v2910 = vadd.f32 %v2631, %v2863
  %v2911 = vadd.f32 %v2632, %v2865
  %v2912 = vadd.f32 %v2633, %v2904
  %v2913 = vadd.f32 %v2634, %v2906
  %v2914 = vxor.u32 %v2910, 2147483648
  %v2915 = vmul.f32 %v2914, 1.442695
  %v2916 = vpow.pop %v2915
  %v2917 = vadd.f32 %v2916, 1.0
  %v2918 = vrcp.pop %v2917
  %v2919 = vmul.f32 1.0, %v2918
  %v2920 = vxor.u32 %v2911, 2147483648
  %v2921 = vmul.f32 %v2920, 1.442695
  %v2922 = vpow.pop %v2921
  %v2923 = vadd.f32 %v2922, 1.0
  %v2924 = vrcp.pop %v2923
  %v2925 = vmul.f32 1.0, %v2924
  %v2926 = vtanh.pop %v2912
  %v2927 = vxor.u32 %v2913, 2147483648
  %v2928 = vmul.f32 %v2927, 1.442695
  %v2929 = vpow.pop %v2928
  %v2930 = vadd.f32 %v2929, 1.0
  %v2931 = vrcp.pop %v2930
  %v2932 = vmul.f32 1.0, %v2931
  %v2933 = vmul.f32 %v2925, %v2623
  %v2934 = vmul.f32 %v2919, %v2926
  %v2935 = vadd.f32 %v2933, %v2934
  %v2936 = vtanh.pop %v2935
  %v2937 = vmul.f32 %v2932, %v2936
  %s2938 = scalar_lea.vmem [#allocation3], 40
  %2939 = vst [vmem:[%s2938] sm:$0xff] %v2937
  %s2940 = smul.u32 6, 4
  %s2941 = smul.addr %s2940, 8
  %s2942 = scalar_lea.vmem [#allocation2], %s2941
  %v2943 = vld [vmem:[%s2942] sm:$0xff]
  %v2944 = vld [vmem:[%s2942 + $0x8] sm:$0xff]
  %v2945 = vld [vmem:[%s2942 + $0x10] sm:$0xff]
  %v2946 = vld [vmem:[%s2942 + $0x18] sm:$0xff]
  %v2947 = vpack.c.bf16 %v2937, %v2937
  %v2948 = vld [vmem:[%s4] sm:$0xff]
  %v2949 = vld [vmem:[%s4 + $0x8] sm:$0xff]
  %v2950 = vld [vmem:[%s4 + $0x10] sm:$0xff]
  %v2951 = vld [vmem:[%s4 + $0x18] sm:$0xff]
  %v2952 = vld [vmem:[%s4 + $0x20] sm:$0xff]
  %v2953 = vld [vmem:[%s4 + $0x28] sm:$0xff]
  %v2954 = vld [vmem:[%s4 + $0x30] sm:$0xff]
  %v2955 = vld [vmem:[%s4 + $0x38] sm:$0xff]
  %v2956 = vld [vmem:[%s4 + $0x40] sm:$0xff]
  %v2957 = vld [vmem:[%s4 + $0x48] sm:$0xff]
  %v2958 = vld [vmem:[%s4 + $0x50] sm:$0xff]
  %v2959 = vld [vmem:[%s4 + $0x58] sm:$0xff]
  %v2960 = vld [vmem:[%s4 + $0x60] sm:$0xff]
  %v2961 = vld [vmem:[%s4 + $0x68] sm:$0xff]
  %v2962 = vld [vmem:[%s4 + $0x70] sm:$0xff]
  %v2963 = vld [vmem:[%s4 + $0x78] sm:$0xff]
  %v2964 = vld [vmem:[%s4 + $0x80] sm:$0xff]
  %v2965 = vld [vmem:[%s4 + $0x88] sm:$0xff]
  %v2966 = vld [vmem:[%s4 + $0x90] sm:$0xff]
  %v2967 = vld [vmem:[%s4 + $0x98] sm:$0xff]
  %v2968 = vld [vmem:[%s4 + $0xa0] sm:$0xff]
  %v2969 = vld [vmem:[%s4 + $0xa8] sm:$0xff]
  %v2970 = vld [vmem:[%s4 + $0xb0] sm:$0xff]
  %v2971 = vld [vmem:[%s4 + $0xb8] sm:$0xff]
  %v2972 = vld [vmem:[%s4 + $0xc0] sm:$0xff]
  %v2973 = vld [vmem:[%s4 + $0xc8] sm:$0xff]
  %v2974 = vld [vmem:[%s4 + $0xd0] sm:$0xff]
  %v2975 = vld [vmem:[%s4 + $0xd8] sm:$0xff]
  %v2976 = vld [vmem:[%s4 + $0xe0] sm:$0xff]
  %v2977 = vld [vmem:[%s4 + $0xe8] sm:$0xff]
  %v2978 = vld [vmem:[%s4 + $0xf0] sm:$0xff]
  %v2979 = vld [vmem:[%s4 + $0xf8] sm:$0xff]
  %v3012 = vunpack.c.l.b16 %v2948
  %v3013 = vunpack.c.h.b16 %v2948
  %v3014 = vunpack.c.l.b16 %v2949
  %v3015 = vunpack.c.h.b16 %v2949
  %v3016 = vunpack.c.l.b16 %v2950
  %v3017 = vunpack.c.h.b16 %v2950
  %v3018 = vunpack.c.l.b16 %v2951
  %v3019 = vunpack.c.h.b16 %v2951
  %v3020 = vunpack.c.l.b16 %v2952
  %v3021 = vunpack.c.h.b16 %v2952
  %v3022 = vunpack.c.l.b16 %v2953
  %v3023 = vunpack.c.h.b16 %v2953
  %v3024 = vunpack.c.l.b16 %v2954
  %v3025 = vunpack.c.h.b16 %v2954
  %v3026 = vunpack.c.l.b16 %v2955
  %v3027 = vunpack.c.h.b16 %v2955
  %v3028 = vunpack.c.l.b16 %v2956
  %v3029 = vunpack.c.h.b16 %v2956
  %v3030 = vunpack.c.l.b16 %v2957
  %v3031 = vunpack.c.h.b16 %v2957
  %v3032 = vunpack.c.l.b16 %v2958
  %v3033 = vunpack.c.h.b16 %v2958
  %v3034 = vunpack.c.l.b16 %v2959
  %v3035 = vunpack.c.h.b16 %v2959
  %v3036 = vunpack.c.l.b16 %v2960
  %v3037 = vunpack.c.h.b16 %v2960
  %v3038 = vunpack.c.l.b16 %v2961
  %v3039 = vunpack.c.h.b16 %v2961
  %v3040 = vunpack.c.l.b16 %v2962
  %v3041 = vunpack.c.h.b16 %v2962
  %v3042 = vunpack.c.l.b16 %v2963
  %v3043 = vunpack.c.h.b16 %v2963
  %v3044 = vunpack.c.l.b16 %v2964
  %v3045 = vunpack.c.h.b16 %v2964
  %v3046 = vunpack.c.l.b16 %v2965
  %v3047 = vunpack.c.h.b16 %v2965
  %v3048 = vunpack.c.l.b16 %v2966
  %v3049 = vunpack.c.h.b16 %v2966
  %v3050 = vunpack.c.l.b16 %v2967
  %v3051 = vunpack.c.h.b16 %v2967
  %v3052 = vunpack.c.l.b16 %v2968
  %v3053 = vunpack.c.h.b16 %v2968
  %v3054 = vunpack.c.l.b16 %v2969
  %v3055 = vunpack.c.h.b16 %v2969
  %v3056 = vunpack.c.l.b16 %v2970
  %v3057 = vunpack.c.h.b16 %v2970
  %v3058 = vunpack.c.l.b16 %v2971
  %v3059 = vunpack.c.h.b16 %v2971
  %v3060 = vunpack.c.l.b16 %v2972
  %v3061 = vunpack.c.h.b16 %v2972
  %v3062 = vunpack.c.l.b16 %v2973
  %v3063 = vunpack.c.h.b16 %v2973
  %v3064 = vunpack.c.l.b16 %v2974
  %v3065 = vunpack.c.h.b16 %v2974
  %v3066 = vunpack.c.l.b16 %v2975
  %v3067 = vunpack.c.h.b16 %v2975
  %v3068 = vunpack.c.l.b16 %v2976
  %v3069 = vunpack.c.h.b16 %v2976
  %v3070 = vunpack.c.l.b16 %v2977
  %v3071 = vunpack.c.h.b16 %v2977
  %v3072 = vunpack.c.l.b16 %v2978
  %v3073 = vunpack.c.h.b16 %v2978
  %v3074 = vunpack.c.l.b16 %v2979
  %v3075 = vunpack.c.h.b16 %v2979
  %v3076 = vpack.c.b16 %v3016, %v3012
  %v3077 = vpack.c.b16 %v3017, %v3013
  %v3078 = vpack.c.b16 %v3018, %v3014
  %v3079 = vpack.c.b16 %v3019, %v3015
  %v3080 = vpack.c.b16 %v3024, %v3020
  %v3081 = vpack.c.b16 %v3025, %v3021
  %v3082 = vpack.c.b16 %v3026, %v3022
  %v3083 = vpack.c.b16 %v3027, %v3023
  %v3084 = vpack.c.b16 %v3032, %v3028
  %v3085 = vpack.c.b16 %v3033, %v3029
  %v3086 = vpack.c.b16 %v3034, %v3030
  %v3087 = vpack.c.b16 %v3035, %v3031
  %v3088 = vpack.c.b16 %v3040, %v3036
  %v3089 = vpack.c.b16 %v3041, %v3037
  %v3090 = vpack.c.b16 %v3042, %v3038
  %v3091 = vpack.c.b16 %v3043, %v3039
  %v3092 = vpack.c.b16 %v3048, %v3044
  %v3093 = vpack.c.b16 %v3049, %v3045
  %v3094 = vpack.c.b16 %v3050, %v3046
  %v3095 = vpack.c.b16 %v3051, %v3047
  %v3096 = vpack.c.b16 %v3056, %v3052
  %v3097 = vpack.c.b16 %v3057, %v3053
  %v3098 = vpack.c.b16 %v3058, %v3054
  %v3099 = vpack.c.b16 %v3059, %v3055
  %v3100 = vpack.c.b16 %v3064, %v3060
  %v3101 = vpack.c.b16 %v3065, %v3061
  %v3102 = vpack.c.b16 %v3066, %v3062
  %v3103 = vpack.c.b16 %v3067, %v3063
  %v3104 = vpack.c.b16 %v3072, %v3068
  %v3105 = vpack.c.b16 %v3073, %v3069
  %v3106 = vpack.c.b16 %v3074, %v3070
  %v3107 = vpack.c.b16 %v3075, %v3071
  %3140 = vmatprep.subr.bf16.mxu0 %v3077
  %3141 = vmatpush1.bf16.msra.mxu0 %v3076
  %3142 = vmatprep.subr.bf16.mxu0 %v3081
  %3143 = vmatpush1.bf16.msra.mxu0 %v3080
  %3144 = vmatprep.subr.bf16.mxu0 %v3085
  %3145 = vmatpush1.bf16.msra.mxu0 %v3084
  %3146 = vmatprep.subr.bf16.mxu0 %v3089
  %3147 = vmatpush1.bf16.msra.mxu0 %v3088
  %3148 = vmatprep.subr.bf16.mxu0 %v3093
  %3149 = vmatpush1.bf16.msra.mxu0 %v3092
  %3150 = vmatprep.subr.bf16.mxu0 %v3097
  %3151 = vmatpush1.bf16.msra.mxu0 %v3096
  %3152 = vmatprep.subr.bf16.mxu0 %v3101
  %3153 = vmatpush1.bf16.msra.mxu0 %v3100
  %3154 = vmatprep.subr.bf16.mxu0 %v3105
  %3155 = vmatpush1.bf16.msra.mxu0 %v3104
  %3156 = vmatprep.subr.bf16.mxu0 0
  %3157 = vmatpush1.bf16.msra.mxu0 0
  %3158 = vmatprep.subr.bf16.mxu0 0
  %3159 = vmatpush1.bf16.msra.mxu0 0
  %3160 = vmatprep.subr.bf16.mxu0 0
  %3161 = vmatpush1.bf16.msra.mxu0 0
  %3162 = vmatprep.subr.bf16.mxu0 0
  %3163 = vmatpush1.bf16.msra.mxu0 0
  %3164 = vmatprep.subr.bf16.mxu0 0
  %3165 = vmatpush1.bf16.msra.mxu0 0
  %3166 = vmatprep.subr.bf16.mxu0 0
  %3167 = vmatpush1.bf16.msra.mxu0 0
  %3168 = vmatprep.subr.bf16.mxu0 0
  %3169 = vmatpush1.bf16.msra.mxu0 0
  %3170 = vmatprep.subr.bf16.mxu0 0
  %3171 = vmatpush1.bf16.msra.mxu0 0
  %3172 = vmatprep.mubr.bf16.mxu0 0
  %3173 = vmatmul.mubr.bf16.gmra.mrb[0].mxu0 %v2947
  %v3174 = vpop.f32.mrb[0].mxu0
  %v3175 = vadd.f32 0.0, %v3174
  %v3176 = vpop.f32.mrb[0].mxu0
  %v3177 = vadd.f32 0.0, %v3176
  %v3178 = vpop.f32.mrb[0].mxu0
  %v3179 = vpop.f32.mrb[0].mxu0
  %3180 = vdwg.mxu0
  %3181 = vmatprep.subr.bf16.mxu0 %v3079
  %3182 = vmatpush1.bf16.msra.mxu0 %v3078
  %3183 = vmatprep.subr.bf16.mxu0 %v3083
  %3184 = vmatpush1.bf16.msra.mxu0 %v3082
  %3185 = vmatprep.subr.bf16.mxu0 %v3087
  %3186 = vmatpush1.bf16.msra.mxu0 %v3086
  %3187 = vmatprep.subr.bf16.mxu0 %v3091
  %3188 = vmatpush1.bf16.msra.mxu0 %v3090
  %3189 = vmatprep.subr.bf16.mxu0 %v3095
  %3190 = vmatpush1.bf16.msra.mxu0 %v3094
  %3191 = vmatprep.subr.bf16.mxu0 %v3099
  %3192 = vmatpush1.bf16.msra.mxu0 %v3098
  %3193 = vmatprep.subr.bf16.mxu0 %v3103
  %3194 = vmatpush1.bf16.msra.mxu0 %v3102
  %3195 = vmatprep.subr.bf16.mxu0 %v3107
  %3196 = vmatpush1.bf16.msra.mxu0 %v3106
  %3197 = vmatprep.subr.bf16.mxu0 0
  %3198 = vmatpush1.bf16.msra.mxu0 0
  %3199 = vmatprep.subr.bf16.mxu0 0
  %3200 = vmatpush1.bf16.msra.mxu0 0
  %3201 = vmatprep.subr.bf16.mxu0 0
  %3202 = vmatpush1.bf16.msra.mxu0 0
  %3203 = vmatprep.subr.bf16.mxu0 0
  %3204 = vmatpush1.bf16.msra.mxu0 0
  %3205 = vmatprep.subr.bf16.mxu0 0
  %3206 = vmatpush1.bf16.msra.mxu0 0
  %3207 = vmatprep.subr.bf16.mxu0 0
  %3208 = vmatpush1.bf16.msra.mxu0 0
  %3209 = vmatprep.subr.bf16.mxu0 0
  %3210 = vmatpush1.bf16.msra.mxu0 0
  %3211 = vmatprep.subr.bf16.mxu0 0
  %3212 = vmatpush1.bf16.msra.mxu0 0
  %3213 = vmatprep.mubr.bf16.mxu0 0
  %3214 = vmatmul.mubr.bf16.gmra.mrb[0].mxu0 %v2947
  %v3215 = vpop.f32.mrb[0].mxu0
  %v3216 = vadd.f32 0.0, %v3215
  %v3217 = vpop.f32.mrb[0].mxu0
  %v3218 = vadd.f32 0.0, %v3217
  %v3219 = vpop.f32.mrb[0].mxu0
  %v3220 = vpop.f32.mrb[0].mxu0
  %3221 = vdwg.mxu0
  %v3222 = vadd.f32 %v2943, %v3175
  %v3223 = vadd.f32 %v2944, %v3177
  %v3224 = vadd.f32 %v2945, %v3216
  %v3225 = vadd.f32 %v2946, %v3218
  %v3226 = vxor.u32 %v3222, 2147483648
  %v3227 = vmul.f32 %v3226, 1.442695
  %v3228 = vpow.pop %v3227
  %v3229 = vadd.f32 %v3228, 1.0
  %v3230 = vrcp.pop %v3229
  %v3231 = vmul.f32 1.0, %v3230
  %v3232 = vxor.u32 %v3223, 2147483648
  %v3233 = vmul.f32 %v3232, 1.442695
  %v3234 = vpow.pop %v3233
  %v3235 = vadd.f32 %v3234, 1.0
  %v3236 = vrcp.pop %v3235
  %v3237 = vmul.f32 1.0, %v3236
  %v3238 = vtanh.pop %v3224
  %v3239 = vxor.u32 %v3225, 2147483648
  %v3240 = vmul.f32 %v3239, 1.442695
  %v3241 = vpow.pop %v3240
  %v3242 = vadd.f32 %v3241, 1.0
  %v3243 = vrcp.pop %v3242
  %v3244 = vmul.f32 1.0, %v3243
  %v3245 = vmul.f32 %v3237, %v2935
  %v3246 = vmul.f32 %v3231, %v3238
  %v3247 = vadd.f32 %v3245, %v3246
  %v3248 = vtanh.pop %v3247
  %v3249 = vmul.f32 %v3244, %v3248
  %s3250 = scalar_lea.vmem [#allocation3], 48
  %3251 = vst [vmem:[%s3250] sm:$0xff] %v3249
  %s3252 = smul.u32 7, 4
  %s3253 = smul.addr %s3252, 8
  %s3254 = scalar_lea.vmem [#allocation2], %s3253
  %v3255 = vld [vmem:[%s3254] sm:$0xff]
  %v3256 = vld [vmem:[%s3254 + $0x8] sm:$0xff]
  %v3257 = vld [vmem:[%s3254 + $0x10] sm:$0xff]
  %v3258 = vld [vmem:[%s3254 + $0x18] sm:$0xff]
  %v3259 = vpack.c.bf16 %v3249, %v3249
  %v3260 = vld [vmem:[%s4] sm:$0xff]
  %v3261 = vld [vmem:[%s4 + $0x8] sm:$0xff]
  %v3262 = vld [vmem:[%s4 + $0x10] sm:$0xff]
  %v3263 = vld [vmem:[%s4 + $0x18] sm:$0xff]
  %v3264 = vld [vmem:[%s4 + $0x20] sm:$0xff]
  %v3265 = vld [vmem:[%s4 + $0x28] sm:$0xff]
  %v3266 = vld [vmem:[%s4 + $0x30] sm:$0xff]
  %v3267 = vld [vmem:[%s4 + $0x38] sm:$0xff]
  %v3268 = vld [vmem:[%s4 + $0x40] sm:$0xff]
  %v3269 = vld [vmem:[%s4 + $0x48] sm:$0xff]
  %v3270 = vld [vmem:[%s4 + $0x50] sm:$0xff]
  %v3271 = vld [vmem:[%s4 + $0x58] sm:$0xff]
  %v3272 = vld [vmem:[%s4 + $0x60] sm:$0xff]
  %v3273 = vld [vmem:[%s4 + $0x68] sm:$0xff]
  %v3274 = vld [vmem:[%s4 + $0x70] sm:$0xff]
  %v3275 = vld [vmem:[%s4 + $0x78] sm:$0xff]
  %v3276 = vld [vmem:[%s4 + $0x80] sm:$0xff]
  %v3277 = vld [vmem:[%s4 + $0x88] sm:$0xff]
  %v3278 = vld [vmem:[%s4 + $0x90] sm:$0xff]
  %v3279 = vld [vmem:[%s4 + $0x98] sm:$0xff]
  %v3280 = vld [vmem:[%s4 + $0xa0] sm:$0xff]
  %v3281 = vld [vmem:[%s4 + $0xa8] sm:$0xff]
  %v3282 = vld [vmem:[%s4 + $0xb0] sm:$0xff]
  %v3283 = vld [vmem:[%s4 + $0xb8] sm:$0xff]
  %v3284 = vld [vmem:[%s4 + $0xc0] sm:$0xff]
  %v3285 = vld [vmem:[%s4 + $0xc8] sm:$0xff]
  %v3286 = vld [vmem:[%s4 + $0xd0] sm:$0xff]
  %v3287 = vld [vmem:[%s4 + $0xd8] sm:$0xff]
  %v3288 = vld [vmem:[%s4 + $0xe0] sm:$0xff]
  %v3289 = vld [vmem:[%s4 + $0xe8] sm:$0xff]
  %v3290 = vld [vmem:[%s4 + $0xf0] sm:$0xff]
  %v3291 = vld [vmem:[%s4 + $0xf8] sm:$0xff]
  %v3324 = vunpack.c.l.b16 %v3260
  %v3325 = vunpack.c.h.b16 %v3260
  %v3326 = vunpack.c.l.b16 %v3261
  %v3327 = vunpack.c.h.b16 %v3261
  %v3328 = vunpack.c.l.b16 %v3262
  %v3329 = vunpack.c.h.b16 %v3262
  %v3330 = vunpack.c.l.b16 %v3263
  %v3331 = vunpack.c.h.b16 %v3263
  %v3332 = vunpack.c.l.b16 %v3264
  %v3333 = vunpack.c.h.b16 %v3264
  %v3334 = vunpack.c.l.b16 %v3265
  %v3335 = vunpack.c.h.b16 %v3265
  %v3336 = vunpack.c.l.b16 %v3266
  %v3337 = vunpack.c.h.b16 %v3266
  %v3338 = vunpack.c.l.b16 %v3267
  %v3339 = vunpack.c.h.b16 %v3267
  %v3340 = vunpack.c.l.b16 %v3268
  %v3341 = vunpack.c.h.b16 %v3268
  %v3342 = vunpack.c.l.b16 %v3269
  %v3343 = vunpack.c.h.b16 %v3269
  %v3344 = vunpack.c.l.b16 %v3270
  %v3345 = vunpack.c.h.b16 %v3270
  %v3346 = vunpack.c.l.b16 %v3271
  %v3347 = vunpack.c.h.b16 %v3271
  %v3348 = vunpack.c.l.b16 %v3272
  %v3349 = vunpack.c.h.b16 %v3272
  %v3350 = vunpack.c.l.b16 %v3273
  %v3351 = vunpack.c.h.b16 %v3273
  %v3352 = vunpack.c.l.b16 %v3274
  %v3353 = vunpack.c.h.b16 %v3274
  %v3354 = vunpack.c.l.b16 %v3275
  %v3355 = vunpack.c.h.b16 %v3275
  %v3356 = vunpack.c.l.b16 %v3276
  %v3357 = vunpack.c.h.b16 %v3276
  %v3358 = vunpack.c.l.b16 %v3277
  %v3359 = vunpack.c.h.b16 %v3277
  %v3360 = vunpack.c.l.b16 %v3278
  %v3361 = vunpack.c.h.b16 %v3278
  %v3362 = vunpack.c.l.b16 %v3279
  %v3363 = vunpack.c.h.b16 %v3279
  %v3364 = vunpack.c.l.b16 %v3280
  %v3365 = vunpack.c.h.b16 %v3280
  %v3366 = vunpack.c.l.b16 %v3281
  %v3367 = vunpack.c.h.b16 %v3281
  %v3368 = vunpack.c.l.b16 %v3282
  %v3369 = vunpack.c.h.b16 %v3282
  %v3370 = vunpack.c.l.b16 %v3283
  %v3371 = vunpack.c.h.b16 %v3283
  %v3372 = vunpack.c.l.b16 %v3284
  %v3373 = vunpack.c.h.b16 %v3284
  %v3374 = vunpack.c.l.b16 %v3285
  %v3375 = vunpack.c.h.b16 %v3285
  %v3376 = vunpack.c.l.b16 %v3286
  %v3377 = vunpack.c.h.b16 %v3286
  %v3378 = vunpack.c.l.b16 %v3287
  %v3379 = vunpack.c.h.b16 %v3287
  %v3380 = vunpack.c.l.b16 %v3288
  %v3381 = vunpack.c.h.b16 %v3288
  %v3382 = vunpack.c.l.b16 %v3289
  %v3383 = vunpack.c.h.b16 %v3289
  %v3384 = vunpack.c.l.b16 %v3290
  %v3385 = vunpack.c.h.b16 %v3290
  %v3386 = vunpack.c.l.b16 %v3291
  %v3387 = vunpack.c.h.b16 %v3291
  %v3388 = vpack.c.b16 %v3328, %v3324
  %v3389 = vpack.c.b16 %v3329, %v3325
  %v3390 = vpack.c.b16 %v3330, %v3326
  %v3391 = vpack.c.b16 %v3331, %v3327
  %v3392 = vpack.c.b16 %v3336, %v3332
  %v3393 = vpack.c.b16 %v3337, %v3333
  %v3394 = vpack.c.b16 %v3338, %v3334
  %v3395 = vpack.c.b16 %v3339, %v3335
  %v3396 = vpack.c.b16 %v3344, %v3340
  %v3397 = vpack.c.b16 %v3345, %v3341
  %v3398 = vpack.c.b16 %v3346, %v3342
  %v3399 = vpack.c.b16 %v3347, %v3343
  %v3400 = vpack.c.b16 %v3352, %v3348
  %v3401 = vpack.c.b16 %v3353, %v3349
  %v3402 = vpack.c.b16 %v3354, %v3350
  %v3403 = vpack.c.b16 %v3355, %v3351
  %v3404 = vpack.c.b16 %v3360, %v3356
  %v3405 = vpack.c.b16 %v3361, %v3357
  %v3406 = vpack.c.b16 %v3362, %v3358
  %v3407 = vpack.c.b16 %v3363, %v3359
  %v3408 = vpack.c.b16 %v3368, %v3364
  %v3409 = vpack.c.b16 %v3369, %v3365
  %v3410 = vpack.c.b16 %v3370, %v3366
  %v3411 = vpack.c.b16 %v3371, %v3367
  %v3412 = vpack.c.b16 %v3376, %v3372
  %v3413 = vpack.c.b16 %v3377, %v3373
  %v3414 = vpack.c.b16 %v3378, %v3374
  %v3415 = vpack.c.b16 %v3379, %v3375
  %v3416 = vpack.c.b16 %v3384, %v3380
  %v3417 = vpack.c.b16 %v3385, %v3381
  %v3418 = vpack.c.b16 %v3386, %v3382
  %v3419 = vpack.c.b16 %v3387, %v3383
  %3452 = vmatprep.subr.bf16.mxu0 %v3389
  %3453 = vmatpush1.bf16.msra.mxu0 %v3388
  %3454 = vmatprep.subr.bf16.mxu0 %v3393
  %3455 = vmatpush1.bf16.msra.mxu0 %v3392
  %3456 = vmatprep.subr.bf16.mxu0 %v3397
  %3457 = vmatpush1.bf16.msra.mxu0 %v3396
  %3458 = vmatprep.subr.bf16.mxu0 %v3401
  %3459 = vmatpush1.bf16.msra.mxu0 %v3400
  %3460 = vmatprep.subr.bf16.mxu0 %v3405
  %3461 = vmatpush1.bf16.msra.mxu0 %v3404
  %3462 = vmatprep.subr.bf16.mxu0 %v3409
  %3463 = vmatpush1.bf16.msra.mxu0 %v3408
  %3464 = vmatprep.subr.bf16.mxu0 %v3413
  %3465 = vmatpush1.bf16.msra.mxu0 %v3412
  %3466 = vmatprep.subr.bf16.mxu0 %v3417
  %3467 = vmatpush1.bf16.msra.mxu0 %v3416
  %3468 = vmatprep.subr.bf16.mxu0 0
  %3469 = vmatpush1.bf16.msra.mxu0 0
  %3470 = vmatprep.subr.bf16.mxu0 0
  %3471 = vmatpush1.bf16.msra.mxu0 0
  %3472 = vmatprep.subr.bf16.mxu0 0
  %3473 = vmatpush1.bf16.msra.mxu0 0
  %3474 = vmatprep.subr.bf16.mxu0 0
  %3475 = vmatpush1.bf16.msra.mxu0 0
  %3476 = vmatprep.subr.bf16.mxu0 0
  %3477 = vmatpush1.bf16.msra.mxu0 0
  %3478 = vmatprep.subr.bf16.mxu0 0
  %3479 = vmatpush1.bf16.msra.mxu0 0
  %3480 = vmatprep.subr.bf16.mxu0 0
  %3481 = vmatpush1.bf16.msra.mxu0 0
  %3482 = vmatprep.subr.bf16.mxu0 0
  %3483 = vmatpush1.bf16.msra.mxu0 0
  %3484 = vmatprep.mubr.bf16.mxu0 0
  %3485 = vmatmul.mubr.bf16.gmra.mrb[0].mxu0 %v3259
  %v3486 = vpop.f32.mrb[0].mxu0
  %v3487 = vadd.f32 0.0, %v3486
  %v3488 = vpop.f32.mrb[0].mxu0
  %v3489 = vadd.f32 0.0, %v3488
  %v3490 = vpop.f32.mrb[0].mxu0
  %v3491 = vpop.f32.mrb[0].mxu0
  %3492 = vdwg.mxu0
  %3493 = vmatprep.subr.bf16.mxu0 %v3391
  %3494 = vmatpush1.bf16.msra.mxu0 %v3390
  %3495 = vmatprep.subr.bf16.mxu0 %v3395
  %3496 = vmatpush1.bf16.msra.mxu0 %v3394
  %3497 = vmatprep.subr.bf16.mxu0 %v3399
  %3498 = vmatpush1.bf16.msra.mxu0 %v3398
  %3499 = vmatprep.subr.bf16.mxu0 %v3403
  %3500 = vmatpush1.bf16.msra.mxu0 %v3402
  %3501 = vmatprep.subr.bf16.mxu0 %v3407
  %3502 = vmatpush1.bf16.msra.mxu0 %v3406
  %3503 = vmatprep.subr.bf16.mxu0 %v3411
  %3504 = vmatpush1.bf16.msra.mxu0 %v3410
  %3505 = vmatprep.subr.bf16.mxu0 %v3415
  %3506 = vmatpush1.bf16.msra.mxu0 %v3414
  %3507 = vmatprep.subr.bf16.mxu0 %v3419
  %3508 = vmatpush1.bf16.msra.mxu0 %v3418
  %3509 = vmatprep.subr.bf16.mxu0 0
  %3510 = vmatpush1.bf16.msra.mxu0 0
  %3511 = vmatprep.subr.bf16.mxu0 0
  %3512 = vmatpush1.bf16.msra.mxu0 0
  %3513 = vmatprep.subr.bf16.mxu0 0
  %3514 = vmatpush1.bf16.msra.mxu0 0
  %3515 = vmatprep.subr.bf16.mxu0 0
  %3516 = vmatpush1.bf16.msra.mxu0 0
  %3517 = vmatprep.subr.bf16.mxu0 0
  %3518 = vmatpush1.bf16.msra.mxu0 0
  %3519 = vmatprep.subr.bf16.mxu0 0
  %3520 = vmatpush1.bf16.msra.mxu0 0
  %3521 = vmatprep.subr.bf16.mxu0 0
  %3522 = vmatpush1.bf16.msra.mxu0 0
  %3523 = vmatprep.subr.bf16.mxu0 0
  %3524 = vmatpush1.bf16.msra.mxu0 0
  %3525 = vmatprep.mubr.bf16.mxu0 0
  %3526 = vmatmul.mubr.bf16.gmra.mrb[0].mxu0 %v3259
  %v3527 = vpop.f32.mrb[0].mxu0
  %v3528 = vadd.f32 0.0, %v3527
  %v3529 = vpop.f32.mrb[0].mxu0
  %v3530 = vadd.f32 0.0, %v3529
  %v3531 = vpop.f32.mrb[0].mxu0
  %v3532 = vpop.f32.mrb[0].mxu0
  %3533 = vdwg.mxu0
  %v3534 = vadd.f32 %v3255, %v3487
  %v3535 = vadd.f32 %v3256, %v3489
  %v3536 = vadd.f32 %v3257, %v3528
  %v3537 = vadd.f32 %v3258, %v3530
  %v3538 = vxor.u32 %v3534, 2147483648
  %v3539 = vmul.f32 %v3538, 1.442695
  %v3540 = vpow.pop %v3539
  %v3541 = vadd.f32 %v3540, 1.0
  %v3542 = vrcp.pop %v3541
  %v3543 = vmul.f32 1.0, %v3542
  %v3544 = vxor.u32 %v3535, 2147483648
  %v3545 = vmul.f32 %v3544, 1.442695
  %v3546 = vpow.pop %v3545
  %v3547 = vadd.f32 %v3546, 1.0
  %v3548 = vrcp.pop %v3547
  %v3549 = vmul.f32 1.0, %v3548
  %v3550 = vtanh.pop %v3536
  %v3551 = vxor.u32 %v3537, 2147483648
  %v3552 = vmul.f32 %v3551, 1.442695
  %v3553 = vpow.pop %v3552
  %v3554 = vadd.f32 %v3553, 1.0
  %v3555 = vrcp.pop %v3554
  %v3556 = vmul.f32 1.0, %v3555
  %v3557 = vmul.f32 %v3549, %v3247
  %v3558 = vmul.f32 %v3543, %v3550
  %v3559 = vadd.f32 %v3557, %v3558
  %v3560 = vtanh.pop %v3559
  %v3561 = vmul.f32 %v3556, %v3560
  %s3562 = scalar_lea.vmem [#allocation3], 56
  %3563 = vst [vmem:[%s3562] sm:$0xff] %v3561
  %s3564 = smul.u32 4, 16
  %s3565 = smul.u32 %s3564, 4
  %s3566 = sshll.u32 %s3565, 4
  %3567 = dma.done [#allocation6], %s3566
  %s3568 = sshll.u32 %s3565, 4
  %3569 = dma.done %s341, %s3568
  %v3570 = vld [vmem:[#allocation3] sm:$0xff]
  %v3571 = vld [vmem:[#allocation3 + $0x8] sm:$0xff]
  %v3572 = vld [vmem:[#allocation3 + $0x10] sm:$0xff]
  %v3573 = vld [vmem:[#allocation3 + $0x18] sm:$0xff]
  %v3574 = vld [vmem:[#allocation3 + $0x20] sm:$0xff]
  %v3575 = vld [vmem:[#allocation3 + $0x28] sm:$0xff]
  %v3576 = vld [vmem:[#allocation3 + $0x30] sm:$0xff]
  %v3577 = vld [vmem:[#allocation3 + $0x38] sm:$0xff]
  %v3578 = vpack.c.bf16 %v3571, %v3570
  %v3579 = vpack.c.bf16 %v3573, %v3572
  %v3580 = vpack.c.bf16 %v3575, %v3574
  %v3581 = vpack.c.bf16 %v3577, %v3576
  %v3582 = vld [vmem:[#allocation4] sm:$0xff]
  %v3583 = vld [vmem:[#allocation4 + $0x8] sm:$0xff]
  %v3584 = vld [vmem:[#allocation4 + $0x10] sm:$0xff]
  %v3585 = vld [vmem:[#allocation4 + $0x18] sm:$0xff]
  %v3586 = vld [vmem:[#allocation4 + $0x20] sm:$0xff]
  %v3587 = vld [vmem:[#allocation4 + $0x28] sm:$0xff]
  %v3588 = vld [vmem:[#allocation4 + $0x30] sm:$0xff]
  %v3589 = vld [vmem:[#allocation4 + $0x38] sm:$0xff]
  %v3590 = vld [vmem:[#allocation4 + $0x40] sm:$0xff]
  %v3591 = vld [vmem:[#allocation4 + $0x48] sm:$0xff]
  %v3592 = vld [vmem:[#allocation4 + $0x50] sm:$0xff]
  %v3593 = vld [vmem:[#allocation4 + $0x58] sm:$0xff]
  %v3594 = vld [vmem:[#allocation4 + $0x60] sm:$0xff]
  %v3595 = vld [vmem:[#allocation4 + $0x68] sm:$0xff]
  %v3596 = vld [vmem:[#allocation4 + $0x70] sm:$0xff]
  %v3597 = vld [vmem:[#allocation4 + $0x78] sm:$0xff]
  %v3598 = vld [vmem:[#allocation4 + $0x80] sm:$0xff]
  %v3599 = vld [vmem:[#allocation4 + $0x88] sm:$0xff]
  %v3600 = vld [vmem:[#allocation4 + $0x90] sm:$0xff]
  %v3601 = vld [vmem:[#allocation4 + $0x98] sm:$0xff]
  %v3602 = vld [vmem:[#allocation4 + $0xa0] sm:$0xff]
  %v3603 = vld [vmem:[#allocation4 + $0xa8] sm:$0xff]
  %v3604 = vld [vmem:[#allocation4 + $0xb0] sm:$0xff]
  %v3605 = vld [vmem:[#allocation4 + $0xb8] sm:$0xff]
  %v3606 = vld [vmem:[#allocation4 + $0xc0] sm:$0xff]
  %v3607 = vld [vmem:[#allocation4 + $0xc8] sm:$0xff]
  %v3608 = vld [vmem:[#allocation4 + $0xd0] sm:$0xff]
  %v3609 = vld [vmem:[#allocation4 + $0xd8] sm:$0xff]
  %v3610 = vld [vmem:[#allocation4 + $0xe0] sm:$0xff]
  %v3611 = vld [vmem:[#allocation4 + $0xe8] sm:$0xff]
  %v3612 = vld [vmem:[#allocation4 + $0xf0] sm:$0xff]
  %v3613 = vld [vmem:[#allocation4 + $0xf8] sm:$0xff]
  %v3614 = vld [vmem:[%s7] sm:$0xf]
  %v3616 = vlaneseq
  %v3617 = vshrl.u32 %v3616, 7
  %v3618 = vsub.s32 0, %v3617
  %v3619 = vrot.slane %v3614, %v3618
  %v3620 = vlaneseq
  %v3621 = vshrl.u32 %v3620, 7
  %v3622 = vsub.s32 1, %v3621
  %v3623 = vrot.slane %v3614, %v3622
  %v3624 = vlaneseq
  %v3625 = vshrl.u32 %v3624, 7
  %v3626 = vsub.s32 2, %v3625
  %v3627 = vrot.slane %v3614, %v3626
  %v3628 = vlaneseq
  %v3629 = vshrl.u32 %v3628, 7
  %v3630 = vsub.s32 3, %v3629
  %v3631 = vrot.slane %v3614, %v3630
  %3636 = vmatprep.subr.bf16.mxu0 %v3583
  %3637 = vmatpush1.bf16.msra.mxu0 %v3582
  %3638 = vmatprep.subr.bf16.mxu0 %v3587
  %3639 = vmatpush1.bf16.msra.mxu0 %v3586
  %3640 = vmatprep.subr.bf16.mxu0 %v3591
  %3641 = vmatpush1.bf16.msra.mxu0 %v3590
  %3642 = vmatprep.subr.bf16.mxu0 %v3595
  %3643 = vmatpush1.bf16.msra.mxu0 %v3594
  %3644 = vmatprep.subr.bf16.mxu0 %v3599
  %3645 = vmatpush1.bf16.msra.mxu0 %v3598
  %3646 = vmatprep.subr.bf16.mxu0 %v3603
  %3647 = vmatpush1.bf16.msra.mxu0 %v3602
  %3648 = vmatprep.subr.bf16.mxu0 %v3607
  %3649 = vmatpush1.bf16.msra.mxu0 %v3606
  %3650 = vmatprep.subr.bf16.mxu0 %v3611
  %3651 = vmatpush1.bf16.msra.mxu0 %v3610
  %3652 = vmatprep.subr.bf16.mxu0 0
  %3653 = vmatpush1.bf16.msra.mxu0 0
  %3654 = vmatprep.subr.bf16.mxu0 0
  %3655 = vmatpush1.bf16.msra.mxu0 0
  %3656 = vmatprep.subr.bf16.mxu0 0
  %3657 = vmatpush1.bf16.msra.mxu0 0
  %3658 = vmatprep.subr.bf16.mxu0 0
  %3659 = vmatpush1.bf16.msra.mxu0 0
  %3660 = vmatprep.subr.bf16.mxu0 0
  %3661 = vmatpush1.bf16.msra.mxu0 0
  %3662 = vmatprep.subr.bf16.mxu0 0
  %3663 = vmatpush1.bf16.msra.mxu0 0
  %3664 = vmatprep.subr.bf16.mxu0 0
  %3665 = vmatpush1.bf16.msra.mxu0 0
  %3666 = vmatprep.subr.bf16.mxu0 0
  %3667 = vmatpush1.bf16.msra.mxu0 0
  %3668 = vmatprep.mubr.bf16.mxu0 0
  %3669 = vmatmul.mubr.bf16.gmra.mrb[0].mxu0 %v3578
  %v3670 = vpop.f32.mrb[0].mxu0
  %v3671 = vadd.f32 %v3619, %v3670
  %v3672 = vpop.f32.mrb[0].mxu0
  %v3673 = vadd.f32 %v3623, %v3672
  %v3674 = vpop.f32.mrb[0].mxu0
  %v3675 = vadd.f32 %v3619, %v3674
  %v3676 = vpop.f32.mrb[0].mxu0
  %v3677 = vadd.f32 %v3623, %v3676
  %3678 = vmatprep.mubr.bf16.mxu0 0
  %3679 = vmatmul.mubr.bf16.gmra.mrb[0].mxu0 %v3579
  %v3680 = vpop.f32.mrb[0].mxu0
  %v3681 = vadd.f32 %v3619, %v3680
  %v3682 = vpop.f32.mrb[0].mxu0
  %v3683 = vadd.f32 %v3623, %v3682
  %v3684 = vpop.f32.mrb[0].mxu0
  %v3685 = vadd.f32 %v3619, %v3684
  %v3686 = vpop.f32.mrb[0].mxu0
  %v3687 = vadd.f32 %v3623, %v3686
  %3688 = vmatprep.mubr.bf16.mxu0 0
  %3689 = vmatmul.mubr.bf16.gmra.mrb[0].mxu0 %v3580
  %v3690 = vpop.f32.mrb[0].mxu0
  %v3691 = vadd.f32 %v3619, %v3690
  %v3692 = vpop.f32.mrb[0].mxu0
  %v3693 = vadd.f32 %v3623, %v3692
  %v3694 = vpop.f32.mrb[0].mxu0
  %v3695 = vadd.f32 %v3619, %v3694
  %v3696 = vpop.f32.mrb[0].mxu0
  %v3697 = vadd.f32 %v3623, %v3696
  %3698 = vmatprep.mubr.bf16.mxu0 0
  %3699 = vmatmul.mubr.bf16.gmra.mrb[0].mxu0 %v3581
  %v3700 = vpop.f32.mrb[0].mxu0
  %v3701 = vadd.f32 %v3619, %v3700
  %v3702 = vpop.f32.mrb[0].mxu0
  %v3703 = vadd.f32 %v3623, %v3702
  %v3704 = vpop.f32.mrb[0].mxu0
  %v3705 = vadd.f32 %v3619, %v3704
  %v3706 = vpop.f32.mrb[0].mxu0
  %v3707 = vadd.f32 %v3623, %v3706
  %3708 = vdwg.mxu0
  %3709 = vmatprep.subr.bf16.mxu0 %v3585
  %3710 = vmatpush1.bf16.msra.mxu0 %v3584
  %3711 = vmatprep.subr.bf16.mxu0 %v3589
  %3712 = vmatpush1.bf16.msra.mxu0 %v3588
  %3713 = vmatprep.subr.bf16.mxu0 %v3593
  %3714 = vmatpush1.bf16.msra.mxu0 %v3592
  %3715 = vmatprep.subr.bf16.mxu0 %v3597
  %3716 = vmatpush1.bf16.msra.mxu0 %v3596
  %3717 = vmatprep.subr.bf16.mxu0 %v3601
  %3718 = vmatpush1.bf16.msra.mxu0 %v3600
  %3719 = vmatprep.subr.bf16.mxu0 %v3605
  %3720 = vmatpush1.bf16.msra.mxu0 %v3604
  %3721 = vmatprep.subr.bf16.mxu0 %v3609
  %3722 = vmatpush1.bf16.msra.mxu0 %v3608
  %3723 = vmatprep.subr.bf16.mxu0 %v3613
  %3724 = vmatpush1.bf16.msra.mxu0 %v3612
  %3725 = vmatprep.subr.bf16.mxu0 0
  %3726 = vmatpush1.bf16.msra.mxu0 0
  %3727 = vmatprep.subr.bf16.mxu0 0
  %3728 = vmatpush1.bf16.msra.mxu0 0
  %3729 = vmatprep.subr.bf16.mxu0 0
  %3730 = vmatpush1.bf16.msra.mxu0 0
  %3731 = vmatprep.subr.bf16.mxu0 0
  %3732 = vmatpush1.bf16.msra.mxu0 0
  %3733 = vmatprep.subr.bf16.mxu0 0
  %3734 = vmatpush1.bf16.msra.mxu0 0
  %3735 = vmatprep.subr.bf16.mxu0 0
  %3736 = vmatpush1.bf16.msra.mxu0 0
  %3737 = vmatprep.subr.bf16.mxu0 0
  %3738 = vmatpush1.bf16.msra.mxu0 0
  %3739 = vmatprep.subr.bf16.mxu0 0
  %3740 = vmatpush1.bf16.msra.mxu0 0
  %3741 = vmatprep.mubr.bf16.mxu0 0
  %3742 = vmatmul.mubr.bf16.gmra.mrb[0].mxu0 %v3578
  %v3743 = vpop.f32.mrb[0].mxu0
  %v3744 = vadd.f32 %v3627, %v3743
  %v3745 = vpop.f32.mrb[0].mxu0
  %v3746 = vadd.f32 %v3631, %v3745
  %v3747 = vpop.f32.mrb[0].mxu0
  %v3748 = vadd.f32 %v3627, %v3747
  %v3749 = vpop.f32.mrb[0].mxu0
  %v3750 = vadd.f32 %v3631, %v3749
  %3751 = vmatprep.mubr.bf16.mxu0 0
  %3752 = vmatmul.mubr.bf16.gmra.mrb[0].mxu0 %v3579
  %v3753 = vpop.f32.mrb[0].mxu0
  %v3754 = vadd.f32 %v3627, %v3753
  %v3755 = vpop.f32.mrb[0].mxu0
  %v3756 = vadd.f32 %v3631, %v3755
  %v3757 = vpop.f32.mrb[0].mxu0
  %v3758 = vadd.f32 %v3627, %v3757
  %v3759 = vpop.f32.mrb[0].mxu0
  %v3760 = vadd.f32 %v3631, %v3759
  %3761 = vmatprep.mubr.bf16.mxu0 0
  %3762 = vmatmul.mubr.bf16.gmra.mrb[0].mxu0 %v3580
  %v3763 = vpop.f32.mrb[0].mxu0
  %v3764 = vadd.f32 %v3627, %v3763
  %v3765 = vpop.f32.mrb[0].mxu0
  %v3766 = vadd.f32 %v3631, %v3765
  %v3767 = vpop.f32.mrb[0].mxu0
  %v3768 = vadd.f32 %v3627, %v3767
  %v3769 = vpop.f32.mrb[0].mxu0
  %v3770 = vadd.f32 %v3631, %v3769
  %3771 = vmatprep.mubr.bf16.mxu0 0
  %3772 = vmatmul.mubr.bf16.gmra.mrb[0].mxu0 %v3581
  %v3773 = vpop.f32.mrb[0].mxu0
  %v3774 = vadd.f32 %v3627, %v3773
  %v3775 = vpop.f32.mrb[0].mxu0
  %v3776 = vadd.f32 %v3631, %v3775
  %v3777 = vpop.f32.mrb[0].mxu0
  %v3778 = vadd.f32 %v3627, %v3777
  %v3779 = vpop.f32.mrb[0].mxu0
  %v3780 = vadd.f32 %v3631, %v3779
  %3781 = vdwg.mxu0
  %3782 = vst [vmem:[#allocation2] sm:$0xff] %v3671
  %3783 = vst [vmem:[#allocation2 + $0x8] sm:$0xff] %v3673
  %3784 = vst [vmem:[#allocation2 + $0x10] sm:$0xff] %v3744
  %3785 = vst [vmem:[#allocation2 + $0x18] sm:$0xff] %v3746
  %3786 = vst [vmem:[#allocation2 + $0x20] sm:$0xff] %v3675
  %3787 = vst [vmem:[#allocation2 + $0x28] sm:$0xff] %v3677
  %3788 = vst [vmem:[#allocation2 + $0x30] sm:$0xff] %v3748
  %3789 = vst [vmem:[#allocation2 + $0x38] sm:$0xff] %v3750
  %3790 = vst [vmem:[#allocation2 + $0x40] sm:$0xff] %v3681
  %3791 = vst [vmem:[#allocation2 + $0x48] sm:$0xff] %v3683
  %3792 = vst [vmem:[#allocation2 + $0x50] sm:$0xff] %v3754
  %3793 = vst [vmem:[#allocation2 + $0x58] sm:$0xff] %v3756
  %3794 = vst [vmem:[#allocation2 + $0x60] sm:$0xff] %v3685
  %3795 = vst [vmem:[#allocation2 + $0x68] sm:$0xff] %v3687
  %3796 = vst [vmem:[#allocation2 + $0x70] sm:$0xff] %v3758
  %3797 = vst [vmem:[#allocation2 + $0x78] sm:$0xff] %v3760
  %3798 = vst [vmem:[#allocation2 + $0x80] sm:$0xff] %v3691
  %3799 = vst [vmem:[#allocation2 + $0x88] sm:$0xff] %v3693
  %3800 = vst [vmem:[#allocation2 + $0x90] sm:$0xff] %v3764
  %3801 = vst [vmem:[#allocation2 + $0x98] sm:$0xff] %v3766
  %3802 = vst [vmem:[#allocation2 + $0xa0] sm:$0xff] %v3695
  %3803 = vst [vmem:[#allocation2 + $0xa8] sm:$0xff] %v3697
  %3804 = vst [vmem:[#allocation2 + $0xb0] sm:$0xff] %v3768
  %3805 = vst [vmem:[#allocation2 + $0xb8] sm:$0xff] %v3770
  %3806 = vst [vmem:[#allocation2 + $0xc0] sm:$0xff] %v3701
  %3807 = vst [vmem:[#allocation2 + $0xc8] sm:$0xff] %v3703
  %3808 = vst [vmem:[#allocation2 + $0xd0] sm:$0xff] %v3774
  %3809 = vst [vmem:[#allocation2 + $0xd8] sm:$0xff] %v3776
  %3810 = vst [vmem:[#allocation2 + $0xe0] sm:$0xff] %v3705
  %3811 = vst [vmem:[#allocation2 + $0xe8] sm:$0xff] %v3707
  %3812 = vst [vmem:[#allocation2 + $0xf0] sm:$0xff] %v3778
  %3813 = vst [vmem:[#allocation2 + $0xf8] sm:$0xff] %v3780
  %v3814 = vld [vmem:[%s1072] sm:$0xff]
  %v3815 = vld [vmem:[%s1072 + $0x8] sm:$0xff]
  %v3816 = vld [vmem:[%s1072 + $0x10] sm:$0xff]
  %v3817 = vld [vmem:[%s1072 + $0x18] sm:$0xff]
  %v3818 = vld [vmem:[#allocation5] sm:$0xff]
  %v3819 = vld [vmem:[#allocation5 + $0x8] sm:$0xff]
  %v3820 = vld [vmem:[#allocation5 + $0x10] sm:$0xff]
  %v3821 = vld [vmem:[#allocation5 + $0x18] sm:$0xff]
  %v3822 = vld [vmem:[#allocation5 + $0x20] sm:$0xff]
  %v3823 = vld [vmem:[#allocation5 + $0x28] sm:$0xff]
  %v3824 = vld [vmem:[#allocation5 + $0x30] sm:$0xff]
  %v3825 = vld [vmem:[#allocation5 + $0x38] sm:$0xff]
  %v3826 = vld [vmem:[#allocation5 + $0x40] sm:$0xff]
  %v3827 = vld [vmem:[#allocation5 + $0x48] sm:$0xff]
  %v3828 = vld [vmem:[#allocation5 + $0x50] sm:$0xff]
  %v3829 = vld [vmem:[#allocation5 + $0x58] sm:$0xff]
  %v3830 = vld [vmem:[#allocation5 + $0x60] sm:$0xff]
  %v3831 = vld [vmem:[#allocation5 + $0x68] sm:$0xff]
  %v3832 = vld [vmem:[#allocation5 + $0x70] sm:$0xff]
  %v3833 = vld [vmem:[#allocation5 + $0x78] sm:$0xff]
  %v3834 = vld [vmem:[#allocation5 + $0x80] sm:$0xff]
  %v3835 = vld [vmem:[#allocation5 + $0x88] sm:$0xff]
  %v3836 = vld [vmem:[#allocation5 + $0x90] sm:$0xff]
  %v3837 = vld [vmem:[#allocation5 + $0x98] sm:$0xff]
  %v3838 = vld [vmem:[#allocation5 + $0xa0] sm:$0xff]
  %v3839 = vld [vmem:[#allocation5 + $0xa8] sm:$0xff]
  %v3840 = vld [vmem:[#allocation5 + $0xb0] sm:$0xff]
  %v3841 = vld [vmem:[#allocation5 + $0xb8] sm:$0xff]
  %v3842 = vld [vmem:[#allocation5 + $0xc0] sm:$0xff]
  %v3843 = vld [vmem:[#allocation5 + $0xc8] sm:$0xff]
  %v3844 = vld [vmem:[#allocation5 + $0xd0] sm:$0xff]
  %v3845 = vld [vmem:[#allocation5 + $0xd8] sm:$0xff]
  %v3846 = vld [vmem:[#allocation5 + $0xe0] sm:$0xff]
  %v3847 = vld [vmem:[#allocation5 + $0xe8] sm:$0xff]
  %v3848 = vld [vmem:[#allocation5 + $0xf0] sm:$0xff]
  %v3849 = vld [vmem:[#allocation5 + $0xf8] sm:$0xff]
  %3850 = vmatprep.subr.bf16.mxu0 %v3819
  %3851 = vmatpush1.bf16.msra.mxu0 %v3818
  %3852 = vmatprep.subr.bf16.mxu0 %v3823
  %3853 = vmatpush1.bf16.msra.mxu0 %v3822
  %3854 = vmatprep.subr.bf16.mxu0 %v3827
  %3855 = vmatpush1.bf16.msra.mxu0 %v3826
  %3856 = vmatprep.subr.bf16.mxu0 %v3831
  %3857 = vmatpush1.bf16.msra.mxu0 %v3830
  %3858 = vmatprep.subr.bf16.mxu0 %v3835
  %3859 = vmatpush1.bf16.msra.mxu0 %v3834
  %3860 = vmatprep.subr.bf16.mxu0 %v3839
  %3861 = vmatpush1.bf16.msra.mxu0 %v3838
  %3862 = vmatprep.subr.bf16.mxu0 %v3843
  %3863 = vmatpush1.bf16.msra.mxu0 %v3842
  %3864 = vmatprep.subr.bf16.mxu0 %v3847
  %3865 = vmatpush1.bf16.msra.mxu0 %v3846
  %3866 = vmatprep.subr.bf16.mxu0 0
  %3867 = vmatpush1.bf16.msra.mxu0 0
  %3868 = vmatprep.subr.bf16.mxu0 0
  %3869 = vmatpush1.bf16.msra.mxu0 0
  %3870 = vmatprep.subr.bf16.mxu0 0
  %3871 = vmatpush1.bf16.msra.mxu0 0
  %3872 = vmatprep.subr.bf16.mxu0 0
  %3873 = vmatpush1.bf16.msra.mxu0 0
  %3874 = vmatprep.subr.bf16.mxu0 0
  %3875 = vmatpush1.bf16.msra.mxu0 0
  %3876 = vmatprep.subr.bf16.mxu0 0
  %3877 = vmatpush1.bf16.msra.mxu0 0
  %3878 = vmatprep.subr.bf16.mxu0 0
  %3879 = vmatpush1.bf16.msra.mxu0 0
  %3880 = vmatprep.subr.bf16.mxu0 0
  %3881 = vmatpush1.bf16.msra.mxu0 0
  %3882 = vmatprep.mubr.bf16.mxu0 0
  %3883 = vmatmul.mubr.bf16.gmra.mrb[0].mxu0 0
  %v3884 = vpop.f32.mrb[0].mxu0
  %v3885 = vadd.f32 0.0, %v3884
  %v3886 = vpop.f32.mrb[0].mxu0
  %v3887 = vadd.f32 0.0, %v3886
  %v3888 = vpop.f32.mrb[0].mxu0
  %v3889 = vpop.f32.mrb[0].mxu0
  %3890 = vdwg.mxu0
  %3891 = vmatprep.subr.bf16.mxu0 %v3821
  %3892 = vmatpush1.bf16.msra.mxu0 %v3820
  %3893 = vmatprep.subr.bf16.mxu0 %v3825
  %3894 = vmatpush1.bf16.msra.mxu0 %v3824
  %3895 = vmatprep.subr.bf16.mxu0 %v3829
  %3896 = vmatpush1.bf16.msra.mxu0 %v3828
  %3897 = vmatprep.subr.bf16.mxu0 %v3833
  %3898 = vmatpush1.bf16.msra.mxu0 %v3832
  %3899 = vmatprep.subr.bf16.mxu0 %v3837
  %3900 = vmatpush1.bf16.msra.mxu0 %v3836
  %3901 = vmatprep.subr.bf16.mxu0 %v3841
  %3902 = vmatpush1.bf16.msra.mxu0 %v3840
  %3903 = vmatprep.subr.bf16.mxu0 %v3845
  %3904 = vmatpush1.bf16.msra.mxu0 %v3844
  %3905 = vmatprep.subr.bf16.mxu0 %v3849
  %3906 = vmatpush1.bf16.msra.mxu0 %v3848
  %3907 = vmatprep.subr.bf16.mxu0 0
  %3908 = vmatpush1.bf16.msra.mxu0 0
  %3909 = vmatprep.subr.bf16.mxu0 0
  %3910 = vmatpush1.bf16.msra.mxu0 0
  %3911 = vmatprep.subr.bf16.mxu0 0
  %3912 = vmatpush1.bf16.msra.mxu0 0
  %3913 = vmatprep.subr.bf16.mxu0 0
  %3914 = vmatpush1.bf16.msra.mxu0 0
  %3915 = vmatprep.subr.bf16.mxu0 0
  %3916 = vmatpush1.bf16.msra.mxu0 0
  %3917 = vmatprep.subr.bf16.mxu0 0
  %3918 = vmatpush1.bf16.msra.mxu0 0
  %3919 = vmatprep.subr.bf16.mxu0 0
  %3920 = vmatpush1.bf16.msra.mxu0 0
  %3921 = vmatprep.subr.bf16.mxu0 0
  %3922 = vmatpush1.bf16.msra.mxu0 0
  %3923 = vmatprep.mubr.bf16.mxu0 0
  %3924 = vmatmul.mubr.bf16.gmra.mrb[0].mxu0 0
  %v3925 = vpop.f32.mrb[0].mxu0
  %v3926 = vadd.f32 0.0, %v3925
  %v3927 = vpop.f32.mrb[0].mxu0
  %v3928 = vadd.f32 0.0, %v3927
  %v3929 = vpop.f32.mrb[0].mxu0
  %v3930 = vpop.f32.mrb[0].mxu0
  %3931 = vdwg.mxu0
  %v3932 = vadd.f32 %v3814, %v3885
  %v3933 = vadd.f32 %v3815, %v3887
  %v3934 = vadd.f32 %v3816, %v3926
  %v3935 = vadd.f32 %v3817, %v3928
  %v3936 = vxor.u32 %v3932, 2147483648
  %v3937 = vmul.f32 %v3936, 1.442695
  %v3938 = vpow.pop %v3937
  %v3939 = vadd.f32 %v3938, 1.0
  %v3940 = vrcp.pop %v3939
  %v3941 = vmul.f32 1.0, %v3940
  %v3942 = vxor.u32 %v3933, 2147483648
  %v3943 = vmul.f32 %v3942, 1.442695
  %v3944 = vpow.pop %v3943
  %v3945 = vadd.f32 %v3944, 1.0
  %v3946 = vrcp.pop %v3945
  %v3947 = vmul.f32 1.0, %v3946
  %v3948 = vtanh.pop %v3934
  %v3949 = vxor.u32 %v3935, 2147483648
  %v3950 = vmul.f32 %v3949, 1.442695
  %v3951 = vpow.pop %v3950
  %v3952 = vadd.f32 %v3951, 1.0
  %v3953 = vrcp.pop %v3952
  %v3954 = vmul.f32 1.0, %v3953
  %v3955 = vmul.f32 %v3947, 0.0
  %v3956 = vmul.f32 %v3941, %v3948
  %v3957 = vadd.f32 %v3955, %v3956
  %v3958 = vtanh.pop %v3957
  %v3959 = vmul.f32 %v3954, %v3958
  %v3960 = vld [vmem:[%s1382] sm:$0xff]
  %v3961 = vld [vmem:[%s1382 + $0x8] sm:$0xff]
  %v3962 = vld [vmem:[%s1382 + $0x10] sm:$0xff]
  %v3963 = vld [vmem:[%s1382 + $0x18] sm:$0xff]
  %v3964 = vpack.c.bf16 %v3959, %v3959
  %3965 = vmatprep.subr.bf16.mxu0 %v3819
  %3966 = vmatpush1.bf16.msra.mxu0 %v3818
  %3967 = vmatprep.subr.bf16.mxu0 %v3823
  %3968 = vmatpush1.bf16.msra.mxu0 %v3822
  %3969 = vmatprep.subr.bf16.mxu0 %v3827
  %3970 = vmatpush1.bf16.msra.mxu0 %v3826
  %3971 = vmatprep.subr.bf16.mxu0 %v3831
  %3972 = vmatpush1.bf16.msra.mxu0 %v3830
  %3973 = vmatprep.subr.bf16.mxu0 %v3835
  %3974 = vmatpush1.bf16.msra.mxu0 %v3834
  %3975 = vmatprep.subr.bf16.mxu0 %v3839
  %3976 = vmatpush1.bf16.msra.mxu0 %v3838
  %3977 = vmatprep.subr.bf16.mxu0 %v3843
  %3978 = vmatpush1.bf16.msra.mxu0 %v3842
  %3979 = vmatprep.subr.bf16.mxu0 %v3847
  %3980 = vmatpush1.bf16.msra.mxu0 %v3846
  %3981 = vmatprep.subr.bf16.mxu0 0
  %3982 = vmatpush1.bf16.msra.mxu0 0
  %3983 = vmatprep.subr.bf16.mxu0 0
  %3984 = vmatpush1.bf16.msra.mxu0 0
  %3985 = vmatprep.subr.bf16.mxu0 0
  %3986 = vmatpush1.bf16.msra.mxu0 0
  %3987 = vmatprep.subr.bf16.mxu0 0
  %3988 = vmatpush1.bf16.msra.mxu0 0
  %3989 = vmatprep.subr.bf16.mxu0 0
  %3990 = vmatpush1.bf16.msra.mxu0 0
  %3991 = vmatprep.subr.bf16.mxu0 0
  %3992 = vmatpush1.bf16.msra.mxu0 0
  %3993 = vmatprep.subr.bf16.mxu0 0
  %3994 = vmatpush1.bf16.msra.mxu0 0
  %3995 = vmatprep.subr.bf16.mxu0 0
  %3996 = vmatpush1.bf16.msra.mxu0 0
  %3997 = vmatprep.mubr.bf16.mxu0 0
  %3998 = vmatmul.mubr.bf16.gmra.mrb[0].mxu0 %v3964
  %v3999 = vpop.f32.mrb[0].mxu0
  %v4000 = vadd.f32 0.0, %v3999
  %v4001 = vpop.f32.mrb[0].mxu0
  %v4002 = vadd.f32 0.0, %v4001
  %v4003 = vpop.f32.mrb[0].mxu0
  %v4004 = vpop.f32.mrb[0].mxu0
  %4005 = vdwg.mxu0
  %4006 = vmatprep.subr.bf16.mxu0 %v3821
  %4007 = vmatpush1.bf16.msra.mxu0 %v3820
  %4008 = vmatprep.subr.bf16.mxu0 %v3825
  %4009 = vmatpush1.bf16.msra.mxu0 %v3824
  %4010 = vmatprep.subr.bf16.mxu0 %v3829
  %4011 = vmatpush1.bf16.msra.mxu0 %v3828
  %4012 = vmatprep.subr.bf16.mxu0 %v3833
  %4013 = vmatpush1.bf16.msra.mxu0 %v3832
  %4014 = vmatprep.subr.bf16.mxu0 %v3837
  %4015 = vmatpush1.bf16.msra.mxu0 %v3836
  %4016 = vmatprep.subr.bf16.mxu0 %v3841
  %4017 = vmatpush1.bf16.msra.mxu0 %v3840
  %4018 = vmatprep.subr.bf16.mxu0 %v3845
  %4019 = vmatpush1.bf16.msra.mxu0 %v3844
  %4020 = vmatprep.subr.bf16.mxu0 %v3849
  %4021 = vmatpush1.bf16.msra.mxu0 %v3848
  %4022 = vmatprep.subr.bf16.mxu0 0
  %4023 = vmatpush1.bf16.msra.mxu0 0
  %4024 = vmatprep.subr.bf16.mxu0 0
  %4025 = vmatpush1.bf16.msra.mxu0 0
  %4026 = vmatprep.subr.bf16.mxu0 0
  %4027 = vmatpush1.bf16.msra.mxu0 0
  %4028 = vmatprep.subr.bf16.mxu0 0
  %4029 = vmatpush1.bf16.msra.mxu0 0
  %4030 = vmatprep.subr.bf16.mxu0 0
  %4031 = vmatpush1.bf16.msra.mxu0 0
  %4032 = vmatprep.subr.bf16.mxu0 0
  %4033 = vmatpush1.bf16.msra.mxu0 0
  %4034 = vmatprep.subr.bf16.mxu0 0
  %4035 = vmatpush1.bf16.msra.mxu0 0
  %4036 = vmatprep.subr.bf16.mxu0 0
  %4037 = vmatpush1.bf16.msra.mxu0 0
  %4038 = vmatprep.mubr.bf16.mxu0 0
  %4039 = vmatmul.mubr.bf16.gmra.mrb[0].mxu0 %v3964
  %v4040 = vpop.f32.mrb[0].mxu0
  %v4041 = vadd.f32 0.0, %v4040
  %v4042 = vpop.f32.mrb[0].mxu0
  %v4043 = vadd.f32 0.0, %v4042
  %v4044 = vpop.f32.mrb[0].mxu0
  %v4045 = vpop.f32.mrb[0].mxu0
  %4046 = vdwg.mxu0
  %v4047 = vadd.f32 %v3960, %v4000
  %v4048 = vadd.f32 %v3961, %v4002
  %v4049 = vadd.f32 %v3962, %v4041
  %v4050 = vadd.f32 %v3963, %v4043
  %v4051 = vxor.u32 %v4047, 2147483648
  %v4052 = vmul.f32 %v4051, 1.442695
  %v4053 = vpow.pop %v4052
  %v4054 = vadd.f32 %v4053, 1.0
  %v4055 = vrcp.pop %v4054
  %v4056 = vmul.f32 1.0, %v4055
  %v4057 = vxor.u32 %v4048, 2147483648
  %v4058 = vmul.f32 %v4057, 1.442695
  %v4059 = vpow.pop %v4058
  %v4060 = vadd.f32 %v4059, 1.0
  %v4061 = vrcp.pop %v4060
  %v4062 = vmul.f32 1.0, %v4061
  %v4063 = vtanh.pop %v4049
  %v4064 = vxor.u32 %v4050, 2147483648
  %v4065 = vmul.f32 %v4064, 1.442695
  %v4066 = vpow.pop %v4065
  %v4067 = vadd.f32 %v4066, 1.0
  %v4068 = vrcp.pop %v4067
  %v4069 = vmul.f32 1.0, %v4068
  %v4070 = vmul.f32 %v4062, %v3957
  %v4071 = vmul.f32 %v4056, %v4063
  %v4072 = vadd.f32 %v4070, %v4071
  %v4073 = vtanh.pop %v4072
  %v4074 = vmul.f32 %v4069, %v4073
  %v4075 = vld [vmem:[%s1694] sm:$0xff]
  %v4076 = vld [vmem:[%s1694 + $0x8] sm:$0xff]
  %v4077 = vld [vmem:[%s1694 + $0x10] sm:$0xff]
  %v4078 = vld [vmem:[%s1694 + $0x18] sm:$0xff]
  %v4079 = vpack.c.bf16 %v4074, %v4074
  %4080 = vmatprep.subr.bf16.mxu0 %v3819
  %4081 = vmatpush1.bf16.msra.mxu0 %v3818
  %4082 = vmatprep.subr.bf16.mxu0 %v3823
  %4083 = vmatpush1.bf16.msra.mxu0 %v3822
  %4084 = vmatprep.subr.bf16.mxu0 %v3827
  %4085 = vmatpush1.bf16.msra.mxu0 %v3826
  %4086 = vmatprep.subr.bf16.mxu0 %v3831
  %4087 = vmatpush1.bf16.msra.mxu0 %v3830
  %4088 = vmatprep.subr.bf16.mxu0 %v3835
  %4089 = vmatpush1.bf16.msra.mxu0 %v3834
  %4090 = vmatprep.subr.bf16.mxu0 %v3839
  %4091 = vmatpush1.bf16.msra.mxu0 %v3838
  %4092 = vmatprep.subr.bf16.mxu0 %v3843
  %4093 = vmatpush1.bf16.msra.mxu0 %v3842
  %4094 = vmatprep.subr.bf16.mxu0 %v3847
  %4095 = vmatpush1.bf16.msra.mxu0 %v3846
  %4096 = vmatprep.subr.bf16.mxu0 0
  %4097 = vmatpush1.bf16.msra.mxu0 0
  %4098 = vmatprep.subr.bf16.mxu0 0
  %4099 = vmatpush1.bf16.msra.mxu0 0
  %4100 = vmatprep.subr.bf16.mxu0 0
  %4101 = vmatpush1.bf16.msra.mxu0 0
  %4102 = vmatprep.subr.bf16.mxu0 0
  %4103 = vmatpush1.bf16.msra.mxu0 0
  %4104 = vmatprep.subr.bf16.mxu0 0
  %4105 = vmatpush1.bf16.msra.mxu0 0
  %4106 = vmatprep.subr.bf16.mxu0 0
  %4107 = vmatpush1.bf16.msra.mxu0 0
  %4108 = vmatprep.subr.bf16.mxu0 0
  %4109 = vmatpush1.bf16.msra.mxu0 0
  %4110 = vmatprep.subr.bf16.mxu0 0
  %4111 = vmatpush1.bf16.msra.mxu0 0
  %4112 = vmatprep.mubr.bf16.mxu0 0
  %4113 = vmatmul.mubr.bf16.gmra.mrb[0].mxu0 %v4079
  %v4114 = vpop.f32.mrb[0].mxu0
  %v4115 = vadd.f32 0.0, %v4114
  %v4116 = vpop.f32.mrb[0].mxu0
  %v4117 = vadd.f32 0.0, %v4116
  %v4118 = vpop.f32.mrb[0].mxu0
  %v4119 = vpop.f32.mrb[0].mxu0
  %4120 = vdwg.mxu0
  %4121 = vmatprep.subr.bf16.mxu0 %v3821
  %4122 = vmatpush1.bf16.msra.mxu0 %v3820
  %4123 = vmatprep.subr.bf16.mxu0 %v3825
  %4124 = vmatpush1.bf16.msra.mxu0 %v3824
  %4125 = vmatprep.subr.bf16.mxu0 %v3829
  %4126 = vmatpush1.bf16.msra.mxu0 %v3828
  %4127 = vmatprep.subr.bf16.mxu0 %v3833
  %4128 = vmatpush1.bf16.msra.mxu0 %v3832
  %4129 = vmatprep.subr.bf16.mxu0 %v3837
  %4130 = vmatpush1.bf16.msra.mxu0 %v3836
  %4131 = vmatprep.subr.bf16.mxu0 %v3841
  %4132 = vmatpush1.bf16.msra.mxu0 %v3840
  %4133 = vmatprep.subr.bf16.mxu0 %v3845
  %4134 = vmatpush1.bf16.msra.mxu0 %v3844
  %4135 = vmatprep.subr.bf16.mxu0 %v3849
  %4136 = vmatpush1.bf16.msra.mxu0 %v3848
  %4137 = vmatprep.subr.bf16.mxu0 0
  %4138 = vmatpush1.bf16.msra.mxu0 0
  %4139 = vmatprep.subr.bf16.mxu0 0
  %4140 = vmatpush1.bf16.msra.mxu0 0
  %4141 = vmatprep.subr.bf16.mxu0 0
  %4142 = vmatpush1.bf16.msra.mxu0 0
  %4143 = vmatprep.subr.bf16.mxu0 0
  %4144 = vmatpush1.bf16.msra.mxu0 0
  %4145 = vmatprep.subr.bf16.mxu0 0
  %4146 = vmatpush1.bf16.msra.mxu0 0
  %4147 = vmatprep.subr.bf16.mxu0 0
  %4148 = vmatpush1.bf16.msra.mxu0 0
  %4149 = vmatprep.subr.bf16.mxu0 0
  %4150 = vmatpush1.bf16.msra.mxu0 0
  %4151 = vmatprep.subr.bf16.mxu0 0
  %4152 = vmatpush1.bf16.msra.mxu0 0
  %4153 = vmatprep.mubr.bf16.mxu0 0
  %4154 = vmatmul.mubr.bf16.gmra.mrb[0].mxu0 %v4079
  %v4155 = vpop.f32.mrb[0].mxu0
  %v4156 = vadd.f32 0.0, %v4155
  %v4157 = vpop.f32.mrb[0].mxu0
  %v4158 = vadd.f32 0.0, %v4157
  %v4159 = vpop.f32.mrb[0].mxu0
  %v4160 = vpop.f32.mrb[0].mxu0
  %4161 = vdwg.mxu0
  %v4162 = vadd.f32 %v4075, %v4115
  %v4163 = vadd.f32 %v4076, %v4117
  %v4164 = vadd.f32 %v4077, %v4156
  %v4165 = vadd.f32 %v4078, %v4158
  %v4166 = vxor.u32 %v4162, 2147483648
  %v4167 = vmul.f32 %v4166, 1.442695
  %v4168 = vpow.pop %v4167
  %v4169 = vadd.f32 %v4168, 1.0
  %v4170 = vrcp.pop %v4169
  %v4171 = vmul.f32 1.0, %v4170
  %v4172 = vxor.u32 %v4163, 2147483648
  %v4173 = vmul.f32 %v4172, 1.442695
  %v4174 = vpow.pop %v4173
  %v4175 = vadd.f32 %v4174, 1.0
  %v4176 = vrcp.pop %v4175
  %v4177 = vmul.f32 1.0, %v4176
  %v4178 = vtanh.pop %v4164
  %v4179 = vxor.u32 %v4165, 2147483648
  %v4180 = vmul.f32 %v4179, 1.442695
  %v4181 = vpow.pop %v4180
  %v4182 = vadd.f32 %v4181, 1.0
  %v4183 = vrcp.pop %v4182
  %v4184 = vmul.f32 1.0, %v4183
  %v4185 = vmul.f32 %v4177, %v4072
  %v4186 = vmul.f32 %v4171, %v4178
  %v4187 = vadd.f32 %v4185, %v4186
  %v4188 = vtanh.pop %v4187
  %v4189 = vmul.f32 %v4184, %v4188
  %v4190 = vld [vmem:[%s2006] sm:$0xff]
  %v4191 = vld [vmem:[%s2006 + $0x8] sm:$0xff]
  %v4192 = vld [vmem:[%s2006 + $0x10] sm:$0xff]
  %v4193 = vld [vmem:[%s2006 + $0x18] sm:$0xff]
  %v4194 = vpack.c.bf16 %v4189, %v4189
  %4195 = vmatprep.subr.bf16.mxu0 %v3819
  %4196 = vmatpush1.bf16.msra.mxu0 %v3818
  %4197 = vmatprep.subr.bf16.mxu0 %v3823
  %4198 = vmatpush1.bf16.msra.mxu0 %v3822
  %4199 = vmatprep.subr.bf16.mxu0 %v3827
  %4200 = vmatpush1.bf16.msra.mxu0 %v3826
  %4201 = vmatprep.subr.bf16.mxu0 %v3831
  %4202 = vmatpush1.bf16.msra.mxu0 %v3830
  %4203 = vmatprep.subr.bf16.mxu0 %v3835
  %4204 = vmatpush1.bf16.msra.mxu0 %v3834
  %4205 = vmatprep.subr.bf16.mxu0 %v3839
  %4206 = vmatpush1.bf16.msra.mxu0 %v3838
  %4207 = vmatprep.subr.bf16.mxu0 %v3843
  %4208 = vmatpush1.bf16.msra.mxu0 %v3842
  %4209 = vmatprep.subr.bf16.mxu0 %v3847
  %4210 = vmatpush1.bf16.msra.mxu0 %v3846
  %4211 = vmatprep.subr.bf16.mxu0 0
  %4212 = vmatpush1.bf16.msra.mxu0 0
  %4213 = vmatprep.subr.bf16.mxu0 0
  %4214 = vmatpush1.bf16.msra.mxu0 0
  %4215 = vmatprep.subr.bf16.mxu0 0
  %4216 = vmatpush1.bf16.msra.mxu0 0
  %4217 = vmatprep.subr.bf16.mxu0 0
  %4218 = vmatpush1.bf16.msra.mxu0 0
  %4219 = vmatprep.subr.bf16.mxu0 0
  %4220 = vmatpush1.bf16.msra.mxu0 0
  %4221 = vmatprep.subr.bf16.mxu0 0
  %4222 = vmatpush1.bf16.msra.mxu0 0
  %4223 = vmatprep.subr.bf16.mxu0 0
  %4224 = vmatpush1.bf16.msra.mxu0 0
  %4225 = vmatprep.subr.bf16.mxu0 0
  %4226 = vmatpush1.bf16.msra.mxu0 0
  %4227 = vmatprep.mubr.bf16.mxu0 0
  %4228 = vmatmul.mubr.bf16.gmra.mrb[0].mxu0 %v4194
  %v4229 = vpop.f32.mrb[0].mxu0
  %v4230 = vadd.f32 0.0, %v4229
  %v4231 = vpop.f32.mrb[0].mxu0
  %v4232 = vadd.f32 0.0, %v4231
  %v4233 = vpop.f32.mrb[0].mxu0
  %v4234 = vpop.f32.mrb[0].mxu0
  %4235 = vdwg.mxu0
  %4236 = vmatprep.subr.bf16.mxu0 %v3821
  %4237 = vmatpush1.bf16.msra.mxu0 %v3820
  %4238 = vmatprep.subr.bf16.mxu0 %v3825
  %4239 = vmatpush1.bf16.msra.mxu0 %v3824
  %4240 = vmatprep.subr.bf16.mxu0 %v3829
  %4241 = vmatpush1.bf16.msra.mxu0 %v3828
  %4242 = vmatprep.subr.bf16.mxu0 %v3833
  %4243 = vmatpush1.bf16.msra.mxu0 %v3832
  %4244 = vmatprep.subr.bf16.mxu0 %v3837
  %4245 = vmatpush1.bf16.msra.mxu0 %v3836
  %4246 = vmatprep.subr.bf16.mxu0 %v3841
  %4247 = vmatpush1.bf16.msra.mxu0 %v3840
  %4248 = vmatprep.subr.bf16.mxu0 %v3845
  %4249 = vmatpush1.bf16.msra.mxu0 %v3844
  %4250 = vmatprep.subr.bf16.mxu0 %v3849
  %4251 = vmatpush1.bf16.msra.mxu0 %v3848
  %4252 = vmatprep.subr.bf16.mxu0 0
  %4253 = vmatpush1.bf16.msra.mxu0 0
  %4254 = vmatprep.subr.bf16.mxu0 0
  %4255 = vmatpush1.bf16.msra.mxu0 0
  %4256 = vmatprep.subr.bf16.mxu0 0
  %4257 = vmatpush1.bf16.msra.mxu0 0
  %4258 = vmatprep.subr.bf16.mxu0 0
  %4259 = vmatpush1.bf16.msra.mxu0 0
  %4260 = vmatprep.subr.bf16.mxu0 0
  %4261 = vmatpush1.bf16.msra.mxu0 0
  %4262 = vmatprep.subr.bf16.mxu0 0
  %4263 = vmatpush1.bf16.msra.mxu0 0
  %4264 = vmatprep.subr.bf16.mxu0 0
  %4265 = vmatpush1.bf16.msra.mxu0 0
  %4266 = vmatprep.subr.bf16.mxu0 0
  %4267 = vmatpush1.bf16.msra.mxu0 0
  %4268 = vmatprep.mubr.bf16.mxu0 0
  %4269 = vmatmul.mubr.bf16.gmra.mrb[0].mxu0 %v4194
  %v4270 = vpop.f32.mrb[0].mxu0
  %v4271 = vadd.f32 0.0, %v4270
  %v4272 = vpop.f32.mrb[0].mxu0
  %v4273 = vadd.f32 0.0, %v4272
  %v4274 = vpop.f32.mrb[0].mxu0
  %v4275 = vpop.f32.mrb[0].mxu0
  %4276 = vdwg.mxu0
  %v4277 = vadd.f32 %v4190, %v4230
  %v4278 = vadd.f32 %v4191, %v4232
  %v4279 = vadd.f32 %v4192, %v4271
  %v4280 = vadd.f32 %v4193, %v4273
  %v4281 = vxor.u32 %v4277, 2147483648
  %v4282 = vmul.f32 %v4281, 1.442695
  %v4283 = vpow.pop %v4282
  %v4284 = vadd.f32 %v4283, 1.0
  %v4285 = vrcp.pop %v4284
  %v4286 = vmul.f32 1.0, %v4285
  %v4287 = vxor.u32 %v4278, 2147483648
  %v4288 = vmul.f32 %v4287, 1.442695
  %v4289 = vpow.pop %v4288
  %v4290 = vadd.f32 %v4289, 1.0
  %v4291 = vrcp.pop %v4290
  %v4292 = vmul.f32 1.0, %v4291
  %v4293 = vtanh.pop %v4279
  %v4294 = vxor.u32 %v4280, 2147483648
  %v4295 = vmul.f32 %v4294, 1.442695
  %v4296 = vpow.pop %v4295
  %v4297 = vadd.f32 %v4296, 1.0
  %v4298 = vrcp.pop %v4297
  %v4299 = vmul.f32 1.0, %v4298
  %v4300 = vmul.f32 %v4292, %v4187
  %v4301 = vmul.f32 %v4286, %v4293
  %v4302 = vadd.f32 %v4300, %v4301
  %v4303 = vtanh.pop %v4302
  %v4304 = vmul.f32 %v4299, %v4303
  %v4305 = vld [vmem:[%s2318] sm:$0xff]
  %v4306 = vld [vmem:[%s2318 + $0x8] sm:$0xff]
  %v4307 = vld [vmem:[%s2318 + $0x10] sm:$0xff]
  %v4308 = vld [vmem:[%s2318 + $0x18] sm:$0xff]
  %v4309 = vpack.c.bf16 %v4304, %v4304
  %4310 = vmatprep.subr.bf16.mxu0 %v3819
  %4311 = vmatpush1.bf16.msra.mxu0 %v3818
  %4312 = vmatprep.subr.bf16.mxu0 %v3823
  %4313 = vmatpush1.bf16.msra.mxu0 %v3822
  %4314 = vmatprep.subr.bf16.mxu0 %v3827
  %4315 = vmatpush1.bf16.msra.mxu0 %v3826
  %4316 = vmatprep.subr.bf16.mxu0 %v3831
  %4317 = vmatpush1.bf16.msra.mxu0 %v3830
  %4318 = vmatprep.subr.bf16.mxu0 %v3835
  %4319 = vmatpush1.bf16.msra.mxu0 %v3834
  %4320 = vmatprep.subr.bf16.mxu0 %v3839
  %4321 = vmatpush1.bf16.msra.mxu0 %v3838
  %4322 = vmatprep.subr.bf16.mxu0 %v3843
  %4323 = vmatpush1.bf16.msra.mxu0 %v3842
  %4324 = vmatprep.subr.bf16.mxu0 %v3847
  %4325 = vmatpush1.bf16.msra.mxu0 %v3846
  %4326 = vmatprep.subr.bf16.mxu0 0
  %4327 = vmatpush1.bf16.msra.mxu0 0
  %4328 = vmatprep.subr.bf16.mxu0 0
  %4329 = vmatpush1.bf16.msra.mxu0 0
  %4330 = vmatprep.subr.bf16.mxu0 0
  %4331 = vmatpush1.bf16.msra.mxu0 0
  %4332 = vmatprep.subr.bf16.mxu0 0
  %4333 = vmatpush1.bf16.msra.mxu0 0
  %4334 = vmatprep.subr.bf16.mxu0 0
  %4335 = vmatpush1.bf16.msra.mxu0 0
  %4336 = vmatprep.subr.bf16.mxu0 0
  %4337 = vmatpush1.bf16.msra.mxu0 0
  %4338 = vmatprep.subr.bf16.mxu0 0
  %4339 = vmatpush1.bf16.msra.mxu0 0
  %4340 = vmatprep.subr.bf16.mxu0 0
  %4341 = vmatpush1.bf16.msra.mxu0 0
  %4342 = vmatprep.mubr.bf16.mxu0 0
  %4343 = vmatmul.mubr.bf16.gmra.mrb[0].mxu0 %v4309
  %v4344 = vpop.f32.mrb[0].mxu0
  %v4345 = vadd.f32 0.0, %v4344
  %v4346 = vpop.f32.mrb[0].mxu0
  %v4347 = vadd.f32 0.0, %v4346
  %v4348 = vpop.f32.mrb[0].mxu0
  %v4349 = vpop.f32.mrb[0].mxu0
  %4350 = vdwg.mxu0
  %4351 = vmatprep.subr.bf16.mxu0 %v3821
  %4352 = vmatpush1.bf16.msra.mxu0 %v3820
  %4353 = vmatprep.subr.bf16.mxu0 %v3825
  %4354 = vmatpush1.bf16.msra.mxu0 %v3824
  %4355 = vmatprep.subr.bf16.mxu0 %v3829
  %4356 = vmatpush1.bf16.msra.mxu0 %v3828
  %4357 = vmatprep.subr.bf16.mxu0 %v3833
  %4358 = vmatpush1.bf16.msra.mxu0 %v3832
  %4359 = vmatprep.subr.bf16.mxu0 %v3837
  %4360 = vmatpush1.bf16.msra.mxu0 %v3836
  %4361 = vmatprep.subr.bf16.mxu0 %v3841
  %4362 = vmatpush1.bf16.msra.mxu0 %v3840
  %4363 = vmatprep.subr.bf16.mxu0 %v3845
  %4364 = vmatpush1.bf16.msra.mxu0 %v3844
  %4365 = vmatprep.subr.bf16.mxu0 %v3849
  %4366 = vmatpush1.bf16.msra.mxu0 %v3848
  %4367 = vmatprep.subr.bf16.mxu0 0
  %4368 = vmatpush1.bf16.msra.mxu0 0
  %4369 = vmatprep.subr.bf16.mxu0 0
  %4370 = vmatpush1.bf16.msra.mxu0 0
  %4371 = vmatprep.subr.bf16.mxu0 0
  %4372 = vmatpush1.bf16.msra.mxu0 0
  %4373 = vmatprep.subr.bf16.mxu0 0
  %4374 = vmatpush1.bf16.msra.mxu0 0
  %4375 = vmatprep.subr.bf16.mxu0 0
  %4376 = vmatpush1.bf16.msra.mxu0 0
  %4377 = vmatprep.subr.bf16.mxu0 0
  %4378 = vmatpush1.bf16.msra.mxu0 0
  %4379 = vmatprep.subr.bf16.mxu0 0
  %4380 = vmatpush1.bf16.msra.mxu0 0
  %4381 = vmatprep.subr.bf16.mxu0 0
  %4382 = vmatpush1.bf16.msra.mxu0 0
  %4383 = vmatprep.mubr.bf16.mxu0 0
  %4384 = vmatmul.mubr.bf16.gmra.mrb[0].mxu0 %v4309
  %v4385 = vpop.f32.mrb[0].mxu0
  %v4386 = vadd.f32 0.0, %v4385
  %v4387 = vpop.f32.mrb[0].mxu0
  %v4388 = vadd.f32 0.0, %v4387
  %v4389 = vpop.f32.mrb[0].mxu0
  %v4390 = vpop.f32.mrb[0].mxu0
  %4391 = vdwg.mxu0
  %v4392 = vadd.f32 %v4305, %v4345
  %v4393 = vadd.f32 %v4306, %v4347
  %v4394 = vadd.f32 %v4307, %v4386
  %v4395 = vadd.f32 %v4308, %v4388
  %v4396 = vxor.u32 %v4392, 2147483648
  %v4397 = vmul.f32 %v4396, 1.442695
  %v4398 = vpow.pop %v4397
  %v4399 = vadd.f32 %v4398, 1.0
  %v4400 = vrcp.pop %v4399
  %v4401 = vmul.f32 1.0, %v4400
  %v4402 = vxor.u32 %v4393, 2147483648
  %v4403 = vmul.f32 %v4402, 1.442695
  %v4404 = vpow.pop %v4403
  %v4405 = vadd.f32 %v4404, 1.0
  %v4406 = vrcp.pop %v4405
  %v4407 = vmul.f32 1.0, %v4406
  %v4408 = vtanh.pop %v4394
  %v4409 = vxor.u32 %v4395, 2147483648
  %v4410 = vmul.f32 %v4409, 1.442695
  %v4411 = vpow.pop %v4410
  %v4412 = vadd.f32 %v4411, 1.0
  %v4413 = vrcp.pop %v4412
  %v4414 = vmul.f32 1.0, %v4413
  %v4415 = vmul.f32 %v4407, %v4302
  %v4416 = vmul.f32 %v4401, %v4408
  %v4417 = vadd.f32 %v4415, %v4416
  %v4418 = vtanh.pop %v4417
  %v4419 = vmul.f32 %v4414, %v4418
  %v4420 = vld [vmem:[%s2630] sm:$0xff]
  %v4421 = vld [vmem:[%s2630 + $0x8] sm:$0xff]
  %v4422 = vld [vmem:[%s2630 + $0x10] sm:$0xff]
  %v4423 = vld [vmem:[%s2630 + $0x18] sm:$0xff]
  %v4424 = vpack.c.bf16 %v4419, %v4419
  %4425 = vmatprep.subr.bf16.mxu0 %v3819
  %4426 = vmatpush1.bf16.msra.mxu0 %v3818
  %4427 = vmatprep.subr.bf16.mxu0 %v3823
  %4428 = vmatpush1.bf16.msra.mxu0 %v3822
  %4429 = vmatprep.subr.bf16.mxu0 %v3827
  %4430 = vmatpush1.bf16.msra.mxu0 %v3826
  %4431 = vmatprep.subr.bf16.mxu0 %v3831
  %4432 = vmatpush1.bf16.msra.mxu0 %v3830
  %4433 = vmatprep.subr.bf16.mxu0 %v3835
  %4434 = vmatpush1.bf16.msra.mxu0 %v3834
  %4435 = vmatprep.subr.bf16.mxu0 %v3839
  %4436 = vmatpush1.bf16.msra.mxu0 %v3838
  %4437 = vmatprep.subr.bf16.mxu0 %v3843
  %4438 = vmatpush1.bf16.msra.mxu0 %v3842
  %4439 = vmatprep.subr.bf16.mxu0 %v3847
  %4440 = vmatpush1.bf16.msra.mxu0 %v3846
  %4441 = vmatprep.subr.bf16.mxu0 0
  %4442 = vmatpush1.bf16.msra.mxu0 0
  %4443 = vmatprep.subr.bf16.mxu0 0
  %4444 = vmatpush1.bf16.msra.mxu0 0
  %4445 = vmatprep.subr.bf16.mxu0 0
  %4446 = vmatpush1.bf16.msra.mxu0 0
  %4447 = vmatprep.subr.bf16.mxu0 0
  %4448 = vmatpush1.bf16.msra.mxu0 0
  %4449 = vmatprep.subr.bf16.mxu0 0
  %4450 = vmatpush1.bf16.msra.mxu0 0
  %4451 = vmatprep.subr.bf16.mxu0 0
  %4452 = vmatpush1.bf16.msra.mxu0 0
  %4453 = vmatprep.subr.bf16.mxu0 0
  %4454 = vmatpush1.bf16.msra.mxu0 0
  %4455 = vmatprep.subr.bf16.mxu0 0
  %4456 = vmatpush1.bf16.msra.mxu0 0
  %4457 = vmatprep.mubr.bf16.mxu0 0
  %4458 = vmatmul.mubr.bf16.gmra.mrb[0].mxu0 %v4424
  %v4459 = vpop.f32.mrb[0].mxu0
  %v4460 = vadd.f32 0.0, %v4459
  %v4461 = vpop.f32.mrb[0].mxu0
  %v4462 = vadd.f32 0.0, %v4461
  %v4463 = vpop.f32.mrb[0].mxu0
  %v4464 = vpop.f32.mrb[0].mxu0
  %4465 = vdwg.mxu0
  %4466 = vmatprep.subr.bf16.mxu0 %v3821
  %4467 = vmatpush1.bf16.msra.mxu0 %v3820
  %4468 = vmatprep.subr.bf16.mxu0 %v3825
  %4469 = vmatpush1.bf16.msra.mxu0 %v3824
  %4470 = vmatprep.subr.bf16.mxu0 %v3829
  %4471 = vmatpush1.bf16.msra.mxu0 %v3828
  %4472 = vmatprep.subr.bf16.mxu0 %v3833
  %4473 = vmatpush1.bf16.msra.mxu0 %v3832
  %4474 = vmatprep.subr.bf16.mxu0 %v3837
  %4475 = vmatpush1.bf16.msra.mxu0 %v3836
  %4476 = vmatprep.subr.bf16.mxu0 %v3841
  %4477 = vmatpush1.bf16.msra.mxu0 %v3840
  %4478 = vmatprep.subr.bf16.mxu0 %v3845
  %4479 = vmatpush1.bf16.msra.mxu0 %v3844
  %4480 = vmatprep.subr.bf16.mxu0 %v3849
  %4481 = vmatpush1.bf16.msra.mxu0 %v3848
  %4482 = vmatprep.subr.bf16.mxu0 0
  %4483 = vmatpush1.bf16.msra.mxu0 0
  %4484 = vmatprep.subr.bf16.mxu0 0
  %4485 = vmatpush1.bf16.msra.mxu0 0
  %4486 = vmatprep.subr.bf16.mxu0 0
  %4487 = vmatpush1.bf16.msra.mxu0 0
  %4488 = vmatprep.subr.bf16.mxu0 0
  %4489 = vmatpush1.bf16.msra.mxu0 0
  %4490 = vmatprep.subr.bf16.mxu0 0
  %4491 = vmatpush1.bf16.msra.mxu0 0
  %4492 = vmatprep.subr.bf16.mxu0 0
  %4493 = vmatpush1.bf16.msra.mxu0 0
  %4494 = vmatprep.subr.bf16.mxu0 0
  %4495 = vmatpush1.bf16.msra.mxu0 0
  %4496 = vmatprep.subr.bf16.mxu0 0
  %4497 = vmatpush1.bf16.msra.mxu0 0
  %4498 = vmatprep.mubr.bf16.mxu0 0
  %4499 = vmatmul.mubr.bf16.gmra.mrb[0].mxu0 %v4424
  %v4500 = vpop.f32.mrb[0].mxu0
  %v4501 = vadd.f32 0.0, %v4500
  %v4502 = vpop.f32.mrb[0].mxu0
  %v4503 = vadd.f32 0.0, %v4502
  %v4504 = vpop.f32.mrb[0].mxu0
  %v4505 = vpop.f32.mrb[0].mxu0
  %4506 = vdwg.mxu0
  %v4507 = vadd.f32 %v4420, %v4460
  %v4508 = vadd.f32 %v4421, %v4462
  %v4509 = vadd.f32 %v4422, %v4501
  %v4510 = vadd.f32 %v4423, %v4503
  %v4511 = vxor.u32 %v4507, 2147483648
  %v4512 = vmul.f32 %v4511, 1.442695
  %v4513 = vpow.pop %v4512
  %v4514 = vadd.f32 %v4513, 1.0
  %v4515 = vrcp.pop %v4514
  %v4516 = vmul.f32 1.0, %v4515
  %v4517 = vxor.u32 %v4508, 2147483648
  %v4518 = vmul.f32 %v4517, 1.442695
  %v4519 = vpow.pop %v4518
  %v4520 = vadd.f32 %v4519, 1.0
  %v4521 = vrcp.pop %v4520
  %v4522 = vmul.f32 1.0, %v4521
  %v4523 = vtanh.pop %v4509
  %v4524 = vxor.u32 %v4510, 2147483648
  %v4525 = vmul.f32 %v4524, 1.442695
  %v4526 = vpow.pop %v4525
  %v4527 = vadd.f32 %v4526, 1.0
  %v4528 = vrcp.pop %v4527
  %v4529 = vmul.f32 1.0, %v4528
  %v4530 = vmul.f32 %v4522, %v4417
  %v4531 = vmul.f32 %v4516, %v4523
  %v4532 = vadd.f32 %v4530, %v4531
  %v4533 = vtanh.pop %v4532
  %v4534 = vmul.f32 %v4529, %v4533
  %v4535 = vld [vmem:[%s2942] sm:$0xff]
  %v4536 = vld [vmem:[%s2942 + $0x8] sm:$0xff]
  %v4537 = vld [vmem:[%s2942 + $0x10] sm:$0xff]
  %v4538 = vld [vmem:[%s2942 + $0x18] sm:$0xff]
  %v4539 = vpack.c.bf16 %v4534, %v4534
  %4540 = vmatprep.subr.bf16.mxu0 %v3819
  %4541 = vmatpush1.bf16.msra.mxu0 %v3818
  %4542 = vmatprep.subr.bf16.mxu0 %v3823
  %4543 = vmatpush1.bf16.msra.mxu0 %v3822
  %4544 = vmatprep.subr.bf16.mxu0 %v3827
  %4545 = vmatpush1.bf16.msra.mxu0 %v3826
  %4546 = vmatprep.subr.bf16.mxu0 %v3831
  %4547 = vmatpush1.bf16.msra.mxu0 %v3830
  %4548 = vmatprep.subr.bf16.mxu0 %v3835
  %4549 = vmatpush1.bf16.msra.mxu0 %v3834
  %4550 = vmatprep.subr.bf16.mxu0 %v3839
  %4551 = vmatpush1.bf16.msra.mxu0 %v3838
  %4552 = vmatprep.subr.bf16.mxu0 %v3843
  %4553 = vmatpush1.bf16.msra.mxu0 %v3842
  %4554 = vmatprep.subr.bf16.mxu0 %v3847
  %4555 = vmatpush1.bf16.msra.mxu0 %v3846
  %4556 = vmatprep.subr.bf16.mxu0 0
  %4557 = vmatpush1.bf16.msra.mxu0 0
  %4558 = vmatprep.subr.bf16.mxu0 0
  %4559 = vmatpush1.bf16.msra.mxu0 0
  %4560 = vmatprep.subr.bf16.mxu0 0
  %4561 = vmatpush1.bf16.msra.mxu0 0
  %4562 = vmatprep.subr.bf16.mxu0 0
  %4563 = vmatpush1.bf16.msra.mxu0 0
  %4564 = vmatprep.subr.bf16.mxu0 0
  %4565 = vmatpush1.bf16.msra.mxu0 0
  %4566 = vmatprep.subr.bf16.mxu0 0
  %4567 = vmatpush1.bf16.msra.mxu0 0
  %4568 = vmatprep.subr.bf16.mxu0 0
  %4569 = vmatpush1.bf16.msra.mxu0 0
  %4570 = vmatprep.subr.bf16.mxu0 0
  %4571 = vmatpush1.bf16.msra.mxu0 0
  %4572 = vmatprep.mubr.bf16.mxu0 0
  %4573 = vmatmul.mubr.bf16.gmra.mrb[0].mxu0 %v4539
  %v4574 = vpop.f32.mrb[0].mxu0
  %v4575 = vadd.f32 0.0, %v4574
  %v4576 = vpop.f32.mrb[0].mxu0
  %v4577 = vadd.f32 0.0, %v4576
  %v4578 = vpop.f32.mrb[0].mxu0
  %v4579 = vpop.f32.mrb[0].mxu0
  %4580 = vdwg.mxu0
  %4581 = vmatprep.subr.bf16.mxu0 %v3821
  %4582 = vmatpush1.bf16.msra.mxu0 %v3820
  %4583 = vmatprep.subr.bf16.mxu0 %v3825
  %4584 = vmatpush1.bf16.msra.mxu0 %v3824
  %4585 = vmatprep.subr.bf16.mxu0 %v3829
  %4586 = vmatpush1.bf16.msra.mxu0 %v3828
  %4587 = vmatprep.subr.bf16.mxu0 %v3833
  %4588 = vmatpush1.bf16.msra.mxu0 %v3832
  %4589 = vmatprep.subr.bf16.mxu0 %v3837
  %4590 = vmatpush1.bf16.msra.mxu0 %v3836
  %4591 = vmatprep.subr.bf16.mxu0 %v3841
  %4592 = vmatpush1.bf16.msra.mxu0 %v3840
  %4593 = vmatprep.subr.bf16.mxu0 %v3845
  %4594 = vmatpush1.bf16.msra.mxu0 %v3844
  %4595 = vmatprep.subr.bf16.mxu0 %v3849
  %4596 = vmatpush1.bf16.msra.mxu0 %v3848
  %4597 = vmatprep.subr.bf16.mxu0 0
  %4598 = vmatpush1.bf16.msra.mxu0 0
  %4599 = vmatprep.subr.bf16.mxu0 0
  %4600 = vmatpush1.bf16.msra.mxu0 0
  %4601 = vmatprep.subr.bf16.mxu0 0
  %4602 = vmatpush1.bf16.msra.mxu0 0
  %4603 = vmatprep.subr.bf16.mxu0 0
  %4604 = vmatpush1.bf16.msra.mxu0 0
  %4605 = vmatprep.subr.bf16.mxu0 0
  %4606 = vmatpush1.bf16.msra.mxu0 0
  %4607 = vmatprep.subr.bf16.mxu0 0
  %4608 = vmatpush1.bf16.msra.mxu0 0
  %4609 = vmatprep.subr.bf16.mxu0 0
  %4610 = vmatpush1.bf16.msra.mxu0 0
  %4611 = vmatprep.subr.bf16.mxu0 0
  %4612 = vmatpush1.bf16.msra.mxu0 0
  %4613 = vmatprep.mubr.bf16.mxu0 0
  %4614 = vmatmul.mubr.bf16.gmra.mrb[0].mxu0 %v4539
  %v4615 = vpop.f32.mrb[0].mxu0
  %v4616 = vadd.f32 0.0, %v4615
  %v4617 = vpop.f32.mrb[0].mxu0
  %v4618 = vadd.f32 0.0, %v4617
  %v4619 = vpop.f32.mrb[0].mxu0
  %v4620 = vpop.f32.mrb[0].mxu0
  %4621 = vdwg.mxu0
  %v4622 = vadd.f32 %v4535, %v4575
  %v4623 = vadd.f32 %v4536, %v4577
  %v4624 = vadd.f32 %v4537, %v4616
  %v4625 = vadd.f32 %v4538, %v4618
  %v4626 = vxor.u32 %v4622, 2147483648
  %v4627 = vmul.f32 %v4626, 1.442695
  %v4628 = vpow.pop %v4627
  %v4629 = vadd.f32 %v4628, 1.0
  %v4630 = vrcp.pop %v4629
  %v4631 = vmul.f32 1.0, %v4630
  %v4632 = vxor.u32 %v4623, 2147483648
  %v4633 = vmul.f32 %v4632, 1.442695
  %v4634 = vpow.pop %v4633
  %v4635 = vadd.f32 %v4634, 1.0
  %v4636 = vrcp.pop %v4635
  %v4637 = vmul.f32 1.0, %v4636
  %v4638 = vtanh.pop %v4624
  %v4639 = vxor.u32 %v4625, 2147483648
  %v4640 = vmul.f32 %v4639, 1.442695
  %v4641 = vpow.pop %v4640
  %v4642 = vadd.f32 %v4641, 1.0
  %v4643 = vrcp.pop %v4642
  %v4644 = vmul.f32 1.0, %v4643
  %v4645 = vmul.f32 %v4637, %v4532
  %v4646 = vmul.f32 %v4631, %v4638
  %v4647 = vadd.f32 %v4645, %v4646
  %v4648 = vtanh.pop %v4647
  %v4649 = vmul.f32 %v4644, %v4648
  %v4650 = vld [vmem:[%s3254] sm:$0xff]
  %v4651 = vld [vmem:[%s3254 + $0x8] sm:$0xff]
  %v4652 = vld [vmem:[%s3254 + $0x10] sm:$0xff]
  %v4653 = vld [vmem:[%s3254 + $0x18] sm:$0xff]
  %v4654 = vpack.c.bf16 %v4649, %v4649
  %4655 = vmatprep.subr.bf16.mxu0 %v3819
  %4656 = vmatpush1.bf16.msra.mxu0 %v3818
  %4657 = vmatprep.subr.bf16.mxu0 %v3823
  %4658 = vmatpush1.bf16.msra.mxu0 %v3822
  %4659 = vmatprep.subr.bf16.mxu0 %v3827
  %4660 = vmatpush1.bf16.msra.mxu0 %v3826
  %4661 = vmatprep.subr.bf16.mxu0 %v3831
  %4662 = vmatpush1.bf16.msra.mxu0 %v3830
  %4663 = vmatprep.subr.bf16.mxu0 %v3835
  %4664 = vmatpush1.bf16.msra.mxu0 %v3834
  %4665 = vmatprep.subr.bf16.mxu0 %v3839
  %4666 = vmatpush1.bf16.msra.mxu0 %v3838
  %4667 = vmatprep.subr.bf16.mxu0 %v3843
  %4668 = vmatpush1.bf16.msra.mxu0 %v3842
  %4669 = vmatprep.subr.bf16.mxu0 %v3847
  %4670 = vmatpush1.bf16.msra.mxu0 %v3846
  %4671 = vmatprep.subr.bf16.mxu0 0
  %4672 = vmatpush1.bf16.msra.mxu0 0
  %4673 = vmatprep.subr.bf16.mxu0 0
  %4674 = vmatpush1.bf16.msra.mxu0 0
  %4675 = vmatprep.subr.bf16.mxu0 0
  %4676 = vmatpush1.bf16.msra.mxu0 0
  %4677 = vmatprep.subr.bf16.mxu0 0
  %4678 = vmatpush1.bf16.msra.mxu0 0
  %4679 = vmatprep.subr.bf16.mxu0 0
  %4680 = vmatpush1.bf16.msra.mxu0 0
  %4681 = vmatprep.subr.bf16.mxu0 0
  %4682 = vmatpush1.bf16.msra.mxu0 0
  %4683 = vmatprep.subr.bf16.mxu0 0
  %4684 = vmatpush1.bf16.msra.mxu0 0
  %4685 = vmatprep.subr.bf16.mxu0 0
  %4686 = vmatpush1.bf16.msra.mxu0 0
  %4687 = vmatprep.mubr.bf16.mxu0 0
  %4688 = vmatmul.mubr.bf16.gmra.mrb[0].mxu0 %v4654
  %v4689 = vpop.f32.mrb[0].mxu0
  %v4690 = vadd.f32 0.0, %v4689
  %v4691 = vpop.f32.mrb[0].mxu0
  %v4692 = vadd.f32 0.0, %v4691
  %v4693 = vpop.f32.mrb[0].mxu0
  %v4694 = vpop.f32.mrb[0].mxu0
  %4695 = vdwg.mxu0
  %4696 = vmatprep.subr.bf16.mxu0 %v3821
  %4697 = vmatpush1.bf16.msra.mxu0 %v3820
  %4698 = vmatprep.subr.bf16.mxu0 %v3825
  %4699 = vmatpush1.bf16.msra.mxu0 %v3824
  %4700 = vmatprep.subr.bf16.mxu0 %v3829
  %4701 = vmatpush1.bf16.msra.mxu0 %v3828
  %4702 = vmatprep.subr.bf16.mxu0 %v3833
  %4703 = vmatpush1.bf16.msra.mxu0 %v3832
  %4704 = vmatprep.subr.bf16.mxu0 %v3837
  %4705 = vmatpush1.bf16.msra.mxu0 %v3836
  %4706 = vmatprep.subr.bf16.mxu0 %v3841
  %4707 = vmatpush1.bf16.msra.mxu0 %v3840
  %4708 = vmatprep.subr.bf16.mxu0 %v3845
  %4709 = vmatpush1.bf16.msra.mxu0 %v3844
  %4710 = vmatprep.subr.bf16.mxu0 %v3849
  %4711 = vmatpush1.bf16.msra.mxu0 %v3848
  %4712 = vmatprep.subr.bf16.mxu0 0
  %4713 = vmatpush1.bf16.msra.mxu0 0
  %4714 = vmatprep.subr.bf16.mxu0 0
  %4715 = vmatpush1.bf16.msra.mxu0 0
  %4716 = vmatprep.subr.bf16.mxu0 0
  %4717 = vmatpush1.bf16.msra.mxu0 0
  %4718 = vmatprep.subr.bf16.mxu0 0
  %4719 = vmatpush1.bf16.msra.mxu0 0
  %4720 = vmatprep.subr.bf16.mxu0 0
  %4721 = vmatpush1.bf16.msra.mxu0 0
  %4722 = vmatprep.subr.bf16.mxu0 0
  %4723 = vmatpush1.bf16.msra.mxu0 0
  %4724 = vmatprep.subr.bf16.mxu0 0
  %4725 = vmatpush1.bf16.msra.mxu0 0
  %4726 = vmatprep.subr.bf16.mxu0 0
  %4727 = vmatpush1.bf16.msra.mxu0 0
  %4728 = vmatprep.mubr.bf16.mxu0 0
  %4729 = vmatmul.mubr.bf16.gmra.mrb[0].mxu0 %v4654
  %v4730 = vpop.f32.mrb[0].mxu0
  %v4731 = vadd.f32 0.0, %v4730
  %v4732 = vpop.f32.mrb[0].mxu0
  %v4733 = vadd.f32 0.0, %v4732
  %v4734 = vpop.f32.mrb[0].mxu0
  %v4735 = vpop.f32.mrb[0].mxu0
  %4736 = vdwg.mxu0
  %v4737 = vadd.f32 %v4650, %v4690
  %v4738 = vadd.f32 %v4651, %v4692
  %v4739 = vadd.f32 %v4652, %v4731
  %v4740 = vadd.f32 %v4653, %v4733
  %v4741 = vxor.u32 %v4737, 2147483648
  %v4742 = vmul.f32 %v4741, 1.442695
  %v4743 = vpow.pop %v4742
  %v4744 = vadd.f32 %v4743, 1.0
  %v4745 = vrcp.pop %v4744
  %v4746 = vmul.f32 1.0, %v4745
  %v4747 = vxor.u32 %v4738, 2147483648
  %v4748 = vmul.f32 %v4747, 1.442695
  %v4749 = vpow.pop %v4748
  %v4750 = vadd.f32 %v4749, 1.0
  %v4751 = vrcp.pop %v4750
  %v4752 = vmul.f32 1.0, %v4751
  %v4753 = vtanh.pop %v4739
  %v4754 = vxor.u32 %v4740, 2147483648
  %v4755 = vmul.f32 %v4754, 1.442695
  %v4756 = vpow.pop %v4755
  %v4757 = vadd.f32 %v4756, 1.0
  %v4758 = vrcp.pop %v4757
  %v4759 = vmul.f32 1.0, %v4758
  %v4760 = vmul.f32 %v4752, %v4647
  %v4761 = vmul.f32 %v4746, %v4753
  %v4762 = vadd.f32 %v4760, %v4761
  %v4763 = vtanh.pop %v4762
  %v4764 = vmul.f32 %v4759, %v4763
  %v4765 = vld [vmem:[%s8] sm:$0x1]
  %v4767 = vlaneseq
  %v4768 = vshrl.u32 %v4767, 7
  %v4769 = vsub.s32 0, %v4768
  %v4770 = vrot.slane %v4765, %v4769
  %v4772 = vmul.f32 %v4764, %v4770
  %4773 = vadd.xlane.f32.xlu0 %v4772
  %v4774 = vpop.xlane.xlu0 %4773
  %v4775 = vld [vmem:[%s1] sm:$0xff]
  %v4776 = vld [vmem:[%s9] sm:$0x1]
  %v4778 = vlaneseq
  %v4779 = vshrl.u32 %v4778, 7
  %v4780 = vsub.s32 0, %v4779
  %v4781 = vrot.slane %v4776, %v4780
  %v4783 = vmul.f32 %v4775, %v4781
  %vm4784 = vcmask 31744
  %v4785 = vsel %vm4784, %v4783, 0.0
  %4786 = vadd.xlane.f32.xlu0 %v4785
  %v4787 = vpop.xlane.xlu0 %4786
  %v4788 = vadd.f32 %v4774, %v4787
  %v4789 = vld [vmem:[#allocation7] sm:$0x1]
  %v4791 = vlaneseq
  %v4792 = vshrl.u32 %v4791, 7
  %v4793 = vsub.s32 0, %v4792
  %v4794 = vrot.slane %v4789, %v4793
  %v4796 = vadd.f32 %v4788, %v4794
  %vm4797 = vcmask 7168
  %4798 = vst.msk [vmem:[%s11] sm:$0xff] %vm4797, %v4796
  // Predicated region
  $region112: #{recurrent_critic_forward.1} parent=0 // pred_check
    _
  $region113: #{recurrent_critic_forward.1} parent=0 // pred_check_branch
    %4800 = sbr.rel (0) target = $region115
  $region114: #{recurrent_critic_forward.1} parent=0 // pred_region
    _
  $region115: #{recurrent_critic_forward.1} parent=0 // pred_fallthru
    _
  // Predicated region
  $region116: #{recurrent_critic_forward.1} parent=0 // pred_check
    _
  $region117: #{recurrent_critic_forward.1} parent=0 // pred_check_branch
    %4802 = sbr.rel (0) target = $region119
  $region118: #{recurrent_critic_forward.1} parent=0 // pred_region
    _
  $region119: #{recurrent_critic_forward.1} parent=0 // pred_fallthru
    _
  %4803 = vsyncmov [#allocation6]
  %s4804 = vpop.sfrf %4803
  %p4805 = scmp.eq.s32.totalorder %s4804, 0
  %p4806 = pneg %p4805
  %4808 = shalt.err (%p4806)
  %s4809 = scalar_lea.sflag [#allocation6], 1
  %4810 = vsyncmov %s4809
  %s4811 = vpop.sfrf %4810
  %p4812 = scmp.eq.s32.totalorder %s4811, 0
  %p4813 = pneg %p4812
  %4815 = shalt.err (%p4813)

</llo_original>
